<compile_context>
chip_gen: v7x
topology: tpu7x:2x2x1
jax: 0.10.0
libtpu: 0.0.40
codegen_flags: <defaults>
</compile_context>

<pallas_src>
import functools

import jax
import jax.numpy as jnp
from jax import lax
from jax.experimental import pallas as pl
from jax.experimental.pallas import tpu as pltpu

EPS = 1e-5


# ---------------------------------------------------------------------------
# Fused Block kernel: depthwise 3x3 (+BN+ReLU) -> pointwise 1x1 (+BN+ReLU)
# ---------------------------------------------------------------------------
def _block_kernel(x_ref, dw_w_ref, dw_s_ref, dw_b_ref,
                  pw_w_ref, pw_s_ref, pw_b_ref, o_ref, xp_ref, *, stride):
    H, W, Cin = x_ref.shape[1], x_ref.shape[2], x_ref.shape[3]
    _, Ho, Wo, Cout = o_ref.shape

    # --- in-kernel halo padding (pad=1): zeroed VMEM scratch, interior copy.
    xp_ref[...] = jnp.zeros_like(xp_ref)
    xp_ref[1:H + 1, 1:W + 1, :] = x_ref[0]

    # --- depthwise 3x3 conv: 9 shifted taps on the VPU, f32 accumulation.
    w = dw_w_ref[...]                                  # (9, Cin)
    acc = jnp.zeros((Ho, Wo, Cin), jnp.float32)
    for di in range(3):
        for dj in range(3):
            if stride == 1:
                tap = xp_ref[di:di + Ho, dj:dj + Wo, :]
            else:
                # Strided outputs computed directly: stride along W via a
                # strided slice (lane dim contiguous), stride along H via a
                # contiguous read + leading-dim reshape (last two dims fixed).
                v = xp_ref[pl.ds(di, stride * Ho), pl.ds(dj, Wo, stride=stride), :]
                tap = v.reshape(Ho, stride, Wo, Cin)[:, 0]
            acc = acc + tap * w[3 * di + dj]
    # folded BN1 + ReLU (kept f32 on the VPU)
    dw = jnp.maximum(acc * dw_s_ref[0] + dw_b_ref[0], 0.0)

    # --- pointwise 1x1 conv as a single bf16 MXU matmul over flat spatial.
    dw2 = dw.reshape(Ho * Wo, Cin).astype(pw_w_ref.dtype)
    out = jnp.dot(dw2, pw_w_ref[...], preferred_element_type=jnp.float32)
    # folded BN2 + ReLU
    out = jnp.maximum(out * pw_s_ref[...] + pw_b_ref[...], 0.0)
    o_ref[...] = out.reshape(1, Ho, Wo, Cout).astype(o_ref.dtype)


def block_forward(x_nhwc, p):
    """One fused pallas_call for a whole Block.  x_nhwc: (N, H, W, Cin) f32."""
    N, H, W, Cin = x_nhwc.shape
    stride = p["stride"]
    Cout = p["pw_w"].shape[1]
    Ho = (H - 1) // stride + 1          # == PyTorch conv(k=3, pad=1, stride)
    Wo = (W - 1) // stride + 1
    assert Wo % 8 == 0, "W and W//stride must be multiples of 8 (sublane-aligned)"
    Wp = ((W + 2 + 7) // 8) * 8         # scratch width padded to a sublane multiple

    dw_s, dw_b = p["dw_bn"]
    pw_s, pw_b = p["pw_bn"]
    kernel = functools.partial(_block_kernel, stride=stride)

    return pl.pallas_call(
        kernel,
        out_shape=jax.ShapeDtypeStruct((N, Ho, Wo, Cout), jnp.float32),
        grid=(N,),
        in_specs=[
            pl.BlockSpec((1, H, W, Cin), lambda n: (n, 0, 0, 0)),   # activations
            pl.BlockSpec((9, Cin), lambda n: (0, 0)),               # dw weights
            pl.BlockSpec((1, Cin), lambda n: (0, 0)),               # dw BN scale
            pl.BlockSpec((1, Cin), lambda n: (0, 0)),               # dw BN bias
            pl.BlockSpec((Cin, Cout), lambda n: (0, 0)),            # pw weights (bf16)
            pl.BlockSpec((1, Cout), lambda n: (0, 0)),              # pw BN scale
            pl.BlockSpec((1, Cout), lambda n: (0, 0)),              # pw BN bias
        ],
        out_specs=pl.BlockSpec((1, Ho, Wo, Cout), lambda n: (n, 0, 0, 0)),
        scratch_shapes=[pltpu.VMEM((H + 2, Wp, Cin), jnp.float32)],
        compiler_params=pltpu.CompilerParams(dimension_semantics=("parallel",)),
    )(x_nhwc.astype(jnp.float32),
      p["dw_w"].reshape(9, Cin),
      dw_s.reshape(1, Cin), dw_b.reshape(1, Cin),
      p["pw_w"],
      pw_s.reshape(1, Cout), pw_b.reshape(1, Cout))


# ---------------------------------------------------------------------------
# Parameters (deterministic, in-script) with eval-mode BN folded
# ---------------------------------------------------------------------------
def _fold_bn(gamma, beta, rm, rv):
    s = gamma / jnp.sqrt(rv + EPS)
    return s, beta - rm * s


def init_block_params(key, in_planes, out_planes, stride=1):
    ks = jax.random.split(key, 4)

    def bn(k, c):
        k1, k2, k3, k4 = jax.random.split(k, 4)
        gamma = 1.0 + 0.1 * jax.random.normal(k1, (c,), jnp.float32)
        beta = 0.1 * jax.random.normal(k2, (c,), jnp.float32)
        rm = 0.1 * jax.random.normal(k3, (c,), jnp.float32)
        rv = 1.0 + 0.1 * jax.random.uniform(k4, (c,), jnp.float32)
        return _fold_bn(gamma, beta, rm, rv)

    dw_w = jax.random.normal(ks[0], (3, 3, in_planes), jnp.float32) / 3.0
    pw_w = (jax.random.normal(ks[1], (in_planes, out_planes), jnp.float32)
            / jnp.sqrt(float(in_planes))).astype(jnp.bfloat16)
    return dict(stride=stride, dw_w=dw_w, dw_bn=bn(ks[2], in_planes),
                pw_w=pw_w, pw_bn=bn(ks[3], out_planes))


# ---------------------------------------------------------------------------
# Pure-JAX (XLA) reference mirroring the kernel's precision choices
# ---------------------------------------------------------------------------
def block_reference(x_nhwc, p):
    s = p["stride"]
    cin = x_nhwc.shape[-1]
    dw = lax.conv_general_dilated(
        x_nhwc.astype(jnp.float32),
        p["dw_w"].reshape(3, 3, 1, cin),
        window_strides=(s, s),
        padding=((1, 1), (1, 1)),
        dimension_numbers=("NHWC", "HWIO", "NHWC"),
        feature_group_count=cin)
    ds_, db_ = p["dw_bn"]
    dw = jnp.maximum(dw * ds_ + db_, 0.0)
    pw = jnp.einsum("nhwc,cd->nhwd", dw.astype(jnp.bfloat16), p["pw_w"],
                    preferred_element_type=jnp.float32)
    ps_, pb_ = p["pw_bn"]
    return jnp.maximum(pw * ps_ + pb_, 0.0)


# ---------------------------------------------------------------------------
# Demo / smoke test
# ---------------------------------------------------------------------------
if __name__ == "__main__":
    root = jax.random.PRNGKey(0)
    kx, k1, k2 = jax.random.split(root, 3)

    N, H, W = 2, 16, 16
    C0, C1, C2 = 32, 64, 128            # lane-friendly channel counts
    x_nchw = jax.random.normal(kx, (N, C0, H, W), jnp.float32)  # NCHW like PyTorch

    blk1 = init_block_params(k1, C0, C1, stride=1)   # Block(32, 64)
    blk2 = init_block_params(k2, C1, C2, stride=2)   # Block(64, 128, stride=2)

    @jax.jit
    def forward(x):
        y = jnp.transpose(x, (0, 2, 3, 1))       # NCHW -> NHWC once
        y = block_forward(y, blk1)
        y = block_forward(y, blk2)
        return jnp.transpose(y, (0, 3, 1, 2))    # back to NCHW to match PyTorch

    @jax.jit
    def forward_ref(x):
        y = jnp.transpose(x, (0, 2, 3, 1))
        y = block_reference(y, blk1)
        y = block_reference(y, blk2)
        return jnp.transpose(y, (0, 3, 1, 2))

    out = jax.block_until_ready(forward(x_nchw))
    ref = jax.block_until_ready(forward_ref(x_nchw))

    assert out.shape == (N, C2, H // 2, W // 2), out.shape
    assert bool(jnp.all(jnp.isfinite(out)))
    err = float(jnp.max(jnp.abs(out - ref)) / (jnp.max(jnp.abs(ref)) + 1e-6))
    assert err < 5e-2, f"kernel/reference mismatch: {err}"
    print("KERNEL_OK")
</pallas_src>

<mosaic_0001>
module attributes {stable_mosaic.version = 11 : i64} {
  func.func @_block_kernel(%arg0: i32, %arg1: memref<1x16x16x64xf32, #tpu.memory_space<vmem>>, %arg2: memref<9x64xf32, #tpu.memory_space<vmem>>, %arg3: memref<1x64xf32, #tpu.memory_space<vmem>>, %arg4: memref<1x64xf32, #tpu.memory_space<vmem>>, %arg5: memref<64x128xbf16, #tpu.memory_space<vmem>>, %arg6: memref<1x128xf32, #tpu.memory_space<vmem>>, %arg7: memref<1x128xf32, #tpu.memory_space<vmem>>, %arg8: memref<1x8x8x128xf32, #tpu.memory_space<vmem>>, %arg9: memref<18x24x64xf32, #tpu.memory_space<vmem>>) attributes {dimension_semantics = [#tpu.dimension_semantics<parallel>], iteration_bounds = array<i64: 2>, scalar_prefetch = 0 : i64, scratch_operands = 1 : i64, tpu.core_type = #tpu.core_type<tc>, window_params = [{transform_indices = @transform_0, window_bounds = array<i64: 1, 16, 16, 64>}, {pipeline_mode = #tpu.pipeline_mode<synchronous>, transform_indices = @transform_1, window_bounds = array<i64: 9, 64>}, {pipeline_mode = #tpu.pipeline_mode<synchronous>, transform_indices = @transform_2, window_bounds = array<i64: 1, 64>}, {pipeline_mode = #tpu.pipeline_mode<synchronous>, transform_indices = @transform_3, window_bounds = array<i64: 1, 64>}, {pipeline_mode = #tpu.pipeline_mode<synchronous>, transform_indices = @transform_4, window_bounds = array<i64: 64, 128>}, {pipeline_mode = #tpu.pipeline_mode<synchronous>, transform_indices = @transform_5, window_bounds = array<i64: 1, 128>}, {pipeline_mode = #tpu.pipeline_mode<synchronous>, transform_indices = @transform_6, window_bounds = array<i64: 1, 128>}, {transform_indices = @transform_7, window_bounds = array<i64: 1, 8, 8, 128>}]} {
    %cst = arith.constant 0.000000e+00 : f32
    %0 = vector.broadcast %cst : f32 to vector<18x24x64xf32>
    %c0 = arith.constant 0 : index
    %c0_0 = arith.constant 0 : index
    %c0_1 = arith.constant 0 : index
    %1 = vector.load %arg9[%c0, %c0_0, %c0_1] : memref<18x24x64xf32, #tpu.memory_space<vmem>>, vector<18x24x64xf32>
    tpu.vector_store %arg9[%c0, %c0_0, %c0_1], %0 {strides = array<i32>} : memref<18x24x64xf32, #tpu.memory_space<vmem>>, vector<18x24x64xf32>,
    %c0_2 = arith.constant 0 : index
    %c0_3 = arith.constant 0 : index
    %c0_4 = arith.constant 0 : index
    %c0_5 = arith.constant 0 : index
    %2 = vector.load %arg1[%c0_2, %c0_3, %c0_4, %c0_5] : memref<1x16x16x64xf32, #tpu.memory_space<vmem>>, vector<1x16x16x64xf32>
    %3 = vector.shape_cast %2 : vector<1x16x16x64xf32> to vector<16x16x64xf32>
    %c1 = arith.constant 1 : index
    %c1_6 = arith.constant 1 : index
    %c0_7 = arith.constant 0 : index
    %4 = vector.load %arg9[%c1, %c1_6, %c0_7] : memref<18x24x64xf32, #tpu.memory_space<vmem>>, vector<16x16x64xf32>
    tpu.vector_store %arg9[%c1, %c1_6, %c0_7], %3 {strides = array<i32>} : memref<18x24x64xf32, #tpu.memory_space<vmem>>, vector<16x16x64xf32>,
    %c0_8 = arith.constant 0 : index
    %c0_9 = arith.constant 0 : index
    %5 = vector.load %arg2[%c0_8, %c0_9] : memref<9x64xf32, #tpu.memory_space<vmem>>, vector<9x64xf32>
    %cst_10 = arith.constant 0.000000e+00 : f32
    %6 = vector.broadcast %cst_10 : f32 to vector<8x8x64xf32>
    %c0_11 = arith.constant 0 : index
    %c0_12 = arith.constant 0 : index
    %c0_13 = arith.constant 0 : index
    %7 = tpu.strided_load %arg9[%c0_11, %c0_12, %c0_13] {strides = array<i32: 1, 2, 1>} : memref<18x24x64xf32, #tpu.memory_space<vmem>>, vector<16x8x64xf32>
    %8 = vector.shape_cast %7 : vector<16x8x64xf32> to vector<8x2x8x64xf32>
    %9 = vector.extract_strided_slice %8 {offsets = [0, 0, 0, 0], sizes = [8, 1, 8, 64], strides = [1, 1, 1, 1]} : vector<8x2x8x64xf32> to vector<8x1x8x64xf32>
    %10 = vector.shape_cast %9 : vector<8x1x8x64xf32> to vector<8x8x64xf32>
    %11 = vector.extract_strided_slice %5 {offsets = [0, 0], sizes = [1, 64], strides = [1, 1]} : vector<9x64xf32> to vector<1x64xf32>
    %12 = vector.shape_cast %11 : vector<1x64xf32> to vector<64xf32>
    %13 = vector.shape_cast %12 : vector<64xf32> to vector<1x1x64xf32>
    %14 = vector.broadcast %13 : vector<1x1x64xf32> to vector<8x8x64xf32>
    %15 = arith.mulf %10, %14 : vector<8x8x64xf32>
    %16 = arith.addf %6, %15 : vector<8x8x64xf32>
    %c0_14 = arith.constant 0 : index
    %c1_15 = arith.constant 1 : index
    %c0_16 = arith.constant 0 : index
    %17 = tpu.strided_load %arg9[%c0_14, %c1_15, %c0_16] {strides = array<i32: 1, 2, 1>} : memref<18x24x64xf32, #tpu.memory_space<vmem>>, vector<16x8x64xf32>
    %18 = vector.shape_cast %17 : vector<16x8x64xf32> to vector<8x2x8x64xf32>
    %19 = vector.extract_strided_slice %18 {offsets = [0, 0, 0, 0], sizes = [8, 1, 8, 64], strides = [1, 1, 1, 1]} : vector<8x2x8x64xf32> to vector<8x1x8x64xf32>
    %20 = vector.shape_cast %19 : vector<8x1x8x64xf32> to vector<8x8x64xf32>
    %21 = vector.extract_strided_slice %5 {offsets = [1, 0], sizes = [1, 64], strides = [1, 1]} : vector<9x64xf32> to vector<1x64xf32>
    %22 = vector.shape_cast %21 : vector<1x64xf32> to vector<64xf32>
    %23 = vector.shape_cast %22 : vector<64xf32> to vector<1x1x64xf32>
    %24 = vector.broadcast %23 : vector<1x1x64xf32> to vector<8x8x64xf32>
    %25 = arith.mulf %20, %24 : vector<8x8x64xf32>
    %26 = arith.addf %16, %25 : vector<8x8x64xf32>
    %c0_17 = arith.constant 0 : index
    %c2 = arith.constant 2 : index
    %c0_18 = arith.constant 0 : index
    %27 = tpu.strided_load %arg9[%c0_17, %c2, %c0_18] {strides = array<i32: 1, 2, 1>} : memref<18x24x64xf32, #tpu.memory_space<vmem>>, vector<16x8x64xf32>
    %28 = vector.shape_cast %27 : vector<16x8x64xf32> to vector<8x2x8x64xf32>
    %29 = vector.extract_strided_slice %28 {offsets = [0, 0, 0, 0], sizes = [8, 1, 8, 64], strides = [1, 1, 1, 1]} : vector<8x2x8x64xf32> to vector<8x1x8x64xf32>
    %30 = vector.shape_cast %29 : vector<8x1x8x64xf32> to vector<8x8x64xf32>
    %31 = vector.extract_strided_slice %5 {offsets = [2, 0], sizes = [1, 64], strides = [1, 1]} : vector<9x64xf32> to vector<1x64xf32>
    %32 = vector.shape_cast %31 : vector<1x64xf32> to vector<64xf32>
    %33 = vector.shape_cast %32 : vector<64xf32> to vector<1x1x64xf32>
    %34 = vector.broadcast %33 : vector<1x1x64xf32> to vector<8x8x64xf32>
    %35 = arith.mulf %30, %34 : vector<8x8x64xf32>
    %36 = arith.addf %26, %35 : vector<8x8x64xf32>
    %c1_19 = arith.constant 1 : index
    %c0_20 = arith.constant 0 : index
    %c0_21 = arith.constant 0 : index
    %37 = tpu.strided_load %arg9[%c1_19, %c0_20, %c0_21] {strides = array<i32: 1, 2, 1>} : memref<18x24x64xf32, #tpu.memory_space<vmem>>, vector<16x8x64xf32>
    %38 = vector.shape_cast %37 : vector<16x8x64xf32> to vector<8x2x8x64xf32>
    %39 = vector.extract_strided_slice %38 {offsets = [0, 0, 0, 0], sizes = [8, 1, 8, 64], strides = [1, 1, 1, 1]} : vector<8x2x8x64xf32> to vector<8x1x8x64xf32>
    %40 = vector.shape_cast %39 : vector<8x1x8x64xf32> to vector<8x8x64xf32>
    %41 = vector.extract_strided_slice %5 {offsets = [3, 0], sizes = [1, 64], strides = [1, 1]} : vector<9x64xf32> to vector<1x64xf32>
    %42 = vector.shape_cast %41 : vector<1x64xf32> to vector<64xf32>
    %43 = vector.shape_cast %42 : vector<64xf32> to vector<1x1x64xf32>
    %44 = vector.broadcast %43 : vector<1x1x64xf32> to vector<8x8x64xf32>
    %45 = arith.mulf %40, %44 : vector<8x8x64xf32>
    %46 = arith.addf %36, %45 : vector<8x8x64xf32>
    %c1_22 = arith.constant 1 : index
    %c1_23 = arith.constant 1 : index
    %c0_24 = arith.constant 0 : index
    %47 = tpu.strided_load %arg9[%c1_22, %c1_23, %c0_24] {strides = array<i32: 1, 2, 1>} : memref<18x24x64xf32, #tpu.memory_space<vmem>>, vector<16x8x64xf32>
    %48 = vector.shape_cast %47 : vector<16x8x64xf32> to vector<8x2x8x64xf32>
    %49 = vector.extract_strided_slice %48 {offsets = [0, 0, 0, 0], sizes = [8, 1, 8, 64], strides = [1, 1, 1, 1]} : vector<8x2x8x64xf32> to vector<8x1x8x64xf32>
    %50 = vector.shape_cast %49 : vector<8x1x8x64xf32> to vector<8x8x64xf32>
    %51 = vector.extract_strided_slice %5 {offsets = [4, 0], sizes = [1, 64], strides = [1, 1]} : vector<9x64xf32> to vector<1x64xf32>
    %52 = vector.shape_cast %51 : vector<1x64xf32> to vector<64xf32>
    %53 = vector.shape_cast %52 : vector<64xf32> to vector<1x1x64xf32>
    %54 = vector.broadcast %53 : vector<1x1x64xf32> to vector<8x8x64xf32>
    %55 = arith.mulf %50, %54 : vector<8x8x64xf32>
    %56 = arith.addf %46, %55 : vector<8x8x64xf32>
    %c1_25 = arith.constant 1 : index
    %c2_26 = arith.constant 2 : index
    %c0_27 = arith.constant 0 : index
    %57 = tpu.strided_load %arg9[%c1_25, %c2_26, %c0_27] {strides = array<i32: 1, 2, 1>} : memref<18x24x64xf32, #tpu.memory_space<vmem>>, vector<16x8x64xf32>
    %58 = vector.shape_cast %57 : vector<16x8x64xf32> to vector<8x2x8x64xf32>
    %59 = vector.extract_strided_slice %58 {offsets = [0, 0, 0, 0], sizes = [8, 1, 8, 64], strides = [1, 1, 1, 1]} : vector<8x2x8x64xf32> to vector<8x1x8x64xf32>
    %60 = vector.shape_cast %59 : vector<8x1x8x64xf32> to vector<8x8x64xf32>
    %61 = vector.extract_strided_slice %5 {offsets = [5, 0], sizes = [1, 64], strides = [1, 1]} : vector<9x64xf32> to vector<1x64xf32>
    %62 = vector.shape_cast %61 : vector<1x64xf32> to vector<64xf32>
    %63 = vector.shape_cast %62 : vector<64xf32> to vector<1x1x64xf32>
    %64 = vector.broadcast %63 : vector<1x1x64xf32> to vector<8x8x64xf32>
    %65 = arith.mulf %60, %64 : vector<8x8x64xf32>
    %66 = arith.addf %56, %65 : vector<8x8x64xf32>
    %c2_28 = arith.constant 2 : index
    %c0_29 = arith.constant 0 : index
    %c0_30 = arith.constant 0 : index
    %67 = tpu.strided_load %arg9[%c2_28, %c0_29, %c0_30] {strides = array<i32: 1, 2, 1>} : memref<18x24x64xf32, #tpu.memory_space<vmem>>, vector<16x8x64xf32>
    %68 = vector.shape_cast %67 : vector<16x8x64xf32> to vector<8x2x8x64xf32>
    %69 = vector.extract_strided_slice %68 {offsets = [0, 0, 0, 0], sizes = [8, 1, 8, 64], strides = [1, 1, 1, 1]} : vector<8x2x8x64xf32> to vector<8x1x8x64xf32>
    %70 = vector.shape_cast %69 : vector<8x1x8x64xf32> to vector<8x8x64xf32>
    %71 = vector.extract_strided_slice %5 {offsets = [6, 0], sizes = [1, 64], strides = [1, 1]} : vector<9x64xf32> to vector<1x64xf32>
    %72 = vector.shape_cast %71 : vector<1x64xf32> to vector<64xf32>
    %73 = vector.shape_cast %72 : vector<64xf32> to vector<1x1x64xf32>
    %74 = vector.broadcast %73 : vector<1x1x64xf32> to vector<8x8x64xf32>
    %75 = arith.mulf %70, %74 : vector<8x8x64xf32>
    %76 = arith.addf %66, %75 : vector<8x8x64xf32>
    %c2_31 = arith.constant 2 : index
    %c1_32 = arith.constant 1 : index
    %c0_33 = arith.constant 0 : index
    %77 = tpu.strided_load %arg9[%c2_31, %c1_32, %c0_33] {strides = array<i32: 1, 2, 1>} : memref<18x24x64xf32, #tpu.memory_space<vmem>>, vector<16x8x64xf32>
    %78 = vector.shape_cast %77 : vector<16x8x64xf32> to vector<8x2x8x64xf32>
    %79 = vector.extract_strided_slice %78 {offsets = [0, 0, 0, 0], sizes = [8, 1, 8, 64], strides = [1, 1, 1, 1]} : vector<8x2x8x64xf32> to vector<8x1x8x64xf32>
    %80 = vector.shape_cast %79 : vector<8x1x8x64xf32> to vector<8x8x64xf32>
    %81 = vector.extract_strided_slice %5 {offsets = [7, 0], sizes = [1, 64], strides = [1, 1]} : vector<9x64xf32> to vector<1x64xf32>
    %82 = vector.shape_cast %81 : vector<1x64xf32> to vector<64xf32>
    %83 = vector.shape_cast %82 : vector<64xf32> to vector<1x1x64xf32>
    %84 = vector.broadcast %83 : vector<1x1x64xf32> to vector<8x8x64xf32>
    %85 = arith.mulf %80, %84 : vector<8x8x64xf32>
    %86 = arith.addf %76, %85 : vector<8x8x64xf32>
    %c2_34 = arith.constant 2 : index
    %c2_35 = arith.constant 2 : index
    %c0_36 = arith.constant 0 : index
    %87 = tpu.strided_load %arg9[%c2_34, %c2_35, %c0_36] {strides = array<i32: 1, 2, 1>} : memref<18x24x64xf32, #tpu.memory_space<vmem>>, vector<16x8x64xf32>
    %88 = vector.shape_cast %87 : vector<16x8x64xf32> to vector<8x2x8x64xf32>
    %89 = vector.extract_strided_slice %88 {offsets = [0, 0, 0, 0], sizes = [8, 1, 8, 64], strides = [1, 1, 1, 1]} : vector<8x2x8x64xf32> to vector<8x1x8x64xf32>
    %90 = vector.shape_cast %89 : vector<8x1x8x64xf32> to vector<8x8x64xf32>
    %91 = vector.extract_strided_slice %5 {offsets = [8, 0], sizes = [1, 64], strides = [1, 1]} : vector<9x64xf32> to vector<1x64xf32>
    %92 = vector.shape_cast %91 : vector<1x64xf32> to vector<64xf32>
    %93 = vector.shape_cast %92 : vector<64xf32> to vector<1x1x64xf32>
    %94 = vector.broadcast %93 : vector<1x1x64xf32> to vector<8x8x64xf32>
    %95 = arith.mulf %90, %94 : vector<8x8x64xf32>
    %96 = arith.addf %86, %95 : vector<8x8x64xf32>
    %c0_37 = arith.constant 0 : index
    %c0_38 = arith.constant 0 : index
    %97 = vector.load %arg3[%c0_37, %c0_38] : memref<1x64xf32, #tpu.memory_space<vmem>>, vector<1x64xf32>
    %98 = vector.shape_cast %97 : vector<1x64xf32> to vector<64xf32>
    %99 = vector.shape_cast %98 : vector<64xf32> to vector<1x1x64xf32>
    %100 = vector.broadcast %99 : vector<1x1x64xf32> to vector<8x8x64xf32>
    %101 = arith.mulf %96, %100 : vector<8x8x64xf32>
    %c0_39 = arith.constant 0 : index
    %c0_40 = arith.constant 0 : index
    %102 = vector.load %arg4[%c0_39, %c0_40] : memref<1x64xf32, #tpu.memory_space<vmem>>, vector<1x64xf32>
    %103 = vector.shape_cast %102 : vector<1x64xf32> to vector<64xf32>
    %104 = vector.shape_cast %103 : vector<64xf32> to vector<1x1x64xf32>
    %105 = vector.broadcast %104 : vector<1x1x64xf32> to vector<8x8x64xf32>
    %106 = arith.addf %101, %105 : vector<8x8x64xf32>
    %cst_41 = arith.constant 0.000000e+00 : f32
    %107 = vector.broadcast %cst_41 : f32 to vector<8x8x64xf32>
    %108 = arith.maximumf %106, %107 : vector<8x8x64xf32>
    %109 = vector.shape_cast %108 : vector<8x8x64xf32> to vector<64x64xf32>
    %110 = arith.truncf %109 : vector<64x64xf32> to vector<64x64xbf16>
    %c0_42 = arith.constant 0 : index
    %c0_43 = arith.constant 0 : index
    %111 = vector.load %arg5[%c0_42, %c0_43] : memref<64x128xbf16, #tpu.memory_space<vmem>>, vector<64x128xbf16>
    %cst_44 = arith.constant dense<0.000000e+00> : vector<64x128xf32>
    %112 = tpu.matmul %110, %111, %cst_44 {dimension_numbers = #tpu.dot_dimension_numbers<[1], [0], [0], [1], [0, 0, 1, 1], [], []>} : vector<64x64xbf16>, vector<64x128xbf16>, vector<64x128xf32> -> vector<64x128xf32>
    %c0_45 = arith.constant 0 : index
    %c0_46 = arith.constant 0 : index
    %113 = vector.load %arg6[%c0_45, %c0_46] : memref<1x128xf32, #tpu.memory_space<vmem>>, vector<1x128xf32>
    %114 = vector.broadcast %113 : vector<1x128xf32> to vector<64x128xf32>
    %115 = arith.mulf %112, %114 : vector<64x128xf32>
    %c0_47 = arith.constant 0 : index
    %c0_48 = arith.constant 0 : index
    %116 = vector.load %arg7[%c0_47, %c0_48] : memref<1x128xf32, #tpu.memory_space<vmem>>, vector<1x128xf32>
    %117 = vector.broadcast %116 : vector<1x128xf32> to vector<64x128xf32>
    %118 = arith.addf %115, %117 : vector<64x128xf32>
    %cst_49 = arith.constant 0.000000e+00 : f32
    %119 = vector.broadcast %cst_49 : f32 to vector<64x128xf32>
    %120 = arith.maximumf %118, %119 : vector<64x128xf32>
    %121 = vector.shape_cast %120 : vector<64x128xf32> to vector<1x8x8x128xf32>
    %c0_50 = arith.constant 0 : index
    %c0_51 = arith.constant 0 : index
    %c0_52 = arith.constant 0 : index
    %c0_53 = arith.constant 0 : index
    %122 = vector.load %arg8[%c0_50, %c0_51, %c0_52, %c0_53] : memref<1x8x8x128xf32, #tpu.memory_space<vmem>>, vector<1x8x8x128xf32>
    tpu.vector_store %arg8[%c0_50, %c0_51, %c0_52, %c0_53], %121 {strides = array<i32>} : memref<1x8x8x128xf32, #tpu.memory_space<vmem>>, vector<1x8x8x128xf32>,
    return
  }
  func.func @transform_0(%arg0: i32) -> (i32, i32, i32, i32) {
    %c0_i32 = arith.constant 0 : i32
    %c0_i32_0 = arith.constant 0 : i32
    %c0_i32_1 = arith.constant 0 : i32
    %c0_i32_2 = arith.constant 0 : i32
    return %arg0, %c0_i32, %c0_i32_0, %c0_i32_1 : i32, i32, i32, i32
  }
  func.func @transform_1(%arg0: i32) -> (i32, i32) {
    %c0_i32 = arith.constant 0 : i32
    %c0_i32_0 = arith.constant 0 : i32
    %c0_i32_1 = arith.constant 0 : i32
    return %c0_i32, %c0_i32_0 : i32, i32
  }
  func.func @transform_2(%arg0: i32) -> (i32, i32) {
    %c0_i32 = arith.constant 0 : i32
    %c0_i32_0 = arith.constant 0 : i32
    %c0_i32_1 = arith.constant 0 : i32
    return %c0_i32, %c0_i32_0 : i32, i32
  }
  func.func @transform_3(%arg0: i32) -> (i32, i32) {
    %c0_i32 = arith.constant 0 : i32
    %c0_i32_0 = arith.constant 0 : i32
    %c0_i32_1 = arith.constant 0 : i32
    return %c0_i32, %c0_i32_0 : i32, i32
  }
  func.func @transform_4(%arg0: i32) -> (i32, i32) {
    %c0_i32 = arith.constant 0 : i32
    %c0_i32_0 = arith.constant 0 : i32
    %c0_i32_1 = arith.constant 0 : i32
    return %c0_i32, %c0_i32_0 : i32, i32
  }
  func.func @transform_5(%arg0: i32) -> (i32, i32) {
    %c0_i32 = arith.constant 0 : i32
    %c0_i32_0 = arith.constant 0 : i32
    %c0_i32_1 = arith.constant 0 : i32
    return %c0_i32, %c0_i32_0 : i32, i32
  }
  func.func @transform_6(%arg0: i32) -> (i32, i32) {
    %c0_i32 = arith.constant 0 : i32
    %c0_i32_0 = arith.constant 0 : i32
    %c0_i32_1 = arith.constant 0 : i32
    return %c0_i32, %c0_i32_0 : i32, i32
  }
  func.func @transform_7(%arg0: i32) -> (i32, i32, i32, i32) {
    %c0_i32 = arith.constant 0 : i32
    %c0_i32_0 = arith.constant 0 : i32
    %c0_i32_1 = arith.constant 0 : i32
    %c0_i32_2 = arith.constant 0 : i32
    return %arg0, %c0_i32, %c0_i32_0, %c0_i32_1 : i32, i32, i32, i32
  }
}

module attributes {stable_mosaic.version = 11 : i64} {
  func.func @_block_kernel(%arg0: i32, %arg1: memref<1x16x16x32xf32, #tpu.memory_space<vmem>>, %arg2: memref<9x32xf32, #tpu.memory_space<vmem>>, %arg3: memref<1x32xf32, #tpu.memory_space<vmem>>, %arg4: memref<1x32xf32, #tpu.memory_space<vmem>>, %arg5: memref<32x64xbf16, #tpu.memory_space<vmem>>, %arg6: memref<1x64xf32, #tpu.memory_space<vmem>>, %arg7: memref<1x64xf32, #tpu.memory_space<vmem>>, %arg8: memref<1x16x16x64xf32, #tpu.memory_space<vmem>>, %arg9: memref<18x24x32xf32, #tpu.memory_space<vmem>>) attributes {dimension_semantics = [#tpu.dimension_semantics<parallel>], iteration_bounds = array<i64: 2>, scalar_prefetch = 0 : i64, scratch_operands = 1 : i64, tpu.core_type = #tpu.core_type<tc>, window_params = [{transform_indices = @transform_0, window_bounds = array<i64: 1, 16, 16, 32>}, {pipeline_mode = #tpu.pipeline_mode<synchronous>, transform_indices = @transform_1, window_bounds = array<i64: 9, 32>}, {pipeline_mode = #tpu.pipeline_mode<synchronous>, transform_indices = @transform_2, window_bounds = array<i64: 1, 32>}, {pipeline_mode = #tpu.pipeline_mode<synchronous>, transform_indices = @transform_3, window_bounds = array<i64: 1, 32>}, {pipeline_mode = #tpu.pipeline_mode<synchronous>, transform_indices = @transform_4, window_bounds = array<i64: 32, 64>}, {pipeline_mode = #tpu.pipeline_mode<synchronous>, transform_indices = @transform_5, window_bounds = array<i64: 1, 64>}, {pipeline_mode = #tpu.pipeline_mode<synchronous>, transform_indices = @transform_6, window_bounds = array<i64: 1, 64>}, {transform_indices = @transform_7, window_bounds = array<i64: 1, 16, 16, 64>}]} {
    %cst = arith.constant 0.000000e+00 : f32
    %0 = vector.broadcast %cst : f32 to vector<18x24x32xf32>
    %c0 = arith.constant 0 : index
    %c0_0 = arith.constant 0 : index
    %c0_1 = arith.constant 0 : index
    %1 = vector.load %arg9[%c0, %c0_0, %c0_1] : memref<18x24x32xf32, #tpu.memory_space<vmem>>, vector<18x24x32xf32>
    tpu.vector_store %arg9[%c0, %c0_0, %c0_1], %0 {strides = array<i32>} : memref<18x24x32xf32, #tpu.memory_space<vmem>>, vector<18x24x32xf32>,
    %c0_2 = arith.constant 0 : index
    %c0_3 = arith.constant 0 : index
    %c0_4 = arith.constant 0 : index
    %c0_5 = arith.constant 0 : index
    %2 = vector.load %arg1[%c0_2, %c0_3, %c0_4, %c0_5] : memref<1x16x16x32xf32, #tpu.memory_space<vmem>>, vector<1x16x16x32xf32>
    %3 = vector.shape_cast %2 : vector<1x16x16x32xf32> to vector<16x16x32xf32>
    %c1 = arith.constant 1 : index
    %c1_6 = arith.constant 1 : index
    %c0_7 = arith.constant 0 : index
    %4 = vector.load %arg9[%c1, %c1_6, %c0_7] : memref<18x24x32xf32, #tpu.memory_space<vmem>>, vector<16x16x32xf32>
    tpu.vector_store %arg9[%c1, %c1_6, %c0_7], %3 {strides = array<i32>} : memref<18x24x32xf32, #tpu.memory_space<vmem>>, vector<16x16x32xf32>,
    %c0_8 = arith.constant 0 : index
    %c0_9 = arith.constant 0 : index
    %5 = vector.load %arg2[%c0_8, %c0_9] : memref<9x32xf32, #tpu.memory_space<vmem>>, vector<9x32xf32>
    %cst_10 = arith.constant 0.000000e+00 : f32
    %6 = vector.broadcast %cst_10 : f32 to vector<16x16x32xf32>
    %c0_11 = arith.constant 0 : index
    %c0_12 = arith.constant 0 : index
    %c0_13 = arith.constant 0 : index
    %7 = vector.load %arg9[%c0_11, %c0_12, %c0_13] : memref<18x24x32xf32, #tpu.memory_space<vmem>>, vector<16x16x32xf32>
    %8 = vector.extract_strided_slice %5 {offsets = [0, 0], sizes = [1, 32], strides = [1, 1]} : vector<9x32xf32> to vector<1x32xf32>
    %9 = vector.shape_cast %8 : vector<1x32xf32> to vector<32xf32>
    %10 = vector.shape_cast %9 : vector<32xf32> to vector<1x1x32xf32>
    %11 = vector.broadcast %10 : vector<1x1x32xf32> to vector<16x16x32xf32>
    %12 = arith.mulf %7, %11 : vector<16x16x32xf32>
    %13 = arith.addf %6, %12 : vector<16x16x32xf32>
    %c0_14 = arith.constant 0 : index
    %c1_15 = arith.constant 1 : index
    %c0_16 = arith.constant 0 : index
    %14 = vector.load %arg9[%c0_14, %c1_15, %c0_16] : memref<18x24x32xf32, #tpu.memory_space<vmem>>, vector<16x16x32xf32>
    %15 = vector.extract_strided_slice %5 {offsets = [1, 0], sizes = [1, 32], strides = [1, 1]} : vector<9x32xf32> to vector<1x32xf32>
    %16 = vector.shape_cast %15 : vector<1x32xf32> to vector<32xf32>
    %17 = vector.shape_cast %16 : vector<32xf32> to vector<1x1x32xf32>
    %18 = vector.broadcast %17 : vector<1x1x32xf32> to vector<16x16x32xf32>
    %19 = arith.mulf %14, %18 : vector<16x16x32xf32>
    %20 = arith.addf %13, %19 : vector<16x16x32xf32>
    %c0_17 = arith.constant 0 : index
    %c2 = arith.constant 2 : index
    %c0_18 = arith.constant 0 : index
    %21 = vector.load %arg9[%c0_17, %c2, %c0_18] : memref<18x24x32xf32, #tpu.memory_space<vmem>>, vector<16x16x32xf32>
    %22 = vector.extract_strided_slice %5 {offsets = [2, 0], sizes = [1, 32], strides = [1, 1]} : vector<9x32xf32> to vector<1x32xf32>
    %23 = vector.shape_cast %22 : vector<1x32xf32> to vector<32xf32>
    %24 = vector.shape_cast %23 : vector<32xf32> to vector<1x1x32xf32>
    %25 = vector.broadcast %24 : vector<1x1x32xf32> to vector<16x16x32xf32>
    %26 = arith.mulf %21, %25 : vector<16x16x32xf32>
    %27 = arith.addf %20, %26 : vector<16x16x32xf32>
    %c1_19 = arith.constant 1 : index
    %c0_20 = arith.constant 0 : index
    %c0_21 = arith.constant 0 : index
    %28 = vector.load %arg9[%c1_19, %c0_20, %c0_21] : memref<18x24x32xf32, #tpu.memory_space<vmem>>, vector<16x16x32xf32>
    %29 = vector.extract_strided_slice %5 {offsets = [3, 0], sizes = [1, 32], strides = [1, 1]} : vector<9x32xf32> to vector<1x32xf32>
    %30 = vector.shape_cast %29 : vector<1x32xf32> to vector<32xf32>
    %31 = vector.shape_cast %30 : vector<32xf32> to vector<1x1x32xf32>
    %32 = vector.broadcast %31 : vector<1x1x32xf32> to vector<16x16x32xf32>
    %33 = arith.mulf %28, %32 : vector<16x16x32xf32>
    %34 = arith.addf %27, %33 : vector<16x16x32xf32>
    %c1_22 = arith.constant 1 : index
    %c1_23 = arith.constant 1 : index
    %c0_24 = arith.constant 0 : index
    %35 = vector.load %arg9[%c1_22, %c1_23, %c0_24] : memref<18x24x32xf32, #tpu.memory_space<vmem>>, vector<16x16x32xf32>
    %36 = vector.extract_strided_slice %5 {offsets = [4, 0], sizes = [1, 32], strides = [1, 1]} : vector<9x32xf32> to vector<1x32xf32>
    %37 = vector.shape_cast %36 : vector<1x32xf32> to vector<32xf32>
    %38 = vector.shape_cast %37 : vector<32xf32> to vector<1x1x32xf32>
    %39 = vector.broadcast %38 : vector<1x1x32xf32> to vector<16x16x32xf32>
    %40 = arith.mulf %35, %39 : vector<16x16x32xf32>
    %41 = arith.addf %34, %40 : vector<16x16x32xf32>
    %c1_25 = arith.constant 1 : index
    %c2_26 = arith.constant 2 : index
    %c0_27 = arith.constant 0 : index
    %42 = vector.load %arg9[%c1_25, %c2_26, %c0_27] : memref<18x24x32xf32, #tpu.memory_space<vmem>>, vector<16x16x32xf32>
    %43 = vector.extract_strided_slice %5 {offsets = [5, 0], sizes = [1, 32], strides = [1, 1]} : vector<9x32xf32> to vector<1x32xf32>
    %44 = vector.shape_cast %43 : vector<1x32xf32> to vector<32xf32>
    %45 = vector.shape_cast %44 : vector<32xf32> to vector<1x1x32xf32>
    %46 = vector.broadcast %45 : vector<1x1x32xf32> to vector<16x16x32xf32>
    %47 = arith.mulf %42, %46 : vector<16x16x32xf32>
    %48 = arith.addf %41, %47 : vector<16x16x32xf32>
    %c2_28 = arith.constant 2 : index
    %c0_29 = arith.constant 0 : index
    %c0_30 = arith.constant 0 : index
    %49 = vector.load %arg9[%c2_28, %c0_29, %c0_30] : memref<18x24x32xf32, #tpu.memory_space<vmem>>, vector<16x16x32xf32>
    %50 = vector.extract_strided_slice %5 {offsets = [6, 0], sizes = [1, 32], strides = [1, 1]} : vector<9x32xf32> to vector<1x32xf32>
    %51 = vector.shape_cast %50 : vector<1x32xf32> to vector<32xf32>
    %52 = vector.shape_cast %51 : vector<32xf32> to vector<1x1x32xf32>
    %53 = vector.broadcast %52 : vector<1x1x32xf32> to vector<16x16x32xf32>
    %54 = arith.mulf %49, %53 : vector<16x16x32xf32>
    %55 = arith.addf %48, %54 : vector<16x16x32xf32>
    %c2_31 = arith.constant 2 : index
    %c1_32 = arith.constant 1 : index
    %c0_33 = arith.constant 0 : index
    %56 = vector.load %arg9[%c2_31, %c1_32, %c0_33] : memref<18x24x32xf32, #tpu.memory_space<vmem>>, vector<16x16x32xf32>
    %57 = vector.extract_strided_slice %5 {offsets = [7, 0], sizes = [1, 32], strides = [1, 1]} : vector<9x32xf32> to vector<1x32xf32>
    %58 = vector.shape_cast %57 : vector<1x32xf32> to vector<32xf32>
    %59 = vector.shape_cast %58 : vector<32xf32> to vector<1x1x32xf32>
    %60 = vector.broadcast %59 : vector<1x1x32xf32> to vector<16x16x32xf32>
    %61 = arith.mulf %56, %60 : vector<16x16x32xf32>
    %62 = arith.addf %55, %61 : vector<16x16x32xf32>
    %c2_34 = arith.constant 2 : index
    %c2_35 = arith.constant 2 : index
    %c0_36 = arith.constant 0 : index
    %63 = vector.load %arg9[%c2_34, %c2_35, %c0_36] : memref<18x24x32xf32, #tpu.memory_space<vmem>>, vector<16x16x32xf32>
    %64 = vector.extract_strided_slice %5 {offsets = [8, 0], sizes = [1, 32], strides = [1, 1]} : vector<9x32xf32> to vector<1x32xf32>
    %65 = vector.shape_cast %64 : vector<1x32xf32> to vector<32xf32>
    %66 = vector.shape_cast %65 : vector<32xf32> to vector<1x1x32xf32>
    %67 = vector.broadcast %66 : vector<1x1x32xf32> to vector<16x16x32xf32>
    %68 = arith.mulf %63, %67 : vector<16x16x32xf32>
    %69 = arith.addf %62, %68 : vector<16x16x32xf32>
    %c0_37 = arith.constant 0 : index
    %c0_38 = arith.constant 0 : index
    %70 = vector.load %arg3[%c0_37, %c0_38] : memref<1x32xf32, #tpu.memory_space<vmem>>, vector<1x32xf32>
    %71 = vector.shape_cast %70 : vector<1x32xf32> to vector<32xf32>
    %72 = vector.shape_cast %71 : vector<32xf32> to vector<1x1x32xf32>
    %73 = vector.broadcast %72 : vector<1x1x32xf32> to vector<16x16x32xf32>
    %74 = arith.mulf %69, %73 : vector<16x16x32xf32>
    %c0_39 = arith.constant 0 : index
    %c0_40 = arith.constant 0 : index
    %75 = vector.load %arg4[%c0_39, %c0_40] : memref<1x32xf32, #tpu.memory_space<vmem>>, vector<1x32xf32>
    %76 = vector.shape_cast %75 : vector<1x32xf32> to vector<32xf32>
    %77 = vector.shape_cast %76 : vector<32xf32> to vector<1x1x32xf32>
    %78 = vector.broadcast %77 : vector<1x1x32xf32> to vector<16x16x32xf32>
    %79 = arith.addf %74, %78 : vector<16x16x32xf32>
    %cst_41 = arith.constant 0.000000e+00 : f32
    %80 = vector.broadcast %cst_41 : f32 to vector<16x16x32xf32>
    %81 = arith.maximumf %79, %80 : vector<16x16x32xf32>
    %82 = vector.shape_cast %81 : vector<16x16x32xf32> to vector<256x32xf32>
    %83 = arith.truncf %82 : vector<256x32xf32> to vector<256x32xbf16>
    %c0_42 = arith.constant 0 : index
    %c0_43 = arith.constant 0 : index
    %84 = vector.load %arg5[%c0_42, %c0_43] : memref<32x64xbf16, #tpu.memory_space<vmem>>, vector<32x64xbf16>
    %cst_44 = arith.constant dense<0.000000e+00> : vector<256x64xf32>
    %85 = tpu.matmul %83, %84, %cst_44 {dimension_numbers = #tpu.dot_dimension_numbers<[1], [0], [0], [1], [0, 0, 1, 1], [], []>} : vector<256x32xbf16>, vector<32x64xbf16>, vector<256x64xf32> -> vector<256x64xf32>
    %c0_45 = arith.constant 0 : index
    %c0_46 = arith.constant 0 : index
    %86 = vector.load %arg6[%c0_45, %c0_46] : memref<1x64xf32, #tpu.memory_space<vmem>>, vector<1x64xf32>
    %87 = vector.broadcast %86 : vector<1x64xf32> to vector<256x64xf32>
    %88 = arith.mulf %85, %87 : vector<256x64xf32>
    %c0_47 = arith.constant 0 : index
    %c0_48 = arith.constant 0 : index
    %89 = vector.load %arg7[%c0_47, %c0_48] : memref<1x64xf32, #tpu.memory_space<vmem>>, vector<1x64xf32>
    %90 = vector.broadcast %89 : vector<1x64xf32> to vector<256x64xf32>
    %91 = arith.addf %88, %90 : vector<256x64xf32>
    %cst_49 = arith.constant 0.000000e+00 : f32
    %92 = vector.broadcast %cst_49 : f32 to vector<256x64xf32>
    %93 = arith.maximumf %91, %92 : vector<256x64xf32>
    %94 = vector.shape_cast %93 : vector<256x64xf32> to vector<1x16x16x64xf32>
    %c0_50 = arith.constant 0 : index
    %c0_51 = arith.constant 0 : index
    %c0_52 = arith.constant 0 : index
    %c0_53 = arith.constant 0 : index
    %95 = vector.load %arg8[%c0_50, %c0_51, %c0_52, %c0_53] : memref<1x16x16x64xf32, #tpu.memory_space<vmem>>, vector<1x16x16x64xf32>
    tpu.vector_store %arg8[%c0_50, %c0_51, %c0_52, %c0_53], %94 {strides = array<i32>} : memref<1x16x16x64xf32, #tpu.memory_space<vmem>>, vector<1x16x16x64xf32>,
    return
  }
  func.func @transform_0(%arg0: i32) -> (i32, i32, i32, i32) {
    %c0_i32 = arith.constant 0 : i32
    %c0_i32_0 = arith.constant 0 : i32
    %c0_i32_1 = arith.constant 0 : i32
    %c0_i32_2 = arith.constant 0 : i32
    return %arg0, %c0_i32, %c0_i32_0, %c0_i32_1 : i32, i32, i32, i32
  }
  func.func @transform_1(%arg0: i32) -> (i32, i32) {
    %c0_i32 = arith.constant 0 : i32
    %c0_i32_0 = arith.constant 0 : i32
    %c0_i32_1 = arith.constant 0 : i32
    return %c0_i32, %c0_i32_0 : i32, i32
  }
  func.func @transform_2(%arg0: i32) -> (i32, i32) {
    %c0_i32 = arith.constant 0 : i32
    %c0_i32_0 = arith.constant 0 : i32
    %c0_i32_1 = arith.constant 0 : i32
    return %c0_i32, %c0_i32_0 : i32, i32
  }
  func.func @transform_3(%arg0: i32) -> (i32, i32) {
    %c0_i32 = arith.constant 0 : i32
    %c0_i32_0 = arith.constant 0 : i32
    %c0_i32_1 = arith.constant 0 : i32
    return %c0_i32, %c0_i32_0 : i32, i32
  }
  func.func @transform_4(%arg0: i32) -> (i32, i32) {
    %c0_i32 = arith.constant 0 : i32
    %c0_i32_0 = arith.constant 0 : i32
    %c0_i32_1 = arith.constant 0 : i32
    return %c0_i32, %c0_i32_0 : i32, i32
  }
  func.func @transform_5(%arg0: i32) -> (i32, i32) {
    %c0_i32 = arith.constant 0 : i32
    %c0_i32_0 = arith.constant 0 : i32
    %c0_i32_1 = arith.constant 0 : i32
    return %c0_i32, %c0_i32_0 : i32, i32
  }
  func.func @transform_6(%arg0: i32) -> (i32, i32) {
    %c0_i32 = arith.constant 0 : i32
    %c0_i32_0 = arith.constant 0 : i32
    %c0_i32_1 = arith.constant 0 : i32
    return %c0_i32, %c0_i32_0 : i32, i32
  }
  func.func @transform_7(%arg0: i32) -> (i32, i32, i32, i32) {
    %c0_i32 = arith.constant 0 : i32
    %c0_i32_0 = arith.constant 0 : i32
    %c0_i32_1 = arith.constant 0 : i32
    %c0_i32_2 = arith.constant 0 : i32
    return %arg0, %c0_i32, %c0_i32_0, %c0_i32_1 : i32, i32, i32, i32
  }
}

</mosaic_0001>

<llo_original>
// kernel: forward.3
$region0: #{forward.3}
  #allocation0 [shape = 'u32[]', space=smem, size = 0x4, offset = 0x4, fixed_abs, tag = 'smem constant byte address 0x4 - core index']
  #allocation1 [shape = 'u32[144,128]{1,0:T(1,128)}', space=vmem, size = 0x12000, scoped, tag = 'internal scratch']
  #allocation2 [shape = 'f32[18,24,64]{2,1,0:T(8,128)}', space=vmem, size = 0x36000, scoped, tag = 'scratch operand']
  %s0 = inlined_call_operand.vmem [shape: f32[2,16,16,64], index: 0, kind: input, shape index: {}]
  %s1 = inlined_call_operand.vmem [shape: f32[9,64], index: 1, kind: input, shape index: {}]
  %s2 = inlined_call_operand.vmem [shape: f32[1,64], index: 2, kind: input, shape index: {}]
  %s3 = inlined_call_operand.vmem [shape: f32[1,64], index: 3, kind: input, shape index: {}]
  %s4 = inlined_call_operand.vmem [shape: bf16[64,128], index: 4, kind: input, shape index: {}]
  %s5 = inlined_call_operand.vmem [shape: f32[1,128], index: 5, kind: input, shape index: {}]
  %s6 = inlined_call_operand.vmem [shape: f32[1,128], index: 6, kind: input, shape index: {}]
  %s7 = inlined_call_operand.hbm [shape: f32[2,8,8,128], index: 7, kind: output, shape index: {}]
  %s8 = sld [smem:[#allocation0]]
  $region61: #{forward.3} parent=0
    _
  %s10 = ssub.s32 1, %s8
  %s11 = scalar_select 0, %s10, %s8
  $region1: #{forward.3} parent=0
    #allocation3 [shape = 'u8[65536]{0}', space=vmem, size = 0x10000, scoped, tag = 'output window, operand 0']
    #allocation4 [shape = 's32[2]{0}', space=sflag, size = 0x8, scoped, tag = 'scoped memory for forward.3']
    %12 = vsyncpa [#allocation4], 0
    %s13 = scalar_lea.sflag [#allocation4], 1
    %14 = vsyncpa %s13, 0
    loop: start=0, step=1, limit=4
    $region2: #{forward.3} parent=1 // loop_pre_header
      _
    $region3: #{forward.3} parent=1 // loop_header
      %s16 = sphi 0, %s20
      %p17 = scmp.ge.s32.totalorder %s16, 4
      %s26 = sphi 0, %s28
      %s29 = sphi 0, %s26
      %s30 = sphi 0, %s29
      %s46 = sphi 0, %s30
      %s50 = sphi 0, %s50
      %s52 = sphi 0, %s50
      %s53 = sphi 0, %s52
      %s67 = sphi 0, %s53
      %s71 = sphi 0, %s71
      %s73 = sphi 0, %s71
      %s74 = sphi 0, %s73
      %s88 = sphi 0, %s74
      %s92 = sphi 0, %s92
      %s94 = sphi 0, %s92
      %s95 = sphi 0, %s94
      %s109 = sphi 0, %s95
      %s113 = sphi 0, %s113
      %s115 = sphi 0, %s113
      %s116 = sphi 0, %s115
      %s130 = sphi 0, %s116
      %s134 = sphi 0, %s134
      %s136 = sphi 0, %s134
      %s137 = sphi 0, %s136
      %s151 = sphi 0, %s137
      %s155 = sphi 0, %s155
      %s157 = sphi 0, %s155
      %s158 = sphi 0, %s157
      %s172 = sphi 0, %s158
      %s178 = sphi 0, %s180
      %s181 = sphi 0, %s178
      %s182 = sphi 0, %s181
      %s198 = sphi 0, %s182
    $region4: #{forward.3} parent=1 // loop_header_branch
      %19 = sbr.rel (%p17) target = $region8
    $region5: #{forward.3} parent=1 // loop_body
      %s21 = ssub.s32 %s16, 1
      %s22 = ssub.s32 %s16, 2
      %s23 = sadd.s32 %s16, 1
      %s24 = ssub.s32 %s16, %s23
      %p25 = scmp.eq.s32.totalorder %s24, 0
      %s27 = sadd.s32 %s26, 1
      %s28 = scalar_select %p25, %s26, %s27
      %p31 = pneg %p25
      %p32 = scmp.eq.s32.totalorder %s16, 1
      %p33 = por %p31, %p32
      %p34 = scmp.ne.s32.totalorder %s26, %s29
      %p35 = scmp.eq.s32.totalorder %s16, 0
      %p36 = por %p34, %p35
      %p37 = scmp.ne.s32.totalorder %s26, %s29
      %p38 = scmp.eq.s32.totalorder %s21, 1
      %p39 = por %p37, %p38
      %p40 = scmp.ne.s32.totalorder %s29, %s30
      %p41 = scmp.eq.s32.totalorder %s21, 0
      %p42 = por %p40, %p41
      %p43 = scmp.ne.s32.totalorder %s29, %s30
      %p44 = scmp.eq.s32.totalorder %s22, 1
      %p45 = por %p43, %p44
      %p47 = scmp.ne.s32.totalorder %s30, %s46
      %p48 = scmp.eq.s32.totalorder %s22, 0
      %p49 = por %p47, %p48
      %s51 = sadd.s32 %s50, 1
      %p54 = scmp.eq.s32.totalorder %s16, 1
      %p55 = scmp.ne.s32.totalorder %s50, %s52
      %p56 = scmp.eq.s32.totalorder %s16, 0
      %p57 = por %p55, %p56
      %p58 = scmp.ne.s32.totalorder %s50, %s52
      %p59 = scmp.eq.s32.totalorder %s21, 1
      %p60 = por %p58, %p59
      %p61 = scmp.ne.s32.totalorder %s52, %s53
      %p62 = scmp.eq.s32.totalorder %s21, 0
      %p63 = por %p61, %p62
      %p64 = scmp.ne.s32.totalorder %s52, %s53
      %p65 = scmp.eq.s32.totalorder %s22, 1
      %p66 = por %p64, %p65
      %p68 = scmp.ne.s32.totalorder %s53, %s67
      %p69 = scmp.eq.s32.totalorder %s22, 0
      %p70 = por %p68, %p69
      %s72 = sadd.s32 %s71, 1
      %p75 = scmp.eq.s32.totalorder %s16, 1
      %p76 = scmp.ne.s32.totalorder %s71, %s73
      %p77 = scmp.eq.s32.totalorder %s16, 0
      %p78 = por %p76, %p77
      %p79 = scmp.ne.s32.totalorder %s71, %s73
      %p80 = scmp.eq.s32.totalorder %s21, 1
      %p81 = por %p79, %p80
      %p82 = scmp.ne.s32.totalorder %s73, %s74
      %p83 = scmp.eq.s32.totalorder %s21, 0
      %p84 = por %p82, %p83
      %p85 = scmp.ne.s32.totalorder %s73, %s74
      %p86 = scmp.eq.s32.totalorder %s22, 1
      %p87 = por %p85, %p86
      %p89 = scmp.ne.s32.totalorder %s74, %s88
      %p90 = scmp.eq.s32.totalorder %s22, 0
      %p91 = por %p89, %p90
      %s93 = sadd.s32 %s92, 1
      %p96 = scmp.eq.s32.totalorder %s16, 1
      %p97 = scmp.ne.s32.totalorder %s92, %s94
      %p98 = scmp.eq.s32.totalorder %s16, 0
      %p99 = por %p97, %p98
      %p100 = scmp.ne.s32.totalorder %s92, %s94
      %p101 = scmp.eq.s32.totalorder %s21, 1
      %p102 = por %p100, %p101
      %p103 = scmp.ne.s32.totalorder %s94, %s95
      %p104 = scmp.eq.s32.totalorder %s21, 0
      %p105 = por %p103, %p104
      %p106 = scmp.ne.s32.totalorder %s94, %s95
      %p107 = scmp.eq.s32.totalorder %s22, 1
      %p108 = por %p106, %p107
      %p110 = scmp.ne.s32.totalorder %s95, %s109
      %p111 = scmp.eq.s32.totalorder %s22, 0
      %p112 = por %p110, %p111
      %s114 = sadd.s32 %s113, 1
      %p117 = scmp.eq.s32.totalorder %s16, 1
      %p118 = scmp.ne.s32.totalorder %s113, %s115
      %p119 = scmp.eq.s32.totalorder %s16, 0
      %p120 = por %p118, %p119
      %p121 = scmp.ne.s32.totalorder %s113, %s115
      %p122 = scmp.eq.s32.totalorder %s21, 1
      %p123 = por %p121, %p122
      %p124 = scmp.ne.s32.totalorder %s115, %s116
      %p125 = scmp.eq.s32.totalorder %s21, 0
      %p126 = por %p124, %p125
      %p127 = scmp.ne.s32.totalorder %s115, %s116
      %p128 = scmp.eq.s32.totalorder %s22, 1
      %p129 = por %p127, %p128
      %p131 = scmp.ne.s32.totalorder %s116, %s130
      %p132 = scmp.eq.s32.totalorder %s22, 0
      %p133 = por %p131, %p132
      %s135 = sadd.s32 %s134, 1
      %p138 = scmp.eq.s32.totalorder %s16, 1
      %p139 = scmp.ne.s32.totalorder %s134, %s136
      %p140 = scmp.eq.s32.totalorder %s16, 0
      %p141 = por %p139, %p140
      %p142 = scmp.ne.s32.totalorder %s134, %s136
      %p143 = scmp.eq.s32.totalorder %s21, 1
      %p144 = por %p142, %p143
      %p145 = scmp.ne.s32.totalorder %s136, %s137
      %p146 = scmp.eq.s32.totalorder %s21, 0
      %p147 = por %p145, %p146
      %p148 = scmp.ne.s32.totalorder %s136, %s137
      %p149 = scmp.eq.s32.totalorder %s22, 1
      %p150 = por %p148, %p149
      %p152 = scmp.ne.s32.totalorder %s137, %s151
      %p153 = scmp.eq.s32.totalorder %s22, 0
      %p154 = por %p152, %p153
      %s156 = sadd.s32 %s155, 1
      %p159 = scmp.eq.s32.totalorder %s16, 1
      %p160 = scmp.ne.s32.totalorder %s155, %s157
      %p161 = scmp.eq.s32.totalorder %s16, 0
      %p162 = por %p160, %p161
      %p163 = scmp.ne.s32.totalorder %s155, %s157
      %p164 = scmp.eq.s32.totalorder %s21, 1
      %p165 = por %p163, %p164
      %p166 = scmp.ne.s32.totalorder %s157, %s158
      %p167 = scmp.eq.s32.totalorder %s21, 0
      %p168 = por %p166, %p167
      %p169 = scmp.ne.s32.totalorder %s157, %s158
      %p170 = scmp.eq.s32.totalorder %s22, 1
      %p171 = por %p169, %p170
      %p173 = scmp.ne.s32.totalorder %s158, %s172
      %p174 = scmp.eq.s32.totalorder %s22, 0
      %p175 = por %p173, %p174
      %s176 = ssub.s32 %s16, %s23
      %p177 = scmp.eq.s32.totalorder %s176, 0
      %s179 = sadd.s32 %s178, 1
      %s180 = scalar_select %p177, %s178, %s179
      %p183 = pneg %p177
      %p184 = scmp.eq.s32.totalorder %s16, 1
      %p185 = por %p183, %p184
      %p186 = scmp.ne.s32.totalorder %s178, %s181
      %p187 = scmp.eq.s32.totalorder %s16, 0
      %p188 = por %p186, %p187
      %p189 = scmp.ne.s32.totalorder %s178, %s181
      %p190 = scmp.eq.s32.totalorder %s21, 1
      %p191 = por %p189, %p190
      %p192 = scmp.ne.s32.totalorder %s181, %s182
      %p193 = scmp.eq.s32.totalorder %s21, 0
      %p194 = por %p192, %p193
      %p195 = scmp.ne.s32.totalorder %s181, %s182
      %p196 = scmp.eq.s32.totalorder %s22, 1
      %p197 = por %p195, %p196
      %p199 = scmp.ne.s32.totalorder %s182, %s198
      %p200 = scmp.eq.s32.totalorder %s22, 0
      %p201 = por %p199, %p200
      %p202 = scmp.le.s32.totalorder 1, %s16
      %p203 = scmp.lt.s32.totalorder %s16, 3
      %p204 = pnand %p202, %p203
      %p205 = pneg %p204
      // Predicated region
      $region9: #{forward.3} parent=5 // pred_check
        _
      $region10: #{forward.3} parent=5 // pred_check_branch
        %207 = sbr.rel (%p204) target = $region12
      $region11: #{forward.3} parent=5 // pred_region
        %s208 = ssub.s32 %s16, 1
        // Predicated region
        $region13: #{forward.3} parent=11 // pred_check
          %p209 = pneg %p63
        $region14: #{forward.3} parent=11 // pred_check_branch
          %211 = sbr.rel (%p209) target = $region16
        $region15: #{forward.3} parent=11 // pred_region
          _
        $region16: #{forward.3} parent=11 // pred_fallthru
          _
        // Predicated region
        $region17: #{forward.3} parent=11 // pred_check
          %p212 = pneg %p84
        $region18: #{forward.3} parent=11 // pred_check_branch
          %214 = sbr.rel (%p212) target = $region20
        $region19: #{forward.3} parent=11 // pred_region
          _
        $region20: #{forward.3} parent=11 // pred_fallthru
          _
        // Predicated region
        $region21: #{forward.3} parent=11 // pred_check
          %p215 = pneg %p105
        $region22: #{forward.3} parent=11 // pred_check_branch
          %217 = sbr.rel (%p215) target = $region24
        $region23: #{forward.3} parent=11 // pred_region
          _
        $region24: #{forward.3} parent=11 // pred_fallthru
          _
        // Predicated region
        $region25: #{forward.3} parent=11 // pred_check
          %p218 = pneg %p126
        $region26: #{forward.3} parent=11 // pred_check_branch
          %220 = sbr.rel (%p218) target = $region28
        $region27: #{forward.3} parent=11 // pred_region
          _
        $region28: #{forward.3} parent=11 // pred_fallthru
          _
        // Predicated region
        $region29: #{forward.3} parent=11 // pred_check
          %p221 = pneg %p147
        $region30: #{forward.3} parent=11 // pred_check_branch
          %223 = sbr.rel (%p221) target = $region32
        $region31: #{forward.3} parent=11 // pred_region
          _
        $region32: #{forward.3} parent=11 // pred_fallthru
          _
        // Predicated region
        $region33: #{forward.3} parent=11 // pred_check
          %p224 = pneg %p168
        $region34: #{forward.3} parent=11 // pred_check_branch
          %226 = sbr.rel (%p224) target = $region36
        $region35: #{forward.3} parent=11 // pred_region
          _
        $region36: #{forward.3} parent=11 // pred_fallthru
          _
      $region12: #{forward.3} parent=5 // pred_fallthru
        _
      %p227 = scmp.lt.s32.totalorder %s16, 2
      // Predicated region
      $region37: #{forward.3} parent=5 // pred_check
        %p228 = pneg %p227
      $region38: #{forward.3} parent=5 // pred_check_branch
        %230 = sbr.rel (%p228) target = $region40
      $region39: #{forward.3} parent=5 // pred_region
        // Predicated region
        $region41: #{forward.3} parent=39 // pred_check
          %p231 = pneg %p36
        $region42: #{forward.3} parent=39 // pred_check_branch
          %233 = sbr.rel (%p231) target = $region44
        $region43: #{forward.3} parent=39 // pred_region
          %p234 = scmp.lt.s32.totalorder %s16, 1
          %s235 = scalar_select %p234, %s16, 1
          %s236 = smul.addr %s235, 32
          %s237 = smul.addr %s236, 8
          %s238 = scalar_lea.vmem %s0, %s237
        $region44: #{forward.3} parent=39 // pred_fallthru
          _
      $region40: #{forward.3} parent=5 // pred_fallthru
        _
      %p239 = scmp.le.s32.totalorder 1, %s16
      %p240 = scmp.lt.s32.totalorder %s16, 3
      %p241 = pnand %p239, %p240
      %p242 = pneg %p241
      // Predicated region
      $region45: #{forward.3} parent=5 // pred_check
        _
      $region46: #{forward.3} parent=5 // pred_check_branch
        %244 = sbr.rel (%p241) target = $region48
      $region47: #{forward.3} parent=5 // pred_region
        %s245 = ssub.s32 %s16, 1
        %p246 = scmp.lt.s32.totalorder %s21, 1
        %s247 = scalar_select %p246, %s21, 1
        %s248 = smul.addr %s247, 32
        %s249 = smul.addr %s248, 8
        %s250 = scalar_lea.vmem %s0, %s249
        %p251 = pneg %p42
        %p252 = pneg %p39
        %p253 = pneg %p63
        %p254 = pneg %p60
        %p255 = pneg %p84
        %p256 = pneg %p81
        %p257 = pneg %p105
        %p258 = pneg %p102
        %p259 = pneg %p126
        %p260 = pneg %p123
        %p261 = pneg %p147
        %p262 = pneg %p144
        %p263 = pneg %p168
        %p264 = pneg %p165
        %p265 = pneg %p194
        %p266 = pneg %p191
        %s267 = sand.u32 %s181, 1
        %s268 = scalar_lea.sflag [#allocation4], %s267
        %s269 = sand.u32 %s181, 1
        %s270 = smul.addr %s269, 64
        %s271 = scalar_lea.vmem [#allocation3], %s270
        %p272 = scmp.lt.s32.totalorder %s21, 1
        %s273 = scalar_select %p272, %s21, 1
        %s274 = smul.addr %s273, 32
        %s275 = smul.addr %s274, 8
        %s276 = scalar_lea.vmem %s0, %s275
        %vm278 = vcmask 523264
        %279 = vst.msk [vmem:[#allocation2] sm:$0xff] %vm278, 0.0
        %280 = vst.msk [vmem:[#allocation2 + $0x8] sm:$0xff] %vm278, 0.0
        %281 = vst.msk [vmem:[#allocation2 + $0x10] sm:$0xff] %vm278, 0.0
        %282 = vst.msk [vmem:[#allocation2 + $0x18] sm:$0xff] %vm278, 0.0
        %283 = vst.msk [vmem:[#allocation2 + $0x20] sm:$0xff] %vm278, 0.0
        %284 = vst.msk [vmem:[#allocation2 + $0x28] sm:$0xff] %vm278, 0.0
        %285 = vst.msk [vmem:[#allocation2 + $0x30] sm:$0xff] %vm278, 0.0
        %286 = vst.msk [vmem:[#allocation2 + $0x38] sm:$0xff] %vm278, 0.0
        %287 = vst.msk [vmem:[#allocation2 + $0x40] sm:$0xff] %vm278, 0.0
        %288 = vst.msk [vmem:[#allocation2 + $0x48] sm:$0xff] %vm278, 0.0
        %289 = vst.msk [vmem:[#allocation2 + $0x50] sm:$0xff] %vm278, 0.0
        %290 = vst.msk [vmem:[#allocation2 + $0x58] sm:$0xff] %vm278, 0.0
        %291 = vst.msk [vmem:[#allocation2 + $0x60] sm:$0xff] %vm278, 0.0
        %292 = vst.msk [vmem:[#allocation2 + $0x68] sm:$0xff] %vm278, 0.0
        %293 = vst.msk [vmem:[#allocation2 + $0x70] sm:$0xff] %vm278, 0.0
        %294 = vst.msk [vmem:[#allocation2 + $0x78] sm:$0xff] %vm278, 0.0
        %295 = vst.msk [vmem:[#allocation2 + $0x80] sm:$0xff] %vm278, 0.0
        %296 = vst.msk [vmem:[#allocation2 + $0x88] sm:$0xff] %vm278, 0.0
        %297 = vst.msk [vmem:[#allocation2 + $0x90] sm:$0xff] %vm278, 0.0
        %298 = vst.msk [vmem:[#allocation2 + $0x98] sm:$0xff] %vm278, 0.0
        %299 = vst.msk [vmem:[#allocation2 + $0xa0] sm:$0xff] %vm278, 0.0
        %300 = vst.msk [vmem:[#allocation2 + $0xa8] sm:$0xff] %vm278, 0.0
        %301 = vst.msk [vmem:[#allocation2 + $0xb0] sm:$0xff] %vm278, 0.0
        %302 = vst.msk [vmem:[#allocation2 + $0xb8] sm:$0xff] %vm278, 0.0
        %303 = vst.msk [vmem:[#allocation2 + $0xc0] sm:$0xff] %vm278, 0.0
        %304 = vst.msk [vmem:[#allocation2 + $0xc8] sm:$0xff] %vm278, 0.0
        %305 = vst.msk [vmem:[#allocation2 + $0xd0] sm:$0xff] %vm278, 0.0
        %306 = vst.msk [vmem:[#allocation2 + $0xd8] sm:$0xff] %vm278, 0.0
        %307 = vst.msk [vmem:[#allocation2 + $0xe0] sm:$0xff] %vm278, 0.0
        %308 = vst.msk [vmem:[#allocation2 + $0xe8] sm:$0xff] %vm278, 0.0
        %309 = vst.msk [vmem:[#allocation2 + $0xf0] sm:$0xff] %vm278, 0.0
        %310 = vst.msk [vmem:[#allocation2 + $0xf8] sm:$0xff] %vm278, 0.0
        %311 = vst.msk [vmem:[#allocation2 + $0x100] sm:$0xff] %vm278, 0.0
        %312 = vst.msk [vmem:[#allocation2 + $0x108] sm:$0xff] %vm278, 0.0
        %313 = vst.msk [vmem:[#allocation2 + $0x110] sm:$0xff] %vm278, 0.0
        %314 = vst.msk [vmem:[#allocation2 + $0x118] sm:$0xff] %vm278, 0.0
        %315 = vst.msk [vmem:[#allocation2 + $0x120] sm:$0xff] %vm278, 0.0
        %316 = vst.msk [vmem:[#allocation2 + $0x128] sm:$0xff] %vm278, 0.0
        %317 = vst.msk [vmem:[#allocation2 + $0x130] sm:$0xff] %vm278, 0.0
        %318 = vst.msk [vmem:[#allocation2 + $0x138] sm:$0xff] %vm278, 0.0
        %319 = vst.msk [vmem:[#allocation2 + $0x140] sm:$0xff] %vm278, 0.0
        %320 = vst.msk [vmem:[#allocation2 + $0x148] sm:$0xff] %vm278, 0.0
        %321 = vst.msk [vmem:[#allocation2 + $0x150] sm:$0xff] %vm278, 0.0
        %322 = vst.msk [vmem:[#allocation2 + $0x158] sm:$0xff] %vm278, 0.0
        %323 = vst.msk [vmem:[#allocation2 + $0x160] sm:$0xff] %vm278, 0.0
        %324 = vst.msk [vmem:[#allocation2 + $0x168] sm:$0xff] %vm278, 0.0
        %325 = vst.msk [vmem:[#allocation2 + $0x170] sm:$0xff] %vm278, 0.0
        %326 = vst.msk [vmem:[#allocation2 + $0x178] sm:$0xff] %vm278, 0.0
        %327 = vst.msk [vmem:[#allocation2 + $0x180] sm:$0xff] %vm278, 0.0
        %328 = vst.msk [vmem:[#allocation2 + $0x188] sm:$0xff] %vm278, 0.0
        %329 = vst.msk [vmem:[#allocation2 + $0x190] sm:$0xff] %vm278, 0.0
        %330 = vst.msk [vmem:[#allocation2 + $0x198] sm:$0xff] %vm278, 0.0
        %331 = vst.msk [vmem:[#allocation2 + $0x1a0] sm:$0xff] %vm278, 0.0
        %332 = vst.msk [vmem:[#allocation2 + $0x1a8] sm:$0xff] %vm278, 0.0
        %v333 = vld [vmem:[%s276] sm:$0xff]
        %v334 = vld [vmem:[%s276 + $0x8] sm:$0xff]
        %v335 = vld [vmem:[%s276 + $0x10] sm:$0xff]
        %v336 = vld [vmem:[%s276 + $0x18] sm:$0xff]
        %v337 = vld [vmem:[%s276 + $0x20] sm:$0xff]
        %v338 = vld [vmem:[%s276 + $0x28] sm:$0xff]
        %v339 = vld [vmem:[%s276 + $0x30] sm:$0xff]
        %v340 = vld [vmem:[%s276 + $0x38] sm:$0xff]
        %v341 = vld [vmem:[%s276 + $0x40] sm:$0xff]
        %v342 = vld [vmem:[%s276 + $0x48] sm:$0xff]
        %v343 = vld [vmem:[%s276 + $0x50] sm:$0xff]
        %v344 = vld [vmem:[%s276 + $0x58] sm:$0xff]
        %v345 = vld [vmem:[%s276 + $0x60] sm:$0xff]
        %v346 = vld [vmem:[%s276 + $0x68] sm:$0xff]
        %v347 = vld [vmem:[%s276 + $0x70] sm:$0xff]
        %v348 = vld [vmem:[%s276 + $0x78] sm:$0xff]
        %v349 = vld [vmem:[%s276 + $0x80] sm:$0xff]
        %v350 = vld [vmem:[%s276 + $0x88] sm:$0xff]
        %v351 = vld [vmem:[%s276 + $0x90] sm:$0xff]
        %v352 = vld [vmem:[%s276 + $0x98] sm:$0xff]
        %v353 = vld [vmem:[%s276 + $0xa0] sm:$0xff]
        %v354 = vld [vmem:[%s276 + $0xa8] sm:$0xff]
        %v355 = vld [vmem:[%s276 + $0xb0] sm:$0xff]
        %v356 = vld [vmem:[%s276 + $0xb8] sm:$0xff]
        %v357 = vld [vmem:[%s276 + $0xc0] sm:$0xff]
        %v358 = vld [vmem:[%s276 + $0xc8] sm:$0xff]
        %v359 = vld [vmem:[%s276 + $0xd0] sm:$0xff]
        %v360 = vld [vmem:[%s276 + $0xd8] sm:$0xff]
        %v361 = vld [vmem:[%s276 + $0xe0] sm:$0xff]
        %v362 = vld [vmem:[%s276 + $0xe8] sm:$0xff]
        %v363 = vld [vmem:[%s276 + $0xf0] sm:$0xff]
        %v364 = vld [vmem:[%s276 + $0xf8] sm:$0xff]
        %s365 = scalar_lea.vmem [#allocation2], 24
        %366 = vst.msk [vmem:[%s365 + $0x1] sm:$0xff] %vm278, %v333
        %367 = vst.msk [vmem:[%s365 + $0x9] sm:$0xff] %vm278, %v334
        %368 = vst.msk [vmem:[%s365 + $0x19] sm:$0xff] %vm278, %v335
        %369 = vst.msk [vmem:[%s365 + $0x21] sm:$0xff] %vm278, %v336
        %370 = vst.msk [vmem:[%s365 + $0x31] sm:$0xff] %vm278, %v337
        %371 = vst.msk [vmem:[%s365 + $0x39] sm:$0xff] %vm278, %v338
        %372 = vst.msk [vmem:[%s365 + $0x49] sm:$0xff] %vm278, %v339
        %373 = vst.msk [vmem:[%s365 + $0x51] sm:$0xff] %vm278, %v340
        %374 = vst.msk [vmem:[%s365 + $0x61] sm:$0xff] %vm278, %v341
        %375 = vst.msk [vmem:[%s365 + $0x69] sm:$0xff] %vm278, %v342
        %376 = vst.msk [vmem:[%s365 + $0x79] sm:$0xff] %vm278, %v343
        %377 = vst.msk [vmem:[%s365 + $0x81] sm:$0xff] %vm278, %v344
        %378 = vst.msk [vmem:[%s365 + $0x91] sm:$0xff] %vm278, %v345
        %379 = vst.msk [vmem:[%s365 + $0x99] sm:$0xff] %vm278, %v346
        %380 = vst.msk [vmem:[%s365 + $0xa9] sm:$0xff] %vm278, %v347
        %381 = vst.msk [vmem:[%s365 + $0xb1] sm:$0xff] %vm278, %v348
        %382 = vst.msk [vmem:[%s365 + $0xc1] sm:$0xff] %vm278, %v349
        %383 = vst.msk [vmem:[%s365 + $0xc9] sm:$0xff] %vm278, %v350
        %384 = vst.msk [vmem:[%s365 + $0xd9] sm:$0xff] %vm278, %v351
        %385 = vst.msk [vmem:[%s365 + $0xe1] sm:$0xff] %vm278, %v352
        %386 = vst.msk [vmem:[%s365 + $0xf1] sm:$0xff] %vm278, %v353
        %387 = vst.msk [vmem:[%s365 + $0xf9] sm:$0xff] %vm278, %v354
        %388 = vst.msk [vmem:[%s365 + $0x109] sm:$0xff] %vm278, %v355
        %389 = vst.msk [vmem:[%s365 + $0x111] sm:$0xff] %vm278, %v356
        %390 = vst.msk [vmem:[%s365 + $0x121] sm:$0xff] %vm278, %v357
        %391 = vst.msk [vmem:[%s365 + $0x129] sm:$0xff] %vm278, %v358
        %392 = vst.msk [vmem:[%s365 + $0x139] sm:$0xff] %vm278, %v359
        %393 = vst.msk [vmem:[%s365 + $0x141] sm:$0xff] %vm278, %v360
        %394 = vst.msk [vmem:[%s365 + $0x151] sm:$0xff] %vm278, %v361
        %395 = vst.msk [vmem:[%s365 + $0x159] sm:$0xff] %vm278, %v362
        %396 = vst.msk [vmem:[%s365 + $0x169] sm:$0xff] %vm278, %v363
        %397 = vst.msk [vmem:[%s365 + $0x171] sm:$0xff] %vm278, %v364
        %v398 = vld [vmem:[%s1] sm:$0xff]
        %v399 = vld [vmem:[%s1 + $0x8] sm:$0x1]
        %v400 = vld [vmem:[#allocation2] ss:$2 sm:$0xff]
        %s401 = scalar_lea.vmem [#allocation2], 48
        %v402 = vld [vmem:[%s401] ss:$2 sm:$0xff]
        %s403 = scalar_lea.vmem [#allocation2], 96
        %v404 = vld [vmem:[%s403] ss:$2 sm:$0xff]
        %s405 = scalar_lea.vmem [#allocation2], 144
        %v406 = vld [vmem:[%s405] ss:$2 sm:$0xff]
        %s407 = scalar_lea.vmem [#allocation2], 192
        %v408 = vld [vmem:[%s407] ss:$2 sm:$0xff]
        %s409 = scalar_lea.vmem [#allocation2], 240
        %v410 = vld [vmem:[%s409] ss:$2 sm:$0xff]
        %s411 = scalar_lea.vmem [#allocation2], 288
        %v412 = vld [vmem:[%s411] ss:$2 sm:$0xff]
        %s413 = scalar_lea.vmem [#allocation2], 336
        %v414 = vld [vmem:[%s413] ss:$2 sm:$0xff]
        %v415 = vlaneseq
        %v416 = vshrl.u32 %v415, 7
        %v417 = vsub.s32 0, %v416
        %v418 = vrot.slane %v398, %v417
        %v419 = vmul.f32 %v400, %v418
        %v420 = vmul.f32 %v402, %v418
        %v421 = vmul.f32 %v404, %v418
        %v422 = vmul.f32 %v406, %v418
        %v423 = vmul.f32 %v408, %v418
        %v424 = vmul.f32 %v410, %v418
        %v425 = vmul.f32 %v412, %v418
        %v426 = vmul.f32 %v414, %v418
        %v427 = vadd.f32 %v419, 0.0
        %v428 = vadd.f32 %v420, 0.0
        %v429 = vadd.f32 %v421, 0.0
        %v430 = vadd.f32 %v422, 0.0
        %v431 = vadd.f32 %v423, 0.0
        %v432 = vadd.f32 %v424, 0.0
        %v433 = vadd.f32 %v425, 0.0
        %v434 = vadd.f32 %v426, 0.0
        %s435 = scalar_lea.vmem [#allocation2], 1
        %v436 = vld [vmem:[%s435] ss:$2 sm:$0xff]
        %s437 = scalar_lea.vmem [#allocation2], 49
        %v438 = vld [vmem:[%s437] ss:$2 sm:$0xff]
        %s439 = scalar_lea.vmem [#allocation2], 97
        %v440 = vld [vmem:[%s439] ss:$2 sm:$0xff]
        %s441 = scalar_lea.vmem [#allocation2], 145
        %v442 = vld [vmem:[%s441] ss:$2 sm:$0xff]
        %s443 = scalar_lea.vmem [#allocation2], 193
        %v444 = vld [vmem:[%s443] ss:$2 sm:$0xff]
        %s445 = scalar_lea.vmem [#allocation2], 241
        %v446 = vld [vmem:[%s445] ss:$2 sm:$0xff]
        %s447 = scalar_lea.vmem [#allocation2], 289
        %v448 = vld [vmem:[%s447] ss:$2 sm:$0xff]
        %s449 = scalar_lea.vmem [#allocation2], 337
        %v450 = vld [vmem:[%s449] ss:$2 sm:$0xff]
        %v451 = vlaneseq
        %v452 = vshrl.u32 %v451, 7
        %v453 = vsub.s32 1, %v452
        %v454 = vrot.slane %v398, %v453
        %v455 = vmul.f32 %v436, %v454
        %v456 = vmul.f32 %v438, %v454
        %v457 = vmul.f32 %v440, %v454
        %v458 = vmul.f32 %v442, %v454
        %v459 = vmul.f32 %v444, %v454
        %v460 = vmul.f32 %v446, %v454
        %v461 = vmul.f32 %v448, %v454
        %v462 = vmul.f32 %v450, %v454
        %v463 = vadd.f32 %v427, %v455
        %v464 = vadd.f32 %v428, %v456
        %v465 = vadd.f32 %v429, %v457
        %v466 = vadd.f32 %v430, %v458
        %v467 = vadd.f32 %v431, %v459
        %v468 = vadd.f32 %v432, %v460
        %v469 = vadd.f32 %v433, %v461
        %v470 = vadd.f32 %v434, %v462
        %s471 = scalar_lea.vmem [#allocation2], 2
        %v472 = vld [vmem:[%s471] ss:$2 sm:$0xff]
        %s473 = scalar_lea.vmem [#allocation2], 50
        %v474 = vld [vmem:[%s473] ss:$2 sm:$0xff]
        %s475 = scalar_lea.vmem [#allocation2], 98
        %v476 = vld [vmem:[%s475] ss:$2 sm:$0xff]
        %s477 = scalar_lea.vmem [#allocation2], 146
        %v478 = vld [vmem:[%s477] ss:$2 sm:$0xff]
        %s479 = scalar_lea.vmem [#allocation2], 194
        %v480 = vld [vmem:[%s479] ss:$2 sm:$0xff]
        %s481 = scalar_lea.vmem [#allocation2], 242
        %v482 = vld [vmem:[%s481] ss:$2 sm:$0xff]
        %s483 = scalar_lea.vmem [#allocation2], 290
        %v484 = vld [vmem:[%s483] ss:$2 sm:$0xff]
        %s485 = scalar_lea.vmem [#allocation2], 338
        %v486 = vld [vmem:[%s485] ss:$2 sm:$0xff]
        %v487 = vlaneseq
        %v488 = vshrl.u32 %v487, 7
        %v489 = vsub.s32 2, %v488
        %v490 = vrot.slane %v398, %v489
        %v491 = vmul.f32 %v472, %v490
        %v492 = vmul.f32 %v474, %v490
        %v493 = vmul.f32 %v476, %v490
        %v494 = vmul.f32 %v478, %v490
        %v495 = vmul.f32 %v480, %v490
        %v496 = vmul.f32 %v482, %v490
        %v497 = vmul.f32 %v484, %v490
        %v498 = vmul.f32 %v486, %v490
        %v499 = vadd.f32 %v463, %v491
        %v500 = vadd.f32 %v464, %v492
        %v501 = vadd.f32 %v465, %v493
        %v502 = vadd.f32 %v466, %v494
        %v503 = vadd.f32 %v467, %v495
        %v504 = vadd.f32 %v468, %v496
        %v505 = vadd.f32 %v469, %v497
        %v506 = vadd.f32 %v470, %v498
        %v507 = vld [vmem:[%s365] ss:$2 sm:$0xff]
        %s508 = scalar_lea.vmem %s365, 48 [#allocation2]
        %v509 = vld [vmem:[%s508] ss:$2 sm:$0xff]
        %s510 = scalar_lea.vmem %s365, 96 [#allocation2]
        %v511 = vld [vmem:[%s510] ss:$2 sm:$0xff]
        %s512 = scalar_lea.vmem %s365, 144 [#allocation2]
        %v513 = vld [vmem:[%s512] ss:$2 sm:$0xff]
        %s514 = scalar_lea.vmem %s365, 192 [#allocation2]
        %v515 = vld [vmem:[%s514] ss:$2 sm:$0xff]
        %s516 = scalar_lea.vmem %s365, 240 [#allocation2]
        %v517 = vld [vmem:[%s516] ss:$2 sm:$0xff]
        %s518 = scalar_lea.vmem %s365, 288 [#allocation2]
        %v519 = vld [vmem:[%s518] ss:$2 sm:$0xff]
        %s520 = scalar_lea.vmem %s365, 336 [#allocation2]
        %v521 = vld [vmem:[%s520] ss:$2 sm:$0xff]
        %v522 = vlaneseq
        %v523 = vshrl.u32 %v522, 7
        %v524 = vsub.s32 3, %v523
        %v525 = vrot.slane %v398, %v524
        %v526 = vmul.f32 %v507, %v525
        %v527 = vmul.f32 %v509, %v525
        %v528 = vmul.f32 %v511, %v525
        %v529 = vmul.f32 %v513, %v525
        %v530 = vmul.f32 %v515, %v525
        %v531 = vmul.f32 %v517, %v525
        %v532 = vmul.f32 %v519, %v525
        %v533 = vmul.f32 %v521, %v525
        %v534 = vadd.f32 %v499, %v526
        %v535 = vadd.f32 %v500, %v527
        %v536 = vadd.f32 %v501, %v528
        %v537 = vadd.f32 %v502, %v529
        %v538 = vadd.f32 %v503, %v530
        %v539 = vadd.f32 %v504, %v531
        %v540 = vadd.f32 %v505, %v532
        %v541 = vadd.f32 %v506, %v533
        %s542 = scalar_lea.vmem %s365, 1 [#allocation2]
        %v543 = vld [vmem:[%s542] ss:$2 sm:$0xff]
        %s544 = scalar_lea.vmem %s365, 49 [#allocation2]
        %v545 = vld [vmem:[%s544] ss:$2 sm:$0xff]
        %s546 = scalar_lea.vmem %s365, 97 [#allocation2]
        %v547 = vld [vmem:[%s546] ss:$2 sm:$0xff]
        %s548 = scalar_lea.vmem %s365, 145 [#allocation2]
        %v549 = vld [vmem:[%s548] ss:$2 sm:$0xff]
        %s550 = scalar_lea.vmem %s365, 193 [#allocation2]
        %v551 = vld [vmem:[%s550] ss:$2 sm:$0xff]
        %s552 = scalar_lea.vmem %s365, 241 [#allocation2]
        %v553 = vld [vmem:[%s552] ss:$2 sm:$0xff]
        %s554 = scalar_lea.vmem %s365, 289 [#allocation2]
        %v555 = vld [vmem:[%s554] ss:$2 sm:$0xff]
        %s556 = scalar_lea.vmem %s365, 337 [#allocation2]
        %v557 = vld [vmem:[%s556] ss:$2 sm:$0xff]
        %v558 = vlaneseq
        %v559 = vshrl.u32 %v558, 7
        %v560 = vsub.s32 4, %v559
        %v561 = vrot.slane %v398, %v560
        %v562 = vmul.f32 %v543, %v561
        %v563 = vmul.f32 %v545, %v561
        %v564 = vmul.f32 %v547, %v561
        %v565 = vmul.f32 %v549, %v561
        %v566 = vmul.f32 %v551, %v561
        %v567 = vmul.f32 %v553, %v561
        %v568 = vmul.f32 %v555, %v561
        %v569 = vmul.f32 %v557, %v561
        %v570 = vadd.f32 %v534, %v562
        %v571 = vadd.f32 %v535, %v563
        %v572 = vadd.f32 %v536, %v564
        %v573 = vadd.f32 %v537, %v565
        %v574 = vadd.f32 %v538, %v566
        %v575 = vadd.f32 %v539, %v567
        %v576 = vadd.f32 %v540, %v568
        %v577 = vadd.f32 %v541, %v569
        %s578 = scalar_lea.vmem %s365, 2 [#allocation2]
        %v579 = vld [vmem:[%s578] ss:$2 sm:$0xff]
        %s580 = scalar_lea.vmem %s365, 50 [#allocation2]
        %v581 = vld [vmem:[%s580] ss:$2 sm:$0xff]
        %s582 = scalar_lea.vmem %s365, 98 [#allocation2]
        %v583 = vld [vmem:[%s582] ss:$2 sm:$0xff]
        %s584 = scalar_lea.vmem %s365, 146 [#allocation2]
        %v585 = vld [vmem:[%s584] ss:$2 sm:$0xff]
        %s586 = scalar_lea.vmem %s365, 194 [#allocation2]
        %v587 = vld [vmem:[%s586] ss:$2 sm:$0xff]
        %s588 = scalar_lea.vmem %s365, 242 [#allocation2]
        %v589 = vld [vmem:[%s588] ss:$2 sm:$0xff]
        %s590 = scalar_lea.vmem %s365, 290 [#allocation2]
        %v591 = vld [vmem:[%s590] ss:$2 sm:$0xff]
        %s592 = scalar_lea.vmem %s365, 338 [#allocation2]
        %v593 = vld [vmem:[%s592] ss:$2 sm:$0xff]
        %v594 = vlaneseq
        %v595 = vshrl.u32 %v594, 7
        %v596 = vsub.s32 5, %v595
        %v597 = vrot.slane %v398, %v596
        %v598 = vmul.f32 %v579, %v597
        %v599 = vmul.f32 %v581, %v597
        %v600 = vmul.f32 %v583, %v597
        %v601 = vmul.f32 %v585, %v597
        %v602 = vmul.f32 %v587, %v597
        %v603 = vmul.f32 %v589, %v597
        %v604 = vmul.f32 %v591, %v597
        %v605 = vmul.f32 %v593, %v597
        %v606 = vadd.f32 %v570, %v598
        %v607 = vadd.f32 %v571, %v599
        %v608 = vadd.f32 %v572, %v600
        %v609 = vadd.f32 %v573, %v601
        %v610 = vadd.f32 %v574, %v602
        %v611 = vadd.f32 %v575, %v603
        %v612 = vadd.f32 %v576, %v604
        %v613 = vadd.f32 %v577, %v605
        %s614 = scalar_lea.vmem [#allocation2], 48
        %v615 = vld [vmem:[%s614] ss:$2 sm:$0xff]
        %s616 = scalar_lea.vmem %s614, 48 [#allocation2]
        %v617 = vld [vmem:[%s616] ss:$2 sm:$0xff]
        %s618 = scalar_lea.vmem %s614, 96 [#allocation2]
        %v619 = vld [vmem:[%s618] ss:$2 sm:$0xff]
        %s620 = scalar_lea.vmem %s614, 144 [#allocation2]
        %v621 = vld [vmem:[%s620] ss:$2 sm:$0xff]
        %s622 = scalar_lea.vmem %s614, 192 [#allocation2]
        %v623 = vld [vmem:[%s622] ss:$2 sm:$0xff]
        %s624 = scalar_lea.vmem %s614, 240 [#allocation2]
        %v625 = vld [vmem:[%s624] ss:$2 sm:$0xff]
        %s626 = scalar_lea.vmem %s614, 288 [#allocation2]
        %v627 = vld [vmem:[%s626] ss:$2 sm:$0xff]
        %s628 = scalar_lea.vmem %s614, 336 [#allocation2]
        %v629 = vld [vmem:[%s628] ss:$2 sm:$0xff]
        %v630 = vlaneseq
        %v631 = vshrl.u32 %v630, 7
        %v632 = vsub.s32 6, %v631
        %v633 = vrot.slane %v398, %v632
        %v634 = vmul.f32 %v615, %v633
        %v635 = vmul.f32 %v617, %v633
        %v636 = vmul.f32 %v619, %v633
        %v637 = vmul.f32 %v621, %v633
        %v638 = vmul.f32 %v623, %v633
        %v639 = vmul.f32 %v625, %v633
        %v640 = vmul.f32 %v627, %v633
        %v641 = vmul.f32 %v629, %v633
        %v642 = vadd.f32 %v606, %v634
        %v643 = vadd.f32 %v607, %v635
        %v644 = vadd.f32 %v608, %v636
        %v645 = vadd.f32 %v609, %v637
        %v646 = vadd.f32 %v610, %v638
        %v647 = vadd.f32 %v611, %v639
        %v648 = vadd.f32 %v612, %v640
        %v649 = vadd.f32 %v613, %v641
        %s650 = scalar_lea.vmem %s614, 1 [#allocation2]
        %v651 = vld [vmem:[%s650] ss:$2 sm:$0xff]
        %s652 = scalar_lea.vmem %s614, 49 [#allocation2]
        %v653 = vld [vmem:[%s652] ss:$2 sm:$0xff]
        %s654 = scalar_lea.vmem %s614, 97 [#allocation2]
        %v655 = vld [vmem:[%s654] ss:$2 sm:$0xff]
        %s656 = scalar_lea.vmem %s614, 145 [#allocation2]
        %v657 = vld [vmem:[%s656] ss:$2 sm:$0xff]
        %s658 = scalar_lea.vmem %s614, 193 [#allocation2]
        %v659 = vld [vmem:[%s658] ss:$2 sm:$0xff]
        %s660 = scalar_lea.vmem %s614, 241 [#allocation2]
        %v661 = vld [vmem:[%s660] ss:$2 sm:$0xff]
        %s662 = scalar_lea.vmem %s614, 289 [#allocation2]
        %v663 = vld [vmem:[%s662] ss:$2 sm:$0xff]
        %s664 = scalar_lea.vmem %s614, 337 [#allocation2]
        %v665 = vld [vmem:[%s664] ss:$2 sm:$0xff]
        %v666 = vlaneseq
        %v667 = vshrl.u32 %v666, 7
        %v668 = vsub.s32 7, %v667
        %v669 = vrot.slane %v398, %v668
        %v670 = vmul.f32 %v651, %v669
        %v671 = vmul.f32 %v653, %v669
        %v672 = vmul.f32 %v655, %v669
        %v673 = vmul.f32 %v657, %v669
        %v674 = vmul.f32 %v659, %v669
        %v675 = vmul.f32 %v661, %v669
        %v676 = vmul.f32 %v663, %v669
        %v677 = vmul.f32 %v665, %v669
        %v678 = vadd.f32 %v642, %v670
        %v679 = vadd.f32 %v643, %v671
        %v680 = vadd.f32 %v644, %v672
        %v681 = vadd.f32 %v645, %v673
        %v682 = vadd.f32 %v646, %v674
        %v683 = vadd.f32 %v647, %v675
        %v684 = vadd.f32 %v648, %v676
        %v685 = vadd.f32 %v649, %v677
        %s686 = scalar_lea.vmem %s614, 2 [#allocation2]
        %v687 = vld [vmem:[%s686] ss:$2 sm:$0xff]
        %s688 = scalar_lea.vmem %s614, 50 [#allocation2]
        %v689 = vld [vmem:[%s688] ss:$2 sm:$0xff]
        %s690 = scalar_lea.vmem %s614, 98 [#allocation2]
        %v691 = vld [vmem:[%s690] ss:$2 sm:$0xff]
        %s692 = scalar_lea.vmem %s614, 146 [#allocation2]
        %v693 = vld [vmem:[%s692] ss:$2 sm:$0xff]
        %s694 = scalar_lea.vmem %s614, 194 [#allocation2]
        %v695 = vld [vmem:[%s694] ss:$2 sm:$0xff]
        %s696 = scalar_lea.vmem %s614, 242 [#allocation2]
        %v697 = vld [vmem:[%s696] ss:$2 sm:$0xff]
        %s698 = scalar_lea.vmem %s614, 290 [#allocation2]
        %v699 = vld [vmem:[%s698] ss:$2 sm:$0xff]
        %s700 = scalar_lea.vmem %s614, 338 [#allocation2]
        %v701 = vld [vmem:[%s700] ss:$2 sm:$0xff]
        %v702 = vlaneseq
        %v703 = vshrl.u32 %v702, 7
        %v704 = vsub.s32 0, %v703
        %v705 = vrot.slane %v399, %v704
        %v706 = vmul.f32 %v687, %v705
        %v707 = vmul.f32 %v689, %v705
        %v708 = vmul.f32 %v691, %v705
        %v709 = vmul.f32 %v693, %v705
        %v710 = vmul.f32 %v695, %v705
        %v711 = vmul.f32 %v697, %v705
        %v712 = vmul.f32 %v699, %v705
        %v713 = vmul.f32 %v701, %v705
        %v714 = vadd.f32 %v678, %v706
        %v715 = vadd.f32 %v679, %v707
        %v716 = vadd.f32 %v680, %v708
        %v717 = vadd.f32 %v681, %v709
        %v718 = vadd.f32 %v682, %v710
        %v719 = vadd.f32 %v683, %v711
        %v720 = vadd.f32 %v684, %v712
        %v721 = vadd.f32 %v685, %v713
        %v722 = vld [vmem:[%s2] sm:$0x1]
        %v724 = vlaneseq
        %v725 = vshrl.u32 %v724, 7
        %v726 = vsub.s32 0, %v725
        %v727 = vrot.slane %v722, %v726
        %v729 = vmul.f32 %v714, %v727
        %v730 = vmul.f32 %v715, %v727
        %v731 = vmul.f32 %v716, %v727
        %v732 = vmul.f32 %v717, %v727
        %v733 = vmul.f32 %v718, %v727
        %v734 = vmul.f32 %v719, %v727
        %v735 = vmul.f32 %v720, %v727
        %v736 = vmul.f32 %v721, %v727
        %v737 = vld [vmem:[%s3] sm:$0x1]
        %v739 = vlaneseq
        %v740 = vshrl.u32 %v739, 7
        %v741 = vsub.s32 0, %v740
        %v742 = vrot.slane %v737, %v741
        %v744 = vadd.f32 %v729, %v742
        %v745 = vadd.f32 %v730, %v742
        %v746 = vadd.f32 %v731, %v742
        %v747 = vadd.f32 %v732, %v742
        %v748 = vadd.f32 %v733, %v742
        %v749 = vadd.f32 %v734, %v742
        %v750 = vadd.f32 %v735, %v742
        %v751 = vadd.f32 %v736, %v742
        %v752 = vmax.f32 %v744, 0.0
        %v753 = vmax.f32 %v745, 0.0
        %v754 = vmax.f32 %v746, 0.0
        %v755 = vmax.f32 %v747, 0.0
        %v756 = vmax.f32 %v748, 0.0
        %v757 = vmax.f32 %v749, 0.0
        %v758 = vmax.f32 %v750, 0.0
        %v759 = vmax.f32 %v751, 0.0
        %v760 = vpack.c.bf16 %v753, %v752
        %v761 = vpack.c.bf16 %v755, %v754
        %v762 = vpack.c.bf16 %v757, %v756
        %v763 = vpack.c.bf16 %v759, %v758
        %v764 = vld [vmem:[%s4] sm:$0xf]
        %v765 = vld [vmem:[%s4 + $0x4] sm:$0xf]
        %v766 = vld [vmem:[%s4 + $0x8] sm:$0xf]
        %v767 = vld [vmem:[%s4 + $0xc] sm:$0xf]
        %v768 = vld [vmem:[%s4 + $0x10] sm:$0xf]
        %v769 = vld [vmem:[%s4 + $0x14] sm:$0xf]
        %v770 = vld [vmem:[%s4 + $0x18] sm:$0xf]
        %v771 = vld [vmem:[%s4 + $0x1c] sm:$0xf]
        %v780 = vunpack.c.l.b16 %v764
        %v781 = vunpack.c.l.b16 %v765
        %v782 = vunpack.c.l.b16 %v766
        %v783 = vunpack.c.l.b16 %v767
        %v784 = vunpack.c.l.b16 %v768
        %v785 = vunpack.c.l.b16 %v769
        %v786 = vunpack.c.l.b16 %v770
        %v787 = vunpack.c.l.b16 %v771
        %v788 = vpack.c.b16 %v781, %v780
        %v789 = vpack.c.b16 %v783, %v782
        %v790 = vpack.c.b16 %v785, %v784
        %v791 = vpack.c.b16 %v787, %v786
        %v797 = vsel %vm278, %v760, 0
        %v800 = vsel %vm278, %v761, 0
        %v803 = vsel %vm278, %v762, 0
        %v806 = vsel %vm278, %v763, 0
        %808 = vmatprep.subr.bf16.mxu0 0
        %809 = vmatpush1.bf16.msra.mxu0 %v788
        %810 = vmatprep.subr.bf16.mxu0 0
        %811 = vmatpush1.bf16.msra.mxu0 %v789
        %812 = vmatprep.subr.bf16.mxu0 0
        %813 = vmatpush1.bf16.msra.mxu0 %v790
        %814 = vmatprep.subr.bf16.mxu0 0
        %815 = vmatpush1.bf16.msra.mxu0 %v791
        %816 = vmatprep.subr.bf16.mxu0 0
        %817 = vmatpush1.bf16.msra.mxu0 0
        %818 = vmatprep.subr.bf16.mxu0 0
        %819 = vmatpush1.bf16.msra.mxu0 0
        %820 = vmatprep.subr.bf16.mxu0 0
        %821 = vmatpush1.bf16.msra.mxu0 0
        %822 = vmatprep.subr.bf16.mxu0 0
        %823 = vmatpush1.bf16.msra.mxu0 0
        %824 = vmatprep.subr.bf16.mxu0 0
        %825 = vmatpush1.bf16.msra.mxu0 0
        %826 = vmatprep.subr.bf16.mxu0 0
        %827 = vmatpush1.bf16.msra.mxu0 0
        %828 = vmatprep.subr.bf16.mxu0 0
        %829 = vmatpush1.bf16.msra.mxu0 0
        %830 = vmatprep.subr.bf16.mxu0 0
        %831 = vmatpush1.bf16.msra.mxu0 0
        %832 = vmatprep.subr.bf16.mxu0 0
        %833 = vmatpush1.bf16.msra.mxu0 0
        %834 = vmatprep.subr.bf16.mxu0 0
        %835 = vmatpush1.bf16.msra.mxu0 0
        %836 = vmatprep.subr.bf16.mxu0 0
        %837 = vmatpush1.bf16.msra.mxu0 0
        %838 = vmatprep.subr.bf16.mxu0 0
        %839 = vmatpush1.bf16.msra.mxu0 0
        %840 = vmatprep.mubr.bf16.mxu0 0
        %841 = vmatmul.mubr.bf16.gmra.mrb[0].mxu0 %v797
        %v842 = vpop.f32.mrb[0].mxu0
        %v843 = vadd.f32 0.0, %v842
        %v844 = vpop.f32.mrb[0].mxu0
        %v845 = vpop.f32.mrb[0].mxu0
        %v846 = vadd.f32 0.0, %v845
        %v847 = vpop.f32.mrb[0].mxu0
        %848 = vmatprep.mubr.bf16.mxu0 0
        %849 = vmatmul.mubr.bf16.gmra.mrb[0].mxu0 %v800
        %v850 = vpop.f32.mrb[0].mxu0
        %v851 = vadd.f32 0.0, %v850
        %v852 = vpop.f32.mrb[0].mxu0
        %v853 = vpop.f32.mrb[0].mxu0
        %v854 = vadd.f32 0.0, %v853
        %v855 = vpop.f32.mrb[0].mxu0
        %856 = vmatprep.mubr.bf16.mxu0 0
        %857 = vmatmul.mubr.bf16.gmra.mrb[0].mxu0 %v803
        %v858 = vpop.f32.mrb[0].mxu0
        %v859 = vadd.f32 0.0, %v858
        %v860 = vpop.f32.mrb[0].mxu0
        %v861 = vpop.f32.mrb[0].mxu0
        %v862 = vadd.f32 0.0, %v861
        %v863 = vpop.f32.mrb[0].mxu0
        %864 = vmatprep.mubr.bf16.mxu0 0
        %865 = vmatmul.mubr.bf16.gmra.mrb[0].mxu0 %v806
        %v866 = vpop.f32.mrb[0].mxu0
        %v867 = vadd.f32 0.0, %v866
        %v868 = vpop.f32.mrb[0].mxu0
        %v869 = vpop.f32.mrb[0].mxu0
        %v870 = vadd.f32 0.0, %v869
        %v871 = vpop.f32.mrb[0].mxu0
        %872 = vdwg.mxu0
        %v873 = vld [vmem:[%s5] sm:$0x1]
        %v875 = vlaneseq
        %v876 = vshrl.u32 %v875, 7
        %v877 = vsub.s32 0, %v876
        %v878 = vrot.slane %v873, %v877
        %v880 = vmul.f32 %v843, %v878
        %v881 = vmul.f32 %v846, %v878
        %v882 = vmul.f32 %v851, %v878
        %v883 = vmul.f32 %v854, %v878
        %v884 = vmul.f32 %v859, %v878
        %v885 = vmul.f32 %v862, %v878
        %v886 = vmul.f32 %v867, %v878
        %v887 = vmul.f32 %v870, %v878
        %v888 = vld [vmem:[%s6] sm:$0x1]
        %v890 = vlaneseq
        %v891 = vshrl.u32 %v890, 7
        %v892 = vsub.s32 0, %v891
        %v893 = vrot.slane %v888, %v892
        %v895 = vadd.f32 %v880, %v893
        %v896 = vadd.f32 %v881, %v893
        %v897 = vadd.f32 %v882, %v893
        %v898 = vadd.f32 %v883, %v893
        %v899 = vadd.f32 %v884, %v893
        %v900 = vadd.f32 %v885, %v893
        %v901 = vadd.f32 %v886, %v893
        %v902 = vadd.f32 %v887, %v893
        %v903 = vmax.f32 %v895, 0.0
        %v904 = vmax.f32 %v896, 0.0
        %v905 = vmax.f32 %v897, 0.0
        %v906 = vmax.f32 %v898, 0.0
        %v907 = vmax.f32 %v899, 0.0
        %v908 = vmax.f32 %v900, 0.0
        %v909 = vmax.f32 %v901, 0.0
        %v910 = vmax.f32 %v902, 0.0
        %911 = vst [vmem:[%s271] sm:$0xff] %v903
        %912 = vst [vmem:[%s271 + $0x8] sm:$0xff] %v904
        %913 = vst [vmem:[%s271 + $0x10] sm:$0xff] %v905
        %914 = vst [vmem:[%s271 + $0x18] sm:$0xff] %v906
        %915 = vst [vmem:[%s271 + $0x20] sm:$0xff] %v907
        %916 = vst [vmem:[%s271 + $0x28] sm:$0xff] %v908
        %917 = vst [vmem:[%s271 + $0x30] sm:$0xff] %v909
        %918 = vst [vmem:[%s271 + $0x38] sm:$0xff] %v910
        %s919 = sand.u32 %s181, 1
        %s920 = scalar_lea.sflag [#allocation4], %s919
        %s921 = sand.u32 %s181, 1
        %s922 = smul.addr %s921, 64
        %s923 = scalar_lea.vmem [#allocation3], %s922
        // Predicated region
        $region49: #{forward.3} parent=47 // pred_check
          %p924 = pneg %p191
        $region50: #{forward.3} parent=47 // pred_check_branch
          %926 = sbr.rel (%p924) target = $region52
        $region51: #{forward.3} parent=47 // pred_region
          %s928 = ssub.s32 1024, 1024
          %929 = vsyncadd %s920, %s928
          %s930 = smul.addr %s21, 8
          %s931 = smul.addr %s930, 128
          %s932 = scalar_lea.hbm %s7, %s931
          %s933 = sshll.u32 %s923, 4
          %s934 = int_to_ptr.vmem [resolvable:$true] %s933
          %939 = dma.vmem_to_hbm [thread:$0]  %s934, 1024, %s932, %s920, 128, 128, 8
        $region52: #{forward.3} parent=47 // pred_fallthru
          _
      $region48: #{forward.3} parent=5 // pred_fallthru
        _
      %p940 = scmp.le.s32.totalorder 2, %s16
      // Predicated region
      $region53: #{forward.3} parent=5 // pred_check
        %p941 = pneg %p940
      $region54: #{forward.3} parent=5 // pred_check_branch
        %943 = sbr.rel (%p941) target = $region56
      $region55: #{forward.3} parent=5 // pred_region
        %s944 = ssub.s32 %s16, 2
        // Predicated region
        $region57: #{forward.3} parent=55 // pred_check
          %p945 = pneg %p197
        $region58: #{forward.3} parent=55 // pred_check_branch
          %947 = sbr.rel (%p945) target = $region60
        $region59: #{forward.3} parent=55 // pred_region
          %s948 = sand.u32 %s182, 1
          %s949 = scalar_lea.sflag [#allocation4], %s948
          %s950 = sand.u32 %s182, 1
          %s951 = smul.addr %s950, 64
          %s952 = scalar_lea.vmem [#allocation3], %s951
          %953 = dma.done %s949, 1024
        $region60: #{forward.3} parent=55 // pred_fallthru
          _
      $region56: #{forward.3} parent=5 // pred_fallthru
        _
    $region6: #{forward.3} parent=1 // loop_footer
      %s20 = sadd.s32 1, %s16
    $region7: #{forward.3} parent=1 // loop_footer_branch
      %15 = sbr.rel target = $region3
    $region8: #{forward.3} parent=1 // loop_exit
      _
    %954 = vsyncpa [#allocation4], 1
    %s955 = scalar_lea.sflag [#allocation4], 1
    %956 = vsyncpa %s955, 1

// kernel: forward.2
$region0: #{forward.2}
  #allocation0 [shape = 'u32[]', space=smem, size = 0x4, offset = 0x4, fixed_abs, tag = 'smem constant byte address 0x4 - core index']
  #allocation1 [shape = 'u32[144,128]{1,0:T(1,128)}', space=vmem, size = 0x12000, scoped, tag = 'internal scratch']
  #allocation2 [shape = 'f32[18,24,32]{2,1,0:T(8,128)}', space=vmem, size = 0x36000, scoped, tag = 'scratch operand']
  %s0 = inlined_call_operand.hbm [shape: f32[2,16,16,32], index: 0, kind: input, shape index: {}]
  %s1 = inlined_call_operand.vmem [shape: f32[9,32], index: 1, kind: input, shape index: {}]
  %s2 = inlined_call_operand.vmem [shape: f32[1,32], index: 2, kind: input, shape index: {}]
  %s3 = inlined_call_operand.vmem [shape: f32[1,32], index: 3, kind: input, shape index: {}]
  %s4 = inlined_call_operand.vmem [shape: bf16[32,64], index: 4, kind: input, shape index: {}]
  %s5 = inlined_call_operand.vmem [shape: f32[1,64], index: 5, kind: input, shape index: {}]
  %s6 = inlined_call_operand.hbm [shape: f32[1,64], index: 6, kind: input, shape index: {}]
  %s7 = inlined_call_operand.vmem [shape: f32[2,16,16,64], index: 7, kind: output, shape index: {}]
  %s8 = sld [smem:[#allocation0]]
  $region69: #{forward.2} parent=0
    _
  %s10 = ssub.s32 1, %s8
  %s11 = scalar_select 0, %s10, %s8
  $region1: #{forward.2} parent=0
    #allocation3 [shape = 'u8[262144]{0}', space=vmem, size = 0x40000, scoped, tag = 'input window, operand 0']
    #allocation4 [shape = 's32[2]{0}', space=sflag, size = 0x8, scoped, tag = 'scoped memory for forward.2']
    #allocation5 [shape = 'u8[512]{0}', space=vmem, size = 0x400, scoped, tag = 'input window, operand 6, single buffered']
    #allocation6 [shape = 's32[1]{0}', space=sflag, size = 0x4, scoped, tag = 'scoped memory for forward.2']
    %12 = vsyncpa [#allocation4], 0
    %s13 = scalar_lea.sflag [#allocation4], 1
    %14 = vsyncpa %s13, 0
    %15 = vsyncpa [#allocation6], 0
    loop: start=0, step=1, limit=4
    $region2: #{forward.2} parent=1 // loop_pre_header
      _
    $region3: #{forward.2} parent=1 // loop_header
      %s17 = sphi 0, %s21
      %p18 = scmp.ge.s32.totalorder %s17, 4
      %s27 = sphi 0, %s29
      %s30 = sphi 0, %s27
      %s31 = sphi 0, %s30
      %s47 = sphi 0, %s31
      %s51 = sphi 0, %s51
      %s53 = sphi 0, %s51
      %s54 = sphi 0, %s53
      %s68 = sphi 0, %s54
      %s72 = sphi 0, %s72
      %s74 = sphi 0, %s72
      %s75 = sphi 0, %s74
      %s89 = sphi 0, %s75
      %s93 = sphi 0, %s93
      %s95 = sphi 0, %s93
      %s96 = sphi 0, %s95
      %s110 = sphi 0, %s96
      %s114 = sphi 0, %s114
      %s116 = sphi 0, %s114
      %s117 = sphi 0, %s116
      %s131 = sphi 0, %s117
      %s135 = sphi 0, %s135
      %s137 = sphi 0, %s135
      %s138 = sphi 0, %s137
      %s152 = sphi 0, %s138
      %s156 = sphi 0, %s156
      %s158 = sphi 0, %s156
      %s159 = sphi 0, %s158
      %s173 = sphi 0, %s159
      %s179 = sphi 0, %s181
      %s182 = sphi 0, %s179
      %s183 = sphi 0, %s182
      %s199 = sphi 0, %s183
    $region4: #{forward.2} parent=1 // loop_header_branch
      %20 = sbr.rel (%p18) target = $region8
    $region5: #{forward.2} parent=1 // loop_body
      %s22 = ssub.s32 %s17, 1
      %s23 = ssub.s32 %s17, 2
      %s24 = sadd.s32 %s17, 1
      %s25 = ssub.s32 %s17, %s24
      %p26 = scmp.eq.s32.totalorder %s25, 0
      %s28 = sadd.s32 %s27, 1
      %s29 = scalar_select %p26, %s27, %s28
      %p32 = pneg %p26
      %p33 = scmp.eq.s32.totalorder %s17, 1
      %p34 = por %p32, %p33
      %p35 = scmp.ne.s32.totalorder %s27, %s30
      %p36 = scmp.eq.s32.totalorder %s17, 0
      %p37 = por %p35, %p36
      %p38 = scmp.ne.s32.totalorder %s27, %s30
      %p39 = scmp.eq.s32.totalorder %s22, 1
      %p40 = por %p38, %p39
      %p41 = scmp.ne.s32.totalorder %s30, %s31
      %p42 = scmp.eq.s32.totalorder %s22, 0
      %p43 = por %p41, %p42
      %p44 = scmp.ne.s32.totalorder %s30, %s31
      %p45 = scmp.eq.s32.totalorder %s23, 1
      %p46 = por %p44, %p45
      %p48 = scmp.ne.s32.totalorder %s31, %s47
      %p49 = scmp.eq.s32.totalorder %s23, 0
      %p50 = por %p48, %p49
      %s52 = sadd.s32 %s51, 1
      %p55 = scmp.eq.s32.totalorder %s17, 1
      %p56 = scmp.ne.s32.totalorder %s51, %s53
      %p57 = scmp.eq.s32.totalorder %s17, 0
      %p58 = por %p56, %p57
      %p59 = scmp.ne.s32.totalorder %s51, %s53
      %p60 = scmp.eq.s32.totalorder %s22, 1
      %p61 = por %p59, %p60
      %p62 = scmp.ne.s32.totalorder %s53, %s54
      %p63 = scmp.eq.s32.totalorder %s22, 0
      %p64 = por %p62, %p63
      %p65 = scmp.ne.s32.totalorder %s53, %s54
      %p66 = scmp.eq.s32.totalorder %s23, 1
      %p67 = por %p65, %p66
      %p69 = scmp.ne.s32.totalorder %s54, %s68
      %p70 = scmp.eq.s32.totalorder %s23, 0
      %p71 = por %p69, %p70
      %s73 = sadd.s32 %s72, 1
      %p76 = scmp.eq.s32.totalorder %s17, 1
      %p77 = scmp.ne.s32.totalorder %s72, %s74
      %p78 = scmp.eq.s32.totalorder %s17, 0
      %p79 = por %p77, %p78
      %p80 = scmp.ne.s32.totalorder %s72, %s74
      %p81 = scmp.eq.s32.totalorder %s22, 1
      %p82 = por %p80, %p81
      %p83 = scmp.ne.s32.totalorder %s74, %s75
      %p84 = scmp.eq.s32.totalorder %s22, 0
      %p85 = por %p83, %p84
      %p86 = scmp.ne.s32.totalorder %s74, %s75
      %p87 = scmp.eq.s32.totalorder %s23, 1
      %p88 = por %p86, %p87
      %p90 = scmp.ne.s32.totalorder %s75, %s89
      %p91 = scmp.eq.s32.totalorder %s23, 0
      %p92 = por %p90, %p91
      %s94 = sadd.s32 %s93, 1
      %p97 = scmp.eq.s32.totalorder %s17, 1
      %p98 = scmp.ne.s32.totalorder %s93, %s95
      %p99 = scmp.eq.s32.totalorder %s17, 0
      %p100 = por %p98, %p99
      %p101 = scmp.ne.s32.totalorder %s93, %s95
      %p102 = scmp.eq.s32.totalorder %s22, 1
      %p103 = por %p101, %p102
      %p104 = scmp.ne.s32.totalorder %s95, %s96
      %p105 = scmp.eq.s32.totalorder %s22, 0
      %p106 = por %p104, %p105
      %p107 = scmp.ne.s32.totalorder %s95, %s96
      %p108 = scmp.eq.s32.totalorder %s23, 1
      %p109 = por %p107, %p108
      %p111 = scmp.ne.s32.totalorder %s96, %s110
      %p112 = scmp.eq.s32.totalorder %s23, 0
      %p113 = por %p111, %p112
      %s115 = sadd.s32 %s114, 1
      %p118 = scmp.eq.s32.totalorder %s17, 1
      %p119 = scmp.ne.s32.totalorder %s114, %s116
      %p120 = scmp.eq.s32.totalorder %s17, 0
      %p121 = por %p119, %p120
      %p122 = scmp.ne.s32.totalorder %s114, %s116
      %p123 = scmp.eq.s32.totalorder %s22, 1
      %p124 = por %p122, %p123
      %p125 = scmp.ne.s32.totalorder %s116, %s117
      %p126 = scmp.eq.s32.totalorder %s22, 0
      %p127 = por %p125, %p126
      %p128 = scmp.ne.s32.totalorder %s116, %s117
      %p129 = scmp.eq.s32.totalorder %s23, 1
      %p130 = por %p128, %p129
      %p132 = scmp.ne.s32.totalorder %s117, %s131
      %p133 = scmp.eq.s32.totalorder %s23, 0
      %p134 = por %p132, %p133
      %s136 = sadd.s32 %s135, 1
      %p139 = scmp.eq.s32.totalorder %s17, 1
      %p140 = scmp.ne.s32.totalorder %s135, %s137
      %p141 = scmp.eq.s32.totalorder %s17, 0
      %p142 = por %p140, %p141
      %p143 = scmp.ne.s32.totalorder %s135, %s137
      %p144 = scmp.eq.s32.totalorder %s22, 1
      %p145 = por %p143, %p144
      %p146 = scmp.ne.s32.totalorder %s137, %s138
      %p147 = scmp.eq.s32.totalorder %s22, 0
      %p148 = por %p146, %p147
      %p149 = scmp.ne.s32.totalorder %s137, %s138
      %p150 = scmp.eq.s32.totalorder %s23, 1
      %p151 = por %p149, %p150
      %p153 = scmp.ne.s32.totalorder %s138, %s152
      %p154 = scmp.eq.s32.totalorder %s23, 0
      %p155 = por %p153, %p154
      %s157 = sadd.s32 %s156, 1
      %p160 = scmp.eq.s32.totalorder %s17, 1
      %p161 = scmp.ne.s32.totalorder %s156, %s158
      %p162 = scmp.eq.s32.totalorder %s17, 0
      %p163 = por %p161, %p162
      %p164 = scmp.ne.s32.totalorder %s156, %s158
      %p165 = scmp.eq.s32.totalorder %s22, 1
      %p166 = por %p164, %p165
      %p167 = scmp.ne.s32.totalorder %s158, %s159
      %p168 = scmp.eq.s32.totalorder %s22, 0
      %p169 = por %p167, %p168
      %p170 = scmp.ne.s32.totalorder %s158, %s159
      %p171 = scmp.eq.s32.totalorder %s23, 1
      %p172 = por %p170, %p171
      %p174 = scmp.ne.s32.totalorder %s159, %s173
      %p175 = scmp.eq.s32.totalorder %s23, 0
      %p176 = por %p174, %p175
      %s177 = ssub.s32 %s17, %s24
      %p178 = scmp.eq.s32.totalorder %s177, 0
      %s180 = sadd.s32 %s179, 1
      %s181 = scalar_select %p178, %s179, %s180
      %p184 = pneg %p178
      %p185 = scmp.eq.s32.totalorder %s17, 1
      %p186 = por %p184, %p185
      %p187 = scmp.ne.s32.totalorder %s179, %s182
      %p188 = scmp.eq.s32.totalorder %s17, 0
      %p189 = por %p187, %p188
      %p190 = scmp.ne.s32.totalorder %s179, %s182
      %p191 = scmp.eq.s32.totalorder %s22, 1
      %p192 = por %p190, %p191
      %p193 = scmp.ne.s32.totalorder %s182, %s183
      %p194 = scmp.eq.s32.totalorder %s22, 0
      %p195 = por %p193, %p194
      %p196 = scmp.ne.s32.totalorder %s182, %s183
      %p197 = scmp.eq.s32.totalorder %s23, 1
      %p198 = por %p196, %p197
      %p200 = scmp.ne.s32.totalorder %s183, %s199
      %p201 = scmp.eq.s32.totalorder %s23, 0
      %p202 = por %p200, %p201
      %p203 = scmp.le.s32.totalorder 1, %s17
      %p204 = scmp.lt.s32.totalorder %s17, 3
      %p205 = pnand %p203, %p204
      %p206 = pneg %p205
      // Predicated region
      $region9: #{forward.2} parent=5 // pred_check
        _
      $region10: #{forward.2} parent=5 // pred_check_branch
        %208 = sbr.rel (%p205) target = $region12
      $region11: #{forward.2} parent=5 // pred_region
        %s209 = ssub.s32 %s17, 1
        // Predicated region
        $region13: #{forward.2} parent=11 // pred_check
          %p210 = pneg %p64
        $region14: #{forward.2} parent=11 // pred_check_branch
          %212 = sbr.rel (%p210) target = $region16
        $region15: #{forward.2} parent=11 // pred_region
          _
        $region16: #{forward.2} parent=11 // pred_fallthru
          _
        // Predicated region
        $region17: #{forward.2} parent=11 // pred_check
          %p213 = pneg %p85
        $region18: #{forward.2} parent=11 // pred_check_branch
          %215 = sbr.rel (%p213) target = $region20
        $region19: #{forward.2} parent=11 // pred_region
          _
        $region20: #{forward.2} parent=11 // pred_fallthru
          _
        // Predicated region
        $region21: #{forward.2} parent=11 // pred_check
          %p216 = pneg %p106
        $region22: #{forward.2} parent=11 // pred_check_branch
          %218 = sbr.rel (%p216) target = $region24
        $region23: #{forward.2} parent=11 // pred_region
          _
        $region24: #{forward.2} parent=11 // pred_fallthru
          _
        // Predicated region
        $region25: #{forward.2} parent=11 // pred_check
          %p219 = pneg %p127
        $region26: #{forward.2} parent=11 // pred_check_branch
          %221 = sbr.rel (%p219) target = $region28
        $region27: #{forward.2} parent=11 // pred_region
          _
        $region28: #{forward.2} parent=11 // pred_fallthru
          _
        // Predicated region
        $region29: #{forward.2} parent=11 // pred_check
          %p222 = pneg %p148
        $region30: #{forward.2} parent=11 // pred_check_branch
          %224 = sbr.rel (%p222) target = $region32
        $region31: #{forward.2} parent=11 // pred_region
          _
        $region32: #{forward.2} parent=11 // pred_fallthru
          _
        // Predicated region
        $region33: #{forward.2} parent=11 // pred_check
          %p225 = pneg %p169
        $region34: #{forward.2} parent=11 // pred_check_branch
          %227 = sbr.rel (%p225) target = $region36
        $region35: #{forward.2} parent=11 // pred_region
          %s229 = ssub.s32 16, 16
          %230 = vsyncadd [#allocation6], %s229
          %s232 = sshll.u32 [#allocation5], 4
          %s233 = int_to_ptr.vmem [resolvable:$true] %s232
          %235 = dma.hbm_to_vmem [thread:$0]  %s6, 16, %s233, [#allocation6]
        $region36: #{forward.2} parent=11 // pred_fallthru
          _
      $region12: #{forward.2} parent=5 // pred_fallthru
        _
      %p236 = scmp.lt.s32.totalorder %s17, 2
      // Predicated region
      $region37: #{forward.2} parent=5 // pred_check
        %p237 = pneg %p236
      $region38: #{forward.2} parent=5 // pred_check_branch
        %239 = sbr.rel (%p237) target = $region40
      $region39: #{forward.2} parent=5 // pred_region
        // Predicated region
        $region41: #{forward.2} parent=39 // pred_check
          %p240 = pneg %p37
        $region42: #{forward.2} parent=39 // pred_check_branch
          %242 = sbr.rel (%p240) target = $region44
        $region43: #{forward.2} parent=39 // pred_region
          %s243 = sand.u32 %s27, 1
          %s244 = scalar_lea.sflag [#allocation4], %s243
          %s245 = sand.u32 %s27, 1
          %s246 = smul.addr %s245, 256
          %s247 = scalar_lea.vmem [#allocation3], %s246
          %s249 = ssub.s32 4096, 4096
          %250 = vsyncadd %s244, %s249
          %s251 = smul.addr %s17, 32
          %s252 = smul.addr %s251, 128
          %s253 = scalar_lea.hbm %s0, %s252
          %s254 = sshll.u32 %s247, 4
          %s255 = int_to_ptr.vmem [resolvable:$true] %s254
          %260 = dma.hbm_to_vmem [thread:$0]  %s253, 4096, %s255, %s244, 128, 128, 8
        $region44: #{forward.2} parent=39 // pred_fallthru
          _
      $region40: #{forward.2} parent=5 // pred_fallthru
        _
      %p261 = scmp.le.s32.totalorder 1, %s17
      %p262 = scmp.lt.s32.totalorder %s17, 3
      %p263 = pnand %p261, %p262
      %p264 = pneg %p263
      // Predicated region
      $region45: #{forward.2} parent=5 // pred_check
        _
      $region46: #{forward.2} parent=5 // pred_check_branch
        %266 = sbr.rel (%p263) target = $region48
      $region47: #{forward.2} parent=5 // pred_region
        %s267 = ssub.s32 %s17, 1
        %s268 = sand.u32 %s30, 1
        %s269 = scalar_lea.sflag [#allocation4], %s268
        %s270 = sand.u32 %s30, 1
        %s271 = smul.addr %s270, 256
        %s272 = scalar_lea.vmem [#allocation3], %s271
        // Predicated region
        $region49: #{forward.2} parent=47 // pred_check
          %p273 = pneg %p43
        $region50: #{forward.2} parent=47 // pred_check_branch
          %275 = sbr.rel (%p273) target = $region52
        $region51: #{forward.2} parent=47 // pred_region
          %276 = dma.done %s269, 4096
        $region52: #{forward.2} parent=47 // pred_fallthru
          _
        // Predicated region
        $region53: #{forward.2} parent=47 // pred_check
          %p277 = pneg %p169
        $region54: #{forward.2} parent=47 // pred_check_branch
          %279 = sbr.rel (%p277) target = $region56
        $region55: #{forward.2} parent=47 // pred_region
          %280 = dma.done [#allocation6], 16
        $region56: #{forward.2} parent=47 // pred_fallthru
          _
        %s281 = sand.u32 %s30, 1
        %s282 = scalar_lea.sflag [#allocation4], %s281
        %s283 = sand.u32 %s30, 1
        %s284 = smul.addr %s283, 256
        %s285 = scalar_lea.vmem [#allocation3], %s284
        %p286 = pneg %p43
        %p287 = pneg %p40
        %p288 = pneg %p64
        %p289 = pneg %p61
        %p290 = pneg %p85
        %p291 = pneg %p82
        %p292 = pneg %p106
        %p293 = pneg %p103
        %p294 = pneg %p127
        %p295 = pneg %p124
        %p296 = pneg %p148
        %p297 = pneg %p145
        %p298 = pneg %p169
        %p299 = pneg %p166
        %p300 = pneg %p195
        %p301 = pneg %p192
        %p302 = scmp.lt.s32.totalorder %s22, 1
        %s303 = scalar_select %p302, %s22, 1
        %s304 = smul.addr %s303, 32
        %s305 = smul.addr %s304, 8
        %s306 = scalar_lea.vmem %s7, %s305
        %p307 = scmp.lt.s32.totalorder %s22, 1
        %s308 = scalar_select %p307, %s22, 1
        %s309 = smul.addr %s308, 32
        %s310 = smul.addr %s309, 8
        %s311 = scalar_lea.vmem %s7, %s310
        %vm313 = vcmask 261120
        %314 = vst.msk [vmem:[#allocation2] sm:$0xff] %vm313, 0.0
        %315 = vst.msk [vmem:[#allocation2 + $0x8] sm:$0xff] %vm313, 0.0
        %316 = vst.msk [vmem:[#allocation2 + $0x10] sm:$0xff] %vm313, 0.0
        %317 = vst.msk [vmem:[#allocation2 + $0x18] sm:$0xff] %vm313, 0.0
        %318 = vst.msk [vmem:[#allocation2 + $0x20] sm:$0xff] %vm313, 0.0
        %319 = vst.msk [vmem:[#allocation2 + $0x28] sm:$0xff] %vm313, 0.0
        %320 = vst.msk [vmem:[#allocation2 + $0x30] sm:$0xff] %vm313, 0.0
        %321 = vst.msk [vmem:[#allocation2 + $0x38] sm:$0xff] %vm313, 0.0
        %322 = vst.msk [vmem:[#allocation2 + $0x40] sm:$0xff] %vm313, 0.0
        %323 = vst.msk [vmem:[#allocation2 + $0x48] sm:$0xff] %vm313, 0.0
        %324 = vst.msk [vmem:[#allocation2 + $0x50] sm:$0xff] %vm313, 0.0
        %325 = vst.msk [vmem:[#allocation2 + $0x58] sm:$0xff] %vm313, 0.0
        %326 = vst.msk [vmem:[#allocation2 + $0x60] sm:$0xff] %vm313, 0.0
        %327 = vst.msk [vmem:[#allocation2 + $0x68] sm:$0xff] %vm313, 0.0
        %328 = vst.msk [vmem:[#allocation2 + $0x70] sm:$0xff] %vm313, 0.0
        %329 = vst.msk [vmem:[#allocation2 + $0x78] sm:$0xff] %vm313, 0.0
        %330 = vst.msk [vmem:[#allocation2 + $0x80] sm:$0xff] %vm313, 0.0
        %331 = vst.msk [vmem:[#allocation2 + $0x88] sm:$0xff] %vm313, 0.0
        %332 = vst.msk [vmem:[#allocation2 + $0x90] sm:$0xff] %vm313, 0.0
        %333 = vst.msk [vmem:[#allocation2 + $0x98] sm:$0xff] %vm313, 0.0
        %334 = vst.msk [vmem:[#allocation2 + $0xa0] sm:$0xff] %vm313, 0.0
        %335 = vst.msk [vmem:[#allocation2 + $0xa8] sm:$0xff] %vm313, 0.0
        %336 = vst.msk [vmem:[#allocation2 + $0xb0] sm:$0xff] %vm313, 0.0
        %337 = vst.msk [vmem:[#allocation2 + $0xb8] sm:$0xff] %vm313, 0.0
        %338 = vst.msk [vmem:[#allocation2 + $0xc0] sm:$0xff] %vm313, 0.0
        %339 = vst.msk [vmem:[#allocation2 + $0xc8] sm:$0xff] %vm313, 0.0
        %340 = vst.msk [vmem:[#allocation2 + $0xd0] sm:$0xff] %vm313, 0.0
        %341 = vst.msk [vmem:[#allocation2 + $0xd8] sm:$0xff] %vm313, 0.0
        %342 = vst.msk [vmem:[#allocation2 + $0xe0] sm:$0xff] %vm313, 0.0
        %343 = vst.msk [vmem:[#allocation2 + $0xe8] sm:$0xff] %vm313, 0.0
        %344 = vst.msk [vmem:[#allocation2 + $0xf0] sm:$0xff] %vm313, 0.0
        %345 = vst.msk [vmem:[#allocation2 + $0xf8] sm:$0xff] %vm313, 0.0
        %346 = vst.msk [vmem:[#allocation2 + $0x100] sm:$0xff] %vm313, 0.0
        %347 = vst.msk [vmem:[#allocation2 + $0x108] sm:$0xff] %vm313, 0.0
        %348 = vst.msk [vmem:[#allocation2 + $0x110] sm:$0xff] %vm313, 0.0
        %349 = vst.msk [vmem:[#allocation2 + $0x118] sm:$0xff] %vm313, 0.0
        %350 = vst.msk [vmem:[#allocation2 + $0x120] sm:$0xff] %vm313, 0.0
        %351 = vst.msk [vmem:[#allocation2 + $0x128] sm:$0xff] %vm313, 0.0
        %352 = vst.msk [vmem:[#allocation2 + $0x130] sm:$0xff] %vm313, 0.0
        %353 = vst.msk [vmem:[#allocation2 + $0x138] sm:$0xff] %vm313, 0.0
        %354 = vst.msk [vmem:[#allocation2 + $0x140] sm:$0xff] %vm313, 0.0
        %355 = vst.msk [vmem:[#allocation2 + $0x148] sm:$0xff] %vm313, 0.0
        %356 = vst.msk [vmem:[#allocation2 + $0x150] sm:$0xff] %vm313, 0.0
        %357 = vst.msk [vmem:[#allocation2 + $0x158] sm:$0xff] %vm313, 0.0
        %358 = vst.msk [vmem:[#allocation2 + $0x160] sm:$0xff] %vm313, 0.0
        %359 = vst.msk [vmem:[#allocation2 + $0x168] sm:$0xff] %vm313, 0.0
        %360 = vst.msk [vmem:[#allocation2 + $0x170] sm:$0xff] %vm313, 0.0
        %361 = vst.msk [vmem:[#allocation2 + $0x178] sm:$0xff] %vm313, 0.0
        %362 = vst.msk [vmem:[#allocation2 + $0x180] sm:$0xff] %vm313, 0.0
        %363 = vst.msk [vmem:[#allocation2 + $0x188] sm:$0xff] %vm313, 0.0
        %364 = vst.msk [vmem:[#allocation2 + $0x190] sm:$0xff] %vm313, 0.0
        %365 = vst.msk [vmem:[#allocation2 + $0x198] sm:$0xff] %vm313, 0.0
        %366 = vst.msk [vmem:[#allocation2 + $0x1a0] sm:$0xff] %vm313, 0.0
        %367 = vst.msk [vmem:[#allocation2 + $0x1a8] sm:$0xff] %vm313, 0.0
        %v368 = vld [vmem:[%s272] sm:$0xff]
        %v369 = vld [vmem:[%s272 + $0x8] sm:$0xff]
        %v370 = vld [vmem:[%s272 + $0x10] sm:$0xff]
        %v371 = vld [vmem:[%s272 + $0x18] sm:$0xff]
        %v372 = vld [vmem:[%s272 + $0x20] sm:$0xff]
        %v373 = vld [vmem:[%s272 + $0x28] sm:$0xff]
        %v374 = vld [vmem:[%s272 + $0x30] sm:$0xff]
        %v375 = vld [vmem:[%s272 + $0x38] sm:$0xff]
        %v376 = vld [vmem:[%s272 + $0x40] sm:$0xff]
        %v377 = vld [vmem:[%s272 + $0x48] sm:$0xff]
        %v378 = vld [vmem:[%s272 + $0x50] sm:$0xff]
        %v379 = vld [vmem:[%s272 + $0x58] sm:$0xff]
        %v380 = vld [vmem:[%s272 + $0x60] sm:$0xff]
        %v381 = vld [vmem:[%s272 + $0x68] sm:$0xff]
        %v382 = vld [vmem:[%s272 + $0x70] sm:$0xff]
        %v383 = vld [vmem:[%s272 + $0x78] sm:$0xff]
        %v384 = vld [vmem:[%s272 + $0x80] sm:$0xff]
        %v385 = vld [vmem:[%s272 + $0x88] sm:$0xff]
        %v386 = vld [vmem:[%s272 + $0x90] sm:$0xff]
        %v387 = vld [vmem:[%s272 + $0x98] sm:$0xff]
        %v388 = vld [vmem:[%s272 + $0xa0] sm:$0xff]
        %v389 = vld [vmem:[%s272 + $0xa8] sm:$0xff]
        %v390 = vld [vmem:[%s272 + $0xb0] sm:$0xff]
        %v391 = vld [vmem:[%s272 + $0xb8] sm:$0xff]
        %v392 = vld [vmem:[%s272 + $0xc0] sm:$0xff]
        %v393 = vld [vmem:[%s272 + $0xc8] sm:$0xff]
        %v394 = vld [vmem:[%s272 + $0xd0] sm:$0xff]
        %v395 = vld [vmem:[%s272 + $0xd8] sm:$0xff]
        %v396 = vld [vmem:[%s272 + $0xe0] sm:$0xff]
        %v397 = vld [vmem:[%s272 + $0xe8] sm:$0xff]
        %v398 = vld [vmem:[%s272 + $0xf0] sm:$0xff]
        %v399 = vld [vmem:[%s272 + $0xf8] sm:$0xff]
        %s400 = scalar_lea.vmem [#allocation2], 24
        %401 = vst.msk [vmem:[%s400 + $0x1] sm:$0xff] %vm313, %v368
        %402 = vst.msk [vmem:[%s400 + $0x9] sm:$0xff] %vm313, %v369
        %403 = vst.msk [vmem:[%s400 + $0x19] sm:$0xff] %vm313, %v370
        %404 = vst.msk [vmem:[%s400 + $0x21] sm:$0xff] %vm313, %v371
        %405 = vst.msk [vmem:[%s400 + $0x31] sm:$0xff] %vm313, %v372
        %406 = vst.msk [vmem:[%s400 + $0x39] sm:$0xff] %vm313, %v373
        %407 = vst.msk [vmem:[%s400 + $0x49] sm:$0xff] %vm313, %v374
        %408 = vst.msk [vmem:[%s400 + $0x51] sm:$0xff] %vm313, %v375
        %409 = vst.msk [vmem:[%s400 + $0x61] sm:$0xff] %vm313, %v376
        %410 = vst.msk [vmem:[%s400 + $0x69] sm:$0xff] %vm313, %v377
        %411 = vst.msk [vmem:[%s400 + $0x79] sm:$0xff] %vm313, %v378
        %412 = vst.msk [vmem:[%s400 + $0x81] sm:$0xff] %vm313, %v379
        %413 = vst.msk [vmem:[%s400 + $0x91] sm:$0xff] %vm313, %v380
        %414 = vst.msk [vmem:[%s400 + $0x99] sm:$0xff] %vm313, %v381
        %415 = vst.msk [vmem:[%s400 + $0xa9] sm:$0xff] %vm313, %v382
        %416 = vst.msk [vmem:[%s400 + $0xb1] sm:$0xff] %vm313, %v383
        %417 = vst.msk [vmem:[%s400 + $0xc1] sm:$0xff] %vm313, %v384
        %418 = vst.msk [vmem:[%s400 + $0xc9] sm:$0xff] %vm313, %v385
        %419 = vst.msk [vmem:[%s400 + $0xd9] sm:$0xff] %vm313, %v386
        %420 = vst.msk [vmem:[%s400 + $0xe1] sm:$0xff] %vm313, %v387
        %421 = vst.msk [vmem:[%s400 + $0xf1] sm:$0xff] %vm313, %v388
        %422 = vst.msk [vmem:[%s400 + $0xf9] sm:$0xff] %vm313, %v389
        %423 = vst.msk [vmem:[%s400 + $0x109] sm:$0xff] %vm313, %v390
        %424 = vst.msk [vmem:[%s400 + $0x111] sm:$0xff] %vm313, %v391
        %425 = vst.msk [vmem:[%s400 + $0x121] sm:$0xff] %vm313, %v392
        %426 = vst.msk [vmem:[%s400 + $0x129] sm:$0xff] %vm313, %v393
        %427 = vst.msk [vmem:[%s400 + $0x139] sm:$0xff] %vm313, %v394
        %428 = vst.msk [vmem:[%s400 + $0x141] sm:$0xff] %vm313, %v395
        %429 = vst.msk [vmem:[%s400 + $0x151] sm:$0xff] %vm313, %v396
        %430 = vst.msk [vmem:[%s400 + $0x159] sm:$0xff] %vm313, %v397
        %431 = vst.msk [vmem:[%s400 + $0x169] sm:$0xff] %vm313, %v398
        %432 = vst.msk [vmem:[%s400 + $0x171] sm:$0xff] %vm313, %v399
        %v433 = vld [vmem:[%s1] sm:$0xff]
        %v434 = vld [vmem:[%s1 + $0x8] sm:$0x1]
        %v435 = vld [vmem:[#allocation2] sm:$0xff]
        %v436 = vld [vmem:[#allocation2 + $0x8] sm:$0xff]
        %v437 = vld [vmem:[#allocation2 + $0x18] sm:$0xff]
        %v438 = vld [vmem:[#allocation2 + $0x20] sm:$0xff]
        %v439 = vld [vmem:[#allocation2 + $0x30] sm:$0xff]
        %v440 = vld [vmem:[#allocation2 + $0x38] sm:$0xff]
        %v441 = vld [vmem:[#allocation2 + $0x48] sm:$0xff]
        %v442 = vld [vmem:[#allocation2 + $0x50] sm:$0xff]
        %v443 = vld [vmem:[#allocation2 + $0x60] sm:$0xff]
        %v444 = vld [vmem:[#allocation2 + $0x68] sm:$0xff]
        %v445 = vld [vmem:[#allocation2 + $0x78] sm:$0xff]
        %v446 = vld [vmem:[#allocation2 + $0x80] sm:$0xff]
        %v447 = vld [vmem:[#allocation2 + $0x90] sm:$0xff]
        %v448 = vld [vmem:[#allocation2 + $0x98] sm:$0xff]
        %v449 = vld [vmem:[#allocation2 + $0xa8] sm:$0xff]
        %v450 = vld [vmem:[#allocation2 + $0xb0] sm:$0xff]
        %v451 = vld [vmem:[#allocation2 + $0xc0] sm:$0xff]
        %v452 = vld [vmem:[#allocation2 + $0xc8] sm:$0xff]
        %v453 = vld [vmem:[#allocation2 + $0xd8] sm:$0xff]
        %v454 = vld [vmem:[#allocation2 + $0xe0] sm:$0xff]
        %v455 = vld [vmem:[#allocation2 + $0xf0] sm:$0xff]
        %v456 = vld [vmem:[#allocation2 + $0xf8] sm:$0xff]
        %v457 = vld [vmem:[#allocation2 + $0x108] sm:$0xff]
        %v458 = vld [vmem:[#allocation2 + $0x110] sm:$0xff]
        %v459 = vld [vmem:[#allocation2 + $0x120] sm:$0xff]
        %v460 = vld [vmem:[#allocation2 + $0x128] sm:$0xff]
        %v461 = vld [vmem:[#allocation2 + $0x138] sm:$0xff]
        %v462 = vld [vmem:[#allocation2 + $0x140] sm:$0xff]
        %v463 = vld [vmem:[#allocation2 + $0x150] sm:$0xff]
        %v464 = vld [vmem:[#allocation2 + $0x158] sm:$0xff]
        %v465 = vld [vmem:[#allocation2 + $0x168] sm:$0xff]
        %v466 = vld [vmem:[#allocation2 + $0x170] sm:$0xff]
        %v467 = vlaneseq
        %v468 = vshrl.u32 %v467, 7
        %v469 = vsub.s32 0, %v468
        %v470 = vrot.slane %v433, %v469
        %v471 = vmul.f32 %v435, %v470
        %v472 = vmul.f32 %v436, %v470
        %v473 = vmul.f32 %v437, %v470
        %v474 = vmul.f32 %v438, %v470
        %v475 = vmul.f32 %v439, %v470
        %v476 = vmul.f32 %v440, %v470
        %v477 = vmul.f32 %v441, %v470
        %v478 = vmul.f32 %v442, %v470
        %v479 = vmul.f32 %v443, %v470
        %v480 = vmul.f32 %v444, %v470
        %v481 = vmul.f32 %v445, %v470
        %v482 = vmul.f32 %v446, %v470
        %v483 = vmul.f32 %v447, %v470
        %v484 = vmul.f32 %v448, %v470
        %v485 = vmul.f32 %v449, %v470
        %v486 = vmul.f32 %v450, %v470
        %v487 = vmul.f32 %v451, %v470
        %v488 = vmul.f32 %v452, %v470
        %v489 = vmul.f32 %v453, %v470
        %v490 = vmul.f32 %v454, %v470
        %v491 = vmul.f32 %v455, %v470
        %v492 = vmul.f32 %v456, %v470
        %v493 = vmul.f32 %v457, %v470
        %v494 = vmul.f32 %v458, %v470
        %v495 = vmul.f32 %v459, %v470
        %v496 = vmul.f32 %v460, %v470
        %v497 = vmul.f32 %v461, %v470
        %v498 = vmul.f32 %v462, %v470
        %v499 = vmul.f32 %v463, %v470
        %v500 = vmul.f32 %v464, %v470
        %v501 = vmul.f32 %v465, %v470
        %v502 = vmul.f32 %v466, %v470
        %v503 = vadd.f32 %v471, 0.0
        %v504 = vadd.f32 %v472, 0.0
        %v505 = vadd.f32 %v473, 0.0
        %v506 = vadd.f32 %v474, 0.0
        %v507 = vadd.f32 %v475, 0.0
        %v508 = vadd.f32 %v476, 0.0
        %v509 = vadd.f32 %v477, 0.0
        %v510 = vadd.f32 %v478, 0.0
        %v511 = vadd.f32 %v479, 0.0
        %v512 = vadd.f32 %v480, 0.0
        %v513 = vadd.f32 %v481, 0.0
        %v514 = vadd.f32 %v482, 0.0
        %v515 = vadd.f32 %v483, 0.0
        %v516 = vadd.f32 %v484, 0.0
        %v517 = vadd.f32 %v485, 0.0
        %v518 = vadd.f32 %v486, 0.0
        %v519 = vadd.f32 %v487, 0.0
        %v520 = vadd.f32 %v488, 0.0
        %v521 = vadd.f32 %v489, 0.0
        %v522 = vadd.f32 %v490, 0.0
        %v523 = vadd.f32 %v491, 0.0
        %v524 = vadd.f32 %v492, 0.0
        %v525 = vadd.f32 %v493, 0.0
        %v526 = vadd.f32 %v494, 0.0
        %v527 = vadd.f32 %v495, 0.0
        %v528 = vadd.f32 %v496, 0.0
        %v529 = vadd.f32 %v497, 0.0
        %v530 = vadd.f32 %v498, 0.0
        %v531 = vadd.f32 %v499, 0.0
        %v532 = vadd.f32 %v500, 0.0
        %v533 = vadd.f32 %v501, 0.0
        %v534 = vadd.f32 %v502, 0.0
        %v535 = vld [vmem:[#allocation2 + $0x1] sm:$0xff]
        %v536 = vld [vmem:[#allocation2 + $0x9] sm:$0xff]
        %v537 = vld [vmem:[#allocation2 + $0x19] sm:$0xff]
        %v538 = vld [vmem:[#allocation2 + $0x21] sm:$0xff]
        %v539 = vld [vmem:[#allocation2 + $0x31] sm:$0xff]
        %v540 = vld [vmem:[#allocation2 + $0x39] sm:$0xff]
        %v541 = vld [vmem:[#allocation2 + $0x49] sm:$0xff]
        %v542 = vld [vmem:[#allocation2 + $0x51] sm:$0xff]
        %v543 = vld [vmem:[#allocation2 + $0x61] sm:$0xff]
        %v544 = vld [vmem:[#allocation2 + $0x69] sm:$0xff]
        %v545 = vld [vmem:[#allocation2 + $0x79] sm:$0xff]
        %v546 = vld [vmem:[#allocation2 + $0x81] sm:$0xff]
        %v547 = vld [vmem:[#allocation2 + $0x91] sm:$0xff]
        %v548 = vld [vmem:[#allocation2 + $0x99] sm:$0xff]
        %v549 = vld [vmem:[#allocation2 + $0xa9] sm:$0xff]
        %v550 = vld [vmem:[#allocation2 + $0xb1] sm:$0xff]
        %v551 = vld [vmem:[#allocation2 + $0xc1] sm:$0xff]
        %v552 = vld [vmem:[#allocation2 + $0xc9] sm:$0xff]
        %v553 = vld [vmem:[#allocation2 + $0xd9] sm:$0xff]
        %v554 = vld [vmem:[#allocation2 + $0xe1] sm:$0xff]
        %v555 = vld [vmem:[#allocation2 + $0xf1] sm:$0xff]
        %v556 = vld [vmem:[#allocation2 + $0xf9] sm:$0xff]
        %v557 = vld [vmem:[#allocation2 + $0x109] sm:$0xff]
        %v558 = vld [vmem:[#allocation2 + $0x111] sm:$0xff]
        %v559 = vld [vmem:[#allocation2 + $0x121] sm:$0xff]
        %v560 = vld [vmem:[#allocation2 + $0x129] sm:$0xff]
        %v561 = vld [vmem:[#allocation2 + $0x139] sm:$0xff]
        %v562 = vld [vmem:[#allocation2 + $0x141] sm:$0xff]
        %v563 = vld [vmem:[#allocation2 + $0x151] sm:$0xff]
        %v564 = vld [vmem:[#allocation2 + $0x159] sm:$0xff]
        %v565 = vld [vmem:[#allocation2 + $0x169] sm:$0xff]
        %v566 = vld [vmem:[#allocation2 + $0x171] sm:$0xff]
        %v567 = vlaneseq
        %v568 = vshrl.u32 %v567, 7
        %v569 = vsub.s32 1, %v568
        %v570 = vrot.slane %v433, %v569
        %v571 = vmul.f32 %v535, %v570
        %v572 = vmul.f32 %v536, %v570
        %v573 = vmul.f32 %v537, %v570
        %v574 = vmul.f32 %v538, %v570
        %v575 = vmul.f32 %v539, %v570
        %v576 = vmul.f32 %v540, %v570
        %v577 = vmul.f32 %v541, %v570
        %v578 = vmul.f32 %v542, %v570
        %v579 = vmul.f32 %v543, %v570
        %v580 = vmul.f32 %v544, %v570
        %v581 = vmul.f32 %v545, %v570
        %v582 = vmul.f32 %v546, %v570
        %v583 = vmul.f32 %v547, %v570
        %v584 = vmul.f32 %v548, %v570
        %v585 = vmul.f32 %v549, %v570
        %v586 = vmul.f32 %v550, %v570
        %v587 = vmul.f32 %v551, %v570
        %v588 = vmul.f32 %v552, %v570
        %v589 = vmul.f32 %v553, %v570
        %v590 = vmul.f32 %v554, %v570
        %v591 = vmul.f32 %v555, %v570
        %v592 = vmul.f32 %v556, %v570
        %v593 = vmul.f32 %v557, %v570
        %v594 = vmul.f32 %v558, %v570
        %v595 = vmul.f32 %v559, %v570
        %v596 = vmul.f32 %v560, %v570
        %v597 = vmul.f32 %v561, %v570
        %v598 = vmul.f32 %v562, %v570
        %v599 = vmul.f32 %v563, %v570
        %v600 = vmul.f32 %v564, %v570
        %v601 = vmul.f32 %v565, %v570
        %v602 = vmul.f32 %v566, %v570
        %v603 = vadd.f32 %v503, %v571
        %v604 = vadd.f32 %v504, %v572
        %v605 = vadd.f32 %v505, %v573
        %v606 = vadd.f32 %v506, %v574
        %v607 = vadd.f32 %v507, %v575
        %v608 = vadd.f32 %v508, %v576
        %v609 = vadd.f32 %v509, %v577
        %v610 = vadd.f32 %v510, %v578
        %v611 = vadd.f32 %v511, %v579
        %v612 = vadd.f32 %v512, %v580
        %v613 = vadd.f32 %v513, %v581
        %v614 = vadd.f32 %v514, %v582
        %v615 = vadd.f32 %v515, %v583
        %v616 = vadd.f32 %v516, %v584
        %v617 = vadd.f32 %v517, %v585
        %v618 = vadd.f32 %v518, %v586
        %v619 = vadd.f32 %v519, %v587
        %v620 = vadd.f32 %v520, %v588
        %v621 = vadd.f32 %v521, %v589
        %v622 = vadd.f32 %v522, %v590
        %v623 = vadd.f32 %v523, %v591
        %v624 = vadd.f32 %v524, %v592
        %v625 = vadd.f32 %v525, %v593
        %v626 = vadd.f32 %v526, %v594
        %v627 = vadd.f32 %v527, %v595
        %v628 = vadd.f32 %v528, %v596
        %v629 = vadd.f32 %v529, %v597
        %v630 = vadd.f32 %v530, %v598
        %v631 = vadd.f32 %v531, %v599
        %v632 = vadd.f32 %v532, %v600
        %v633 = vadd.f32 %v533, %v601
        %v634 = vadd.f32 %v534, %v602
        %v635 = vld [vmem:[#allocation2 + $0x2] sm:$0xff]
        %v636 = vld [vmem:[#allocation2 + $0xa] sm:$0xff]
        %v637 = vld [vmem:[#allocation2 + $0x1a] sm:$0xff]
        %v638 = vld [vmem:[#allocation2 + $0x22] sm:$0xff]
        %v639 = vld [vmem:[#allocation2 + $0x32] sm:$0xff]
        %v640 = vld [vmem:[#allocation2 + $0x3a] sm:$0xff]
        %v641 = vld [vmem:[#allocation2 + $0x4a] sm:$0xff]
        %v642 = vld [vmem:[#allocation2 + $0x52] sm:$0xff]
        %v643 = vld [vmem:[#allocation2 + $0x62] sm:$0xff]
        %v644 = vld [vmem:[#allocation2 + $0x6a] sm:$0xff]
        %v645 = vld [vmem:[#allocation2 + $0x7a] sm:$0xff]
        %v646 = vld [vmem:[#allocation2 + $0x82] sm:$0xff]
        %v647 = vld [vmem:[#allocation2 + $0x92] sm:$0xff]
        %v648 = vld [vmem:[#allocation2 + $0x9a] sm:$0xff]
        %v649 = vld [vmem:[#allocation2 + $0xaa] sm:$0xff]
        %v650 = vld [vmem:[#allocation2 + $0xb2] sm:$0xff]
        %v651 = vld [vmem:[#allocation2 + $0xc2] sm:$0xff]
        %v652 = vld [vmem:[#allocation2 + $0xca] sm:$0xff]
        %v653 = vld [vmem:[#allocation2 + $0xda] sm:$0xff]
        %v654 = vld [vmem:[#allocation2 + $0xe2] sm:$0xff]
        %v655 = vld [vmem:[#allocation2 + $0xf2] sm:$0xff]
        %v656 = vld [vmem:[#allocation2 + $0xfa] sm:$0xff]
        %v657 = vld [vmem:[#allocation2 + $0x10a] sm:$0xff]
        %v658 = vld [vmem:[#allocation2 + $0x112] sm:$0xff]
        %v659 = vld [vmem:[#allocation2 + $0x122] sm:$0xff]
        %v660 = vld [vmem:[#allocation2 + $0x12a] sm:$0xff]
        %v661 = vld [vmem:[#allocation2 + $0x13a] sm:$0xff]
        %v662 = vld [vmem:[#allocation2 + $0x142] sm:$0xff]
        %v663 = vld [vmem:[#allocation2 + $0x152] sm:$0xff]
        %v664 = vld [vmem:[#allocation2 + $0x15a] sm:$0xff]
        %v665 = vld [vmem:[#allocation2 + $0x16a] sm:$0xff]
        %v666 = vld [vmem:[#allocation2 + $0x172] sm:$0xff]
        %v667 = vlaneseq
        %v668 = vshrl.u32 %v667, 7
        %v669 = vsub.s32 2, %v668
        %v670 = vrot.slane %v433, %v669
        %v671 = vmul.f32 %v635, %v670
        %v672 = vmul.f32 %v636, %v670
        %v673 = vmul.f32 %v637, %v670
        %v674 = vmul.f32 %v638, %v670
        %v675 = vmul.f32 %v639, %v670
        %v676 = vmul.f32 %v640, %v670
        %v677 = vmul.f32 %v641, %v670
        %v678 = vmul.f32 %v642, %v670
        %v679 = vmul.f32 %v643, %v670
        %v680 = vmul.f32 %v644, %v670
        %v681 = vmul.f32 %v645, %v670
        %v682 = vmul.f32 %v646, %v670
        %v683 = vmul.f32 %v647, %v670
        %v684 = vmul.f32 %v648, %v670
        %v685 = vmul.f32 %v649, %v670
        %v686 = vmul.f32 %v650, %v670
        %v687 = vmul.f32 %v651, %v670
        %v688 = vmul.f32 %v652, %v670
        %v689 = vmul.f32 %v653, %v670
        %v690 = vmul.f32 %v654, %v670
        %v691 = vmul.f32 %v655, %v670
        %v692 = vmul.f32 %v656, %v670
        %v693 = vmul.f32 %v657, %v670
        %v694 = vmul.f32 %v658, %v670
        %v695 = vmul.f32 %v659, %v670
        %v696 = vmul.f32 %v660, %v670
        %v697 = vmul.f32 %v661, %v670
        %v698 = vmul.f32 %v662, %v670
        %v699 = vmul.f32 %v663, %v670
        %v700 = vmul.f32 %v664, %v670
        %v701 = vmul.f32 %v665, %v670
        %v702 = vmul.f32 %v666, %v670
        %v703 = vadd.f32 %v603, %v671
        %v704 = vadd.f32 %v604, %v672
        %v705 = vadd.f32 %v605, %v673
        %v706 = vadd.f32 %v606, %v674
        %v707 = vadd.f32 %v607, %v675
        %v708 = vadd.f32 %v608, %v676
        %v709 = vadd.f32 %v609, %v677
        %v710 = vadd.f32 %v610, %v678
        %v711 = vadd.f32 %v611, %v679
        %v712 = vadd.f32 %v612, %v680
        %v713 = vadd.f32 %v613, %v681
        %v714 = vadd.f32 %v614, %v682
        %v715 = vadd.f32 %v615, %v683
        %v716 = vadd.f32 %v616, %v684
        %v717 = vadd.f32 %v617, %v685
        %v718 = vadd.f32 %v618, %v686
        %v719 = vadd.f32 %v619, %v687
        %v720 = vadd.f32 %v620, %v688
        %v721 = vadd.f32 %v621, %v689
        %v722 = vadd.f32 %v622, %v690
        %v723 = vadd.f32 %v623, %v691
        %v724 = vadd.f32 %v624, %v692
        %v725 = vadd.f32 %v625, %v693
        %v726 = vadd.f32 %v626, %v694
        %v727 = vadd.f32 %v627, %v695
        %v728 = vadd.f32 %v628, %v696
        %v729 = vadd.f32 %v629, %v697
        %v730 = vadd.f32 %v630, %v698
        %v731 = vadd.f32 %v631, %v699
        %v732 = vadd.f32 %v632, %v700
        %v733 = vadd.f32 %v633, %v701
        %v734 = vadd.f32 %v634, %v702
        %v735 = vld [vmem:[%s400] sm:$0xff]
        %v736 = vld [vmem:[%s400 + $0x8] sm:$0xff]
        %v737 = vld [vmem:[%s400 + $0x18] sm:$0xff]
        %v738 = vld [vmem:[%s400 + $0x20] sm:$0xff]
        %v739 = vld [vmem:[%s400 + $0x30] sm:$0xff]
        %v740 = vld [vmem:[%s400 + $0x38] sm:$0xff]
        %v741 = vld [vmem:[%s400 + $0x48] sm:$0xff]
        %v742 = vld [vmem:[%s400 + $0x50] sm:$0xff]
        %v743 = vld [vmem:[%s400 + $0x60] sm:$0xff]
        %v744 = vld [vmem:[%s400 + $0x68] sm:$0xff]
        %v745 = vld [vmem:[%s400 + $0x78] sm:$0xff]
        %v746 = vld [vmem:[%s400 + $0x80] sm:$0xff]
        %v747 = vld [vmem:[%s400 + $0x90] sm:$0xff]
        %v748 = vld [vmem:[%s400 + $0x98] sm:$0xff]
        %v749 = vld [vmem:[%s400 + $0xa8] sm:$0xff]
        %v750 = vld [vmem:[%s400 + $0xb0] sm:$0xff]
        %v751 = vld [vmem:[%s400 + $0xc0] sm:$0xff]
        %v752 = vld [vmem:[%s400 + $0xc8] sm:$0xff]
        %v753 = vld [vmem:[%s400 + $0xd8] sm:$0xff]
        %v754 = vld [vmem:[%s400 + $0xe0] sm:$0xff]
        %v755 = vld [vmem:[%s400 + $0xf0] sm:$0xff]
        %v756 = vld [vmem:[%s400 + $0xf8] sm:$0xff]
        %v757 = vld [vmem:[%s400 + $0x108] sm:$0xff]
        %v758 = vld [vmem:[%s400 + $0x110] sm:$0xff]
        %v759 = vld [vmem:[%s400 + $0x120] sm:$0xff]
        %v760 = vld [vmem:[%s400 + $0x128] sm:$0xff]
        %v761 = vld [vmem:[%s400 + $0x138] sm:$0xff]
        %v762 = vld [vmem:[%s400 + $0x140] sm:$0xff]
        %v763 = vld [vmem:[%s400 + $0x150] sm:$0xff]
        %v764 = vld [vmem:[%s400 + $0x158] sm:$0xff]
        %v765 = vld [vmem:[%s400 + $0x168] sm:$0xff]
        %v766 = vld [vmem:[%s400 + $0x170] sm:$0xff]
        %v767 = vlaneseq
        %v768 = vshrl.u32 %v767, 7
        %v769 = vsub.s32 3, %v768
        %v770 = vrot.slane %v433, %v769
        %v771 = vmul.f32 %v735, %v770
        %v772 = vmul.f32 %v736, %v770
        %v773 = vmul.f32 %v737, %v770
        %v774 = vmul.f32 %v738, %v770
        %v775 = vmul.f32 %v739, %v770
        %v776 = vmul.f32 %v740, %v770
        %v777 = vmul.f32 %v741, %v770
        %v778 = vmul.f32 %v742, %v770
        %v779 = vmul.f32 %v743, %v770
        %v780 = vmul.f32 %v744, %v770
        %v781 = vmul.f32 %v745, %v770
        %v782 = vmul.f32 %v746, %v770
        %v783 = vmul.f32 %v747, %v770
        %v784 = vmul.f32 %v748, %v770
        %v785 = vmul.f32 %v749, %v770
        %v786 = vmul.f32 %v750, %v770
        %v787 = vmul.f32 %v751, %v770
        %v788 = vmul.f32 %v752, %v770
        %v789 = vmul.f32 %v753, %v770
        %v790 = vmul.f32 %v754, %v770
        %v791 = vmul.f32 %v755, %v770
        %v792 = vmul.f32 %v756, %v770
        %v793 = vmul.f32 %v757, %v770
        %v794 = vmul.f32 %v758, %v770
        %v795 = vmul.f32 %v759, %v770
        %v796 = vmul.f32 %v760, %v770
        %v797 = vmul.f32 %v761, %v770
        %v798 = vmul.f32 %v762, %v770
        %v799 = vmul.f32 %v763, %v770
        %v800 = vmul.f32 %v764, %v770
        %v801 = vmul.f32 %v765, %v770
        %v802 = vmul.f32 %v766, %v770
        %v803 = vadd.f32 %v703, %v771
        %v804 = vadd.f32 %v704, %v772
        %v805 = vadd.f32 %v705, %v773
        %v806 = vadd.f32 %v706, %v774
        %v807 = vadd.f32 %v707, %v775
        %v808 = vadd.f32 %v708, %v776
        %v809 = vadd.f32 %v709, %v777
        %v810 = vadd.f32 %v710, %v778
        %v811 = vadd.f32 %v711, %v779
        %v812 = vadd.f32 %v712, %v780
        %v813 = vadd.f32 %v713, %v781
        %v814 = vadd.f32 %v714, %v782
        %v815 = vadd.f32 %v715, %v783
        %v816 = vadd.f32 %v716, %v784
        %v817 = vadd.f32 %v717, %v785
        %v818 = vadd.f32 %v718, %v786
        %v819 = vadd.f32 %v719, %v787
        %v820 = vadd.f32 %v720, %v788
        %v821 = vadd.f32 %v721, %v789
        %v822 = vadd.f32 %v722, %v790
        %v823 = vadd.f32 %v723, %v791
        %v824 = vadd.f32 %v724, %v792
        %v825 = vadd.f32 %v725, %v793
        %v826 = vadd.f32 %v726, %v794
        %v827 = vadd.f32 %v727, %v795
        %v828 = vadd.f32 %v728, %v796
        %v829 = vadd.f32 %v729, %v797
        %v830 = vadd.f32 %v730, %v798
        %v831 = vadd.f32 %v731, %v799
        %v832 = vadd.f32 %v732, %v800
        %v833 = vadd.f32 %v733, %v801
        %v834 = vadd.f32 %v734, %v802
        %v835 = vld [vmem:[%s400 + $0x1] sm:$0xff]
        %v836 = vld [vmem:[%s400 + $0x9] sm:$0xff]
        %v837 = vld [vmem:[%s400 + $0x19] sm:$0xff]
        %v838 = vld [vmem:[%s400 + $0x21] sm:$0xff]
        %v839 = vld [vmem:[%s400 + $0x31] sm:$0xff]
        %v840 = vld [vmem:[%s400 + $0x39] sm:$0xff]
        %v841 = vld [vmem:[%s400 + $0x49] sm:$0xff]
        %v842 = vld [vmem:[%s400 + $0x51] sm:$0xff]
        %v843 = vld [vmem:[%s400 + $0x61] sm:$0xff]
        %v844 = vld [vmem:[%s400 + $0x69] sm:$0xff]
        %v845 = vld [vmem:[%s400 + $0x79] sm:$0xff]
        %v846 = vld [vmem:[%s400 + $0x81] sm:$0xff]
        %v847 = vld [vmem:[%s400 + $0x91] sm:$0xff]
        %v848 = vld [vmem:[%s400 + $0x99] sm:$0xff]
        %v849 = vld [vmem:[%s400 + $0xa9] sm:$0xff]
        %v850 = vld [vmem:[%s400 + $0xb1] sm:$0xff]
        %v851 = vld [vmem:[%s400 + $0xc1] sm:$0xff]
        %v852 = vld [vmem:[%s400 + $0xc9] sm:$0xff]
        %v853 = vld [vmem:[%s400 + $0xd9] sm:$0xff]
        %v854 = vld [vmem:[%s400 + $0xe1] sm:$0xff]
        %v855 = vld [vmem:[%s400 + $0xf1] sm:$0xff]
        %v856 = vld [vmem:[%s400 + $0xf9] sm:$0xff]
        %v857 = vld [vmem:[%s400 + $0x109] sm:$0xff]
        %v858 = vld [vmem:[%s400 + $0x111] sm:$0xff]
        %v859 = vld [vmem:[%s400 + $0x121] sm:$0xff]
        %v860 = vld [vmem:[%s400 + $0x129] sm:$0xff]
        %v861 = vld [vmem:[%s400 + $0x139] sm:$0xff]
        %v862 = vld [vmem:[%s400 + $0x141] sm:$0xff]
        %v863 = vld [vmem:[%s400 + $0x151] sm:$0xff]
        %v864 = vld [vmem:[%s400 + $0x159] sm:$0xff]
        %v865 = vld [vmem:[%s400 + $0x169] sm:$0xff]
        %v866 = vld [vmem:[%s400 + $0x171] sm:$0xff]
        %v867 = vlaneseq
        %v868 = vshrl.u32 %v867, 7
        %v869 = vsub.s32 4, %v868
        %v870 = vrot.slane %v433, %v869
        %v871 = vmul.f32 %v835, %v870
        %v872 = vmul.f32 %v836, %v870
        %v873 = vmul.f32 %v837, %v870
        %v874 = vmul.f32 %v838, %v870
        %v875 = vmul.f32 %v839, %v870
        %v876 = vmul.f32 %v840, %v870
        %v877 = vmul.f32 %v841, %v870
        %v878 = vmul.f32 %v842, %v870
        %v879 = vmul.f32 %v843, %v870
        %v880 = vmul.f32 %v844, %v870
        %v881 = vmul.f32 %v845, %v870
        %v882 = vmul.f32 %v846, %v870
        %v883 = vmul.f32 %v847, %v870
        %v884 = vmul.f32 %v848, %v870
        %v885 = vmul.f32 %v849, %v870
        %v886 = vmul.f32 %v850, %v870
        %v887 = vmul.f32 %v851, %v870
        %v888 = vmul.f32 %v852, %v870
        %v889 = vmul.f32 %v853, %v870
        %v890 = vmul.f32 %v854, %v870
        %v891 = vmul.f32 %v855, %v870
        %v892 = vmul.f32 %v856, %v870
        %v893 = vmul.f32 %v857, %v870
        %v894 = vmul.f32 %v858, %v870
        %v895 = vmul.f32 %v859, %v870
        %v896 = vmul.f32 %v860, %v870
        %v897 = vmul.f32 %v861, %v870
        %v898 = vmul.f32 %v862, %v870
        %v899 = vmul.f32 %v863, %v870
        %v900 = vmul.f32 %v864, %v870
        %v901 = vmul.f32 %v865, %v870
        %v902 = vmul.f32 %v866, %v870
        %v903 = vadd.f32 %v803, %v871
        %v904 = vadd.f32 %v804, %v872
        %v905 = vadd.f32 %v805, %v873
        %v906 = vadd.f32 %v806, %v874
        %v907 = vadd.f32 %v807, %v875
        %v908 = vadd.f32 %v808, %v876
        %v909 = vadd.f32 %v809, %v877
        %v910 = vadd.f32 %v810, %v878
        %v911 = vadd.f32 %v811, %v879
        %v912 = vadd.f32 %v812, %v880
        %v913 = vadd.f32 %v813, %v881
        %v914 = vadd.f32 %v814, %v882
        %v915 = vadd.f32 %v815, %v883
        %v916 = vadd.f32 %v816, %v884
        %v917 = vadd.f32 %v817, %v885
        %v918 = vadd.f32 %v818, %v886
        %v919 = vadd.f32 %v819, %v887
        %v920 = vadd.f32 %v820, %v888
        %v921 = vadd.f32 %v821, %v889
        %v922 = vadd.f32 %v822, %v890
        %v923 = vadd.f32 %v823, %v891
        %v924 = vadd.f32 %v824, %v892
        %v925 = vadd.f32 %v825, %v893
        %v926 = vadd.f32 %v826, %v894
        %v927 = vadd.f32 %v827, %v895
        %v928 = vadd.f32 %v828, %v896
        %v929 = vadd.f32 %v829, %v897
        %v930 = vadd.f32 %v830, %v898
        %v931 = vadd.f32 %v831, %v899
        %v932 = vadd.f32 %v832, %v900
        %v933 = vadd.f32 %v833, %v901
        %v934 = vadd.f32 %v834, %v902
        %v935 = vld [vmem:[%s400 + $0x2] sm:$0xff]
        %v936 = vld [vmem:[%s400 + $0xa] sm:$0xff]
        %v937 = vld [vmem:[%s400 + $0x1a] sm:$0xff]
        %v938 = vld [vmem:[%s400 + $0x22] sm:$0xff]
        %v939 = vld [vmem:[%s400 + $0x32] sm:$0xff]
        %v940 = vld [vmem:[%s400 + $0x3a] sm:$0xff]
        %v941 = vld [vmem:[%s400 + $0x4a] sm:$0xff]
        %v942 = vld [vmem:[%s400 + $0x52] sm:$0xff]
        %v943 = vld [vmem:[%s400 + $0x62] sm:$0xff]
        %v944 = vld [vmem:[%s400 + $0x6a] sm:$0xff]
        %v945 = vld [vmem:[%s400 + $0x7a] sm:$0xff]
        %v946 = vld [vmem:[%s400 + $0x82] sm:$0xff]
        %v947 = vld [vmem:[%s400 + $0x92] sm:$0xff]
        %v948 = vld [vmem:[%s400 + $0x9a] sm:$0xff]
        %v949 = vld [vmem:[%s400 + $0xaa] sm:$0xff]
        %v950 = vld [vmem:[%s400 + $0xb2] sm:$0xff]
        %v951 = vld [vmem:[%s400 + $0xc2] sm:$0xff]
        %v952 = vld [vmem:[%s400 + $0xca] sm:$0xff]
        %v953 = vld [vmem:[%s400 + $0xda] sm:$0xff]
        %v954 = vld [vmem:[%s400 + $0xe2] sm:$0xff]
        %v955 = vld [vmem:[%s400 + $0xf2] sm:$0xff]
        %v956 = vld [vmem:[%s400 + $0xfa] sm:$0xff]
        %v957 = vld [vmem:[%s400 + $0x10a] sm:$0xff]
        %v958 = vld [vmem:[%s400 + $0x112] sm:$0xff]
        %v959 = vld [vmem:[%s400 + $0x122] sm:$0xff]
        %v960 = vld [vmem:[%s400 + $0x12a] sm:$0xff]
        %v961 = vld [vmem:[%s400 + $0x13a] sm:$0xff]
        %v962 = vld [vmem:[%s400 + $0x142] sm:$0xff]
        %v963 = vld [vmem:[%s400 + $0x152] sm:$0xff]
        %v964 = vld [vmem:[%s400 + $0x15a] sm:$0xff]
        %v965 = vld [vmem:[%s400 + $0x16a] sm:$0xff]
        %v966 = vld [vmem:[%s400 + $0x172] sm:$0xff]
        %v967 = vlaneseq
        %v968 = vshrl.u32 %v967, 7
        %v969 = vsub.s32 5, %v968
        %v970 = vrot.slane %v433, %v969
        %v971 = vmul.f32 %v935, %v970
        %v972 = vmul.f32 %v936, %v970
        %v973 = vmul.f32 %v937, %v970
        %v974 = vmul.f32 %v938, %v970
        %v975 = vmul.f32 %v939, %v970
        %v976 = vmul.f32 %v940, %v970
        %v977 = vmul.f32 %v941, %v970
        %v978 = vmul.f32 %v942, %v970
        %v979 = vmul.f32 %v943, %v970
        %v980 = vmul.f32 %v944, %v970
        %v981 = vmul.f32 %v945, %v970
        %v982 = vmul.f32 %v946, %v970
        %v983 = vmul.f32 %v947, %v970
        %v984 = vmul.f32 %v948, %v970
        %v985 = vmul.f32 %v949, %v970
        %v986 = vmul.f32 %v950, %v970
        %v987 = vmul.f32 %v951, %v970
        %v988 = vmul.f32 %v952, %v970
        %v989 = vmul.f32 %v953, %v970
        %v990 = vmul.f32 %v954, %v970
        %v991 = vmul.f32 %v955, %v970
        %v992 = vmul.f32 %v956, %v970
        %v993 = vmul.f32 %v957, %v970
        %v994 = vmul.f32 %v958, %v970
        %v995 = vmul.f32 %v959, %v970
        %v996 = vmul.f32 %v960, %v970
        %v997 = vmul.f32 %v961, %v970
        %v998 = vmul.f32 %v962, %v970
        %v999 = vmul.f32 %v963, %v970
        %v1000 = vmul.f32 %v964, %v970
        %v1001 = vmul.f32 %v965, %v970
        %v1002 = vmul.f32 %v966, %v970
        %v1003 = vadd.f32 %v903, %v971
        %v1004 = vadd.f32 %v904, %v972
        %v1005 = vadd.f32 %v905, %v973
        %v1006 = vadd.f32 %v906, %v974
        %v1007 = vadd.f32 %v907, %v975
        %v1008 = vadd.f32 %v908, %v976
        %v1009 = vadd.f32 %v909, %v977
        %v1010 = vadd.f32 %v910, %v978
        %v1011 = vadd.f32 %v911, %v979
        %v1012 = vadd.f32 %v912, %v980
        %v1013 = vadd.f32 %v913, %v981
        %v1014 = vadd.f32 %v914, %v982
        %v1015 = vadd.f32 %v915, %v983
        %v1016 = vadd.f32 %v916, %v984
        %v1017 = vadd.f32 %v917, %v985
        %v1018 = vadd.f32 %v918, %v986
        %v1019 = vadd.f32 %v919, %v987
        %v1020 = vadd.f32 %v920, %v988
        %v1021 = vadd.f32 %v921, %v989
        %v1022 = vadd.f32 %v922, %v990
        %v1023 = vadd.f32 %v923, %v991
        %v1024 = vadd.f32 %v924, %v992
        %v1025 = vadd.f32 %v925, %v993
        %v1026 = vadd.f32 %v926, %v994
        %v1027 = vadd.f32 %v927, %v995
        %v1028 = vadd.f32 %v928, %v996
        %v1029 = vadd.f32 %v929, %v997
        %v1030 = vadd.f32 %v930, %v998
        %v1031 = vadd.f32 %v931, %v999
        %v1032 = vadd.f32 %v932, %v1000
        %v1033 = vadd.f32 %v933, %v1001
        %v1034 = vadd.f32 %v934, %v1002
        %s1035 = scalar_lea.vmem [#allocation2], 48
        %v1036 = vld [vmem:[%s1035] sm:$0xff]
        %v1037 = vld [vmem:[%s1035 + $0x8] sm:$0xff]
        %v1038 = vld [vmem:[%s1035 + $0x18] sm:$0xff]
        %v1039 = vld [vmem:[%s1035 + $0x20] sm:$0xff]
        %v1040 = vld [vmem:[%s1035 + $0x30] sm:$0xff]
        %v1041 = vld [vmem:[%s1035 + $0x38] sm:$0xff]
        %v1042 = vld [vmem:[%s1035 + $0x48] sm:$0xff]
        %v1043 = vld [vmem:[%s1035 + $0x50] sm:$0xff]
        %v1044 = vld [vmem:[%s1035 + $0x60] sm:$0xff]
        %v1045 = vld [vmem:[%s1035 + $0x68] sm:$0xff]
        %v1046 = vld [vmem:[%s1035 + $0x78] sm:$0xff]
        %v1047 = vld [vmem:[%s1035 + $0x80] sm:$0xff]
        %v1048 = vld [vmem:[%s1035 + $0x90] sm:$0xff]
        %v1049 = vld [vmem:[%s1035 + $0x98] sm:$0xff]
        %v1050 = vld [vmem:[%s1035 + $0xa8] sm:$0xff]
        %v1051 = vld [vmem:[%s1035 + $0xb0] sm:$0xff]
        %v1052 = vld [vmem:[%s1035 + $0xc0] sm:$0xff]
        %v1053 = vld [vmem:[%s1035 + $0xc8] sm:$0xff]
        %v1054 = vld [vmem:[%s1035 + $0xd8] sm:$0xff]
        %v1055 = vld [vmem:[%s1035 + $0xe0] sm:$0xff]
        %v1056 = vld [vmem:[%s1035 + $0xf0] sm:$0xff]
        %v1057 = vld [vmem:[%s1035 + $0xf8] sm:$0xff]
        %v1058 = vld [vmem:[%s1035 + $0x108] sm:$0xff]
        %v1059 = vld [vmem:[%s1035 + $0x110] sm:$0xff]
        %v1060 = vld [vmem:[%s1035 + $0x120] sm:$0xff]
        %v1061 = vld [vmem:[%s1035 + $0x128] sm:$0xff]
        %v1062 = vld [vmem:[%s1035 + $0x138] sm:$0xff]
        %v1063 = vld [vmem:[%s1035 + $0x140] sm:$0xff]
        %v1064 = vld [vmem:[%s1035 + $0x150] sm:$0xff]
        %v1065 = vld [vmem:[%s1035 + $0x158] sm:$0xff]
        %v1066 = vld [vmem:[%s1035 + $0x168] sm:$0xff]
        %v1067 = vld [vmem:[%s1035 + $0x170] sm:$0xff]
        %v1068 = vlaneseq
        %v1069 = vshrl.u32 %v1068, 7
        %v1070 = vsub.s32 6, %v1069
        %v1071 = vrot.slane %v433, %v1070
        %v1072 = vmul.f32 %v1036, %v1071
        %v1073 = vmul.f32 %v1037, %v1071
        %v1074 = vmul.f32 %v1038, %v1071
        %v1075 = vmul.f32 %v1039, %v1071
        %v1076 = vmul.f32 %v1040, %v1071
        %v1077 = vmul.f32 %v1041, %v1071
        %v1078 = vmul.f32 %v1042, %v1071
        %v1079 = vmul.f32 %v1043, %v1071
        %v1080 = vmul.f32 %v1044, %v1071
        %v1081 = vmul.f32 %v1045, %v1071
        %v1082 = vmul.f32 %v1046, %v1071
        %v1083 = vmul.f32 %v1047, %v1071
        %v1084 = vmul.f32 %v1048, %v1071
        %v1085 = vmul.f32 %v1049, %v1071
        %v1086 = vmul.f32 %v1050, %v1071
        %v1087 = vmul.f32 %v1051, %v1071
        %v1088 = vmul.f32 %v1052, %v1071
        %v1089 = vmul.f32 %v1053, %v1071
        %v1090 = vmul.f32 %v1054, %v1071
        %v1091 = vmul.f32 %v1055, %v1071
        %v1092 = vmul.f32 %v1056, %v1071
        %v1093 = vmul.f32 %v1057, %v1071
        %v1094 = vmul.f32 %v1058, %v1071
        %v1095 = vmul.f32 %v1059, %v1071
        %v1096 = vmul.f32 %v1060, %v1071
        %v1097 = vmul.f32 %v1061, %v1071
        %v1098 = vmul.f32 %v1062, %v1071
        %v1099 = vmul.f32 %v1063, %v1071
        %v1100 = vmul.f32 %v1064, %v1071
        %v1101 = vmul.f32 %v1065, %v1071
        %v1102 = vmul.f32 %v1066, %v1071
        %v1103 = vmul.f32 %v1067, %v1071
        %v1104 = vadd.f32 %v1003, %v1072
        %v1105 = vadd.f32 %v1004, %v1073
        %v1106 = vadd.f32 %v1005, %v1074
        %v1107 = vadd.f32 %v1006, %v1075
        %v1108 = vadd.f32 %v1007, %v1076
        %v1109 = vadd.f32 %v1008, %v1077
        %v1110 = vadd.f32 %v1009, %v1078
        %v1111 = vadd.f32 %v1010, %v1079
        %v1112 = vadd.f32 %v1011, %v1080
        %v1113 = vadd.f32 %v1012, %v1081
        %v1114 = vadd.f32 %v1013, %v1082
        %v1115 = vadd.f32 %v1014, %v1083
        %v1116 = vadd.f32 %v1015, %v1084
        %v1117 = vadd.f32 %v1016, %v1085
        %v1118 = vadd.f32 %v1017, %v1086
        %v1119 = vadd.f32 %v1018, %v1087
        %v1120 = vadd.f32 %v1019, %v1088
        %v1121 = vadd.f32 %v1020, %v1089
        %v1122 = vadd.f32 %v1021, %v1090
        %v1123 = vadd.f32 %v1022, %v1091
        %v1124 = vadd.f32 %v1023, %v1092
        %v1125 = vadd.f32 %v1024, %v1093
        %v1126 = vadd.f32 %v1025, %v1094
        %v1127 = vadd.f32 %v1026, %v1095
        %v1128 = vadd.f32 %v1027, %v1096
        %v1129 = vadd.f32 %v1028, %v1097
        %v1130 = vadd.f32 %v1029, %v1098
        %v1131 = vadd.f32 %v1030, %v1099
        %v1132 = vadd.f32 %v1031, %v1100
        %v1133 = vadd.f32 %v1032, %v1101
        %v1134 = vadd.f32 %v1033, %v1102
        %v1135 = vadd.f32 %v1034, %v1103
        %v1136 = vld [vmem:[%s1035 + $0x1] sm:$0xff]
        %v1137 = vld [vmem:[%s1035 + $0x9] sm:$0xff]
        %v1138 = vld [vmem:[%s1035 + $0x19] sm:$0xff]
        %v1139 = vld [vmem:[%s1035 + $0x21] sm:$0xff]
        %v1140 = vld [vmem:[%s1035 + $0x31] sm:$0xff]
        %v1141 = vld [vmem:[%s1035 + $0x39] sm:$0xff]
        %v1142 = vld [vmem:[%s1035 + $0x49] sm:$0xff]
        %v1143 = vld [vmem:[%s1035 + $0x51] sm:$0xff]
        %v1144 = vld [vmem:[%s1035 + $0x61] sm:$0xff]
        %v1145 = vld [vmem:[%s1035 + $0x69] sm:$0xff]
        %v1146 = vld [vmem:[%s1035 + $0x79] sm:$0xff]
        %v1147 = vld [vmem:[%s1035 + $0x81] sm:$0xff]
        %v1148 = vld [vmem:[%s1035 + $0x91] sm:$0xff]
        %v1149 = vld [vmem:[%s1035 + $0x99] sm:$0xff]
        %v1150 = vld [vmem:[%s1035 + $0xa9] sm:$0xff]
        %v1151 = vld [vmem:[%s1035 + $0xb1] sm:$0xff]
        %v1152 = vld [vmem:[%s1035 + $0xc1] sm:$0xff]
        %v1153 = vld [vmem:[%s1035 + $0xc9] sm:$0xff]
        %v1154 = vld [vmem:[%s1035 + $0xd9] sm:$0xff]
        %v1155 = vld [vmem:[%s1035 + $0xe1] sm:$0xff]
        %v1156 = vld [vmem:[%s1035 + $0xf1] sm:$0xff]
        %v1157 = vld [vmem:[%s1035 + $0xf9] sm:$0xff]
        %v1158 = vld [vmem:[%s1035 + $0x109] sm:$0xff]
        %v1159 = vld [vmem:[%s1035 + $0x111] sm:$0xff]
        %v1160 = vld [vmem:[%s1035 + $0x121] sm:$0xff]
        %v1161 = vld [vmem:[%s1035 + $0x129] sm:$0xff]
        %v1162 = vld [vmem:[%s1035 + $0x139] sm:$0xff]
        %v1163 = vld [vmem:[%s1035 + $0x141] sm:$0xff]
        %v1164 = vld [vmem:[%s1035 + $0x151] sm:$0xff]
        %v1165 = vld [vmem:[%s1035 + $0x159] sm:$0xff]
        %v1166 = vld [vmem:[%s1035 + $0x169] sm:$0xff]
        %v1167 = vld [vmem:[%s1035 + $0x171] sm:$0xff]
        %v1168 = vlaneseq
        %v1169 = vshrl.u32 %v1168, 7
        %v1170 = vsub.s32 7, %v1169
        %v1171 = vrot.slane %v433, %v1170
        %v1172 = vmul.f32 %v1136, %v1171
        %v1173 = vmul.f32 %v1137, %v1171
        %v1174 = vmul.f32 %v1138, %v1171
        %v1175 = vmul.f32 %v1139, %v1171
        %v1176 = vmul.f32 %v1140, %v1171
        %v1177 = vmul.f32 %v1141, %v1171
        %v1178 = vmul.f32 %v1142, %v1171
        %v1179 = vmul.f32 %v1143, %v1171
        %v1180 = vmul.f32 %v1144, %v1171
        %v1181 = vmul.f32 %v1145, %v1171
        %v1182 = vmul.f32 %v1146, %v1171
        %v1183 = vmul.f32 %v1147, %v1171
        %v1184 = vmul.f32 %v1148, %v1171
        %v1185 = vmul.f32 %v1149, %v1171
        %v1186 = vmul.f32 %v1150, %v1171
        %v1187 = vmul.f32 %v1151, %v1171
        %v1188 = vmul.f32 %v1152, %v1171
        %v1189 = vmul.f32 %v1153, %v1171
        %v1190 = vmul.f32 %v1154, %v1171
        %v1191 = vmul.f32 %v1155, %v1171
        %v1192 = vmul.f32 %v1156, %v1171
        %v1193 = vmul.f32 %v1157, %v1171
        %v1194 = vmul.f32 %v1158, %v1171
        %v1195 = vmul.f32 %v1159, %v1171
        %v1196 = vmul.f32 %v1160, %v1171
        %v1197 = vmul.f32 %v1161, %v1171
        %v1198 = vmul.f32 %v1162, %v1171
        %v1199 = vmul.f32 %v1163, %v1171
        %v1200 = vmul.f32 %v1164, %v1171
        %v1201 = vmul.f32 %v1165, %v1171
        %v1202 = vmul.f32 %v1166, %v1171
        %v1203 = vmul.f32 %v1167, %v1171
        %v1204 = vadd.f32 %v1104, %v1172
        %v1205 = vadd.f32 %v1105, %v1173
        %v1206 = vadd.f32 %v1106, %v1174
        %v1207 = vadd.f32 %v1107, %v1175
        %v1208 = vadd.f32 %v1108, %v1176
        %v1209 = vadd.f32 %v1109, %v1177
        %v1210 = vadd.f32 %v1110, %v1178
        %v1211 = vadd.f32 %v1111, %v1179
        %v1212 = vadd.f32 %v1112, %v1180
        %v1213 = vadd.f32 %v1113, %v1181
        %v1214 = vadd.f32 %v1114, %v1182
        %v1215 = vadd.f32 %v1115, %v1183
        %v1216 = vadd.f32 %v1116, %v1184
        %v1217 = vadd.f32 %v1117, %v1185
        %v1218 = vadd.f32 %v1118, %v1186
        %v1219 = vadd.f32 %v1119, %v1187
        %v1220 = vadd.f32 %v1120, %v1188
        %v1221 = vadd.f32 %v1121, %v1189
        %v1222 = vadd.f32 %v1122, %v1190
        %v1223 = vadd.f32 %v1123, %v1191
        %v1224 = vadd.f32 %v1124, %v1192
        %v1225 = vadd.f32 %v1125, %v1193
        %v1226 = vadd.f32 %v1126, %v1194
        %v1227 = vadd.f32 %v1127, %v1195
        %v1228 = vadd.f32 %v1128, %v1196
        %v1229 = vadd.f32 %v1129, %v1197
        %v1230 = vadd.f32 %v1130, %v1198
        %v1231 = vadd.f32 %v1131, %v1199
        %v1232 = vadd.f32 %v1132, %v1200
        %v1233 = vadd.f32 %v1133, %v1201
        %v1234 = vadd.f32 %v1134, %v1202
        %v1235 = vadd.f32 %v1135, %v1203
        %v1236 = vld [vmem:[%s1035 + $0x2] sm:$0xff]
        %v1237 = vld [vmem:[%s1035 + $0xa] sm:$0xff]
        %v1238 = vld [vmem:[%s1035 + $0x1a] sm:$0xff]
        %v1239 = vld [vmem:[%s1035 + $0x22] sm:$0xff]
        %v1240 = vld [vmem:[%s1035 + $0x32] sm:$0xff]
        %v1241 = vld [vmem:[%s1035 + $0x3a] sm:$0xff]
        %v1242 = vld [vmem:[%s1035 + $0x4a] sm:$0xff]
        %v1243 = vld [vmem:[%s1035 + $0x52] sm:$0xff]
        %v1244 = vld [vmem:[%s1035 + $0x62] sm:$0xff]
        %v1245 = vld [vmem:[%s1035 + $0x6a] sm:$0xff]
        %v1246 = vld [vmem:[%s1035 + $0x7a] sm:$0xff]
        %v1247 = vld [vmem:[%s1035 + $0x82] sm:$0xff]
        %v1248 = vld [vmem:[%s1035 + $0x92] sm:$0xff]
        %v1249 = vld [vmem:[%s1035 + $0x9a] sm:$0xff]
        %v1250 = vld [vmem:[%s1035 + $0xaa] sm:$0xff]
        %v1251 = vld [vmem:[%s1035 + $0xb2] sm:$0xff]
        %v1252 = vld [vmem:[%s1035 + $0xc2] sm:$0xff]
        %v1253 = vld [vmem:[%s1035 + $0xca] sm:$0xff]
        %v1254 = vld [vmem:[%s1035 + $0xda] sm:$0xff]
        %v1255 = vld [vmem:[%s1035 + $0xe2] sm:$0xff]
        %v1256 = vld [vmem:[%s1035 + $0xf2] sm:$0xff]
        %v1257 = vld [vmem:[%s1035 + $0xfa] sm:$0xff]
        %v1258 = vld [vmem:[%s1035 + $0x10a] sm:$0xff]
        %v1259 = vld [vmem:[%s1035 + $0x112] sm:$0xff]
        %v1260 = vld [vmem:[%s1035 + $0x122] sm:$0xff]
        %v1261 = vld [vmem:[%s1035 + $0x12a] sm:$0xff]
        %v1262 = vld [vmem:[%s1035 + $0x13a] sm:$0xff]
        %v1263 = vld [vmem:[%s1035 + $0x142] sm:$0xff]
        %v1264 = vld [vmem:[%s1035 + $0x152] sm:$0xff]
        %v1265 = vld [vmem:[%s1035 + $0x15a] sm:$0xff]
        %v1266 = vld [vmem:[%s1035 + $0x16a] sm:$0xff]
        %v1267 = vld [vmem:[%s1035 + $0x172] sm:$0xff]
        %v1268 = vlaneseq
        %v1269 = vshrl.u32 %v1268, 7
        %v1270 = vsub.s32 0, %v1269
        %v1271 = vrot.slane %v434, %v1270
        %v1272 = vmul.f32 %v1236, %v1271
        %v1273 = vmul.f32 %v1237, %v1271
        %v1274 = vmul.f32 %v1238, %v1271
        %v1275 = vmul.f32 %v1239, %v1271
        %v1276 = vmul.f32 %v1240, %v1271
        %v1277 = vmul.f32 %v1241, %v1271
        %v1278 = vmul.f32 %v1242, %v1271
        %v1279 = vmul.f32 %v1243, %v1271
        %v1280 = vmul.f32 %v1244, %v1271
        %v1281 = vmul.f32 %v1245, %v1271
        %v1282 = vmul.f32 %v1246, %v1271
        %v1283 = vmul.f32 %v1247, %v1271
        %v1284 = vmul.f32 %v1248, %v1271
        %v1285 = vmul.f32 %v1249, %v1271
        %v1286 = vmul.f32 %v1250, %v1271
        %v1287 = vmul.f32 %v1251, %v1271
        %v1288 = vmul.f32 %v1252, %v1271
        %v1289 = vmul.f32 %v1253, %v1271
        %v1290 = vmul.f32 %v1254, %v1271
        %v1291 = vmul.f32 %v1255, %v1271
        %v1292 = vmul.f32 %v1256, %v1271
        %v1293 = vmul.f32 %v1257, %v1271
        %v1294 = vmul.f32 %v1258, %v1271
        %v1295 = vmul.f32 %v1259, %v1271
        %v1296 = vmul.f32 %v1260, %v1271
        %v1297 = vmul.f32 %v1261, %v1271
        %v1298 = vmul.f32 %v1262, %v1271
        %v1299 = vmul.f32 %v1263, %v1271
        %v1300 = vmul.f32 %v1264, %v1271
        %v1301 = vmul.f32 %v1265, %v1271
        %v1302 = vmul.f32 %v1266, %v1271
        %v1303 = vmul.f32 %v1267, %v1271
        %v1304 = vadd.f32 %v1204, %v1272
        %v1305 = vadd.f32 %v1205, %v1273
        %v1306 = vadd.f32 %v1206, %v1274
        %v1307 = vadd.f32 %v1207, %v1275
        %v1308 = vadd.f32 %v1208, %v1276
        %v1309 = vadd.f32 %v1209, %v1277
        %v1310 = vadd.f32 %v1210, %v1278
        %v1311 = vadd.f32 %v1211, %v1279
        %v1312 = vadd.f32 %v1212, %v1280
        %v1313 = vadd.f32 %v1213, %v1281
        %v1314 = vadd.f32 %v1214, %v1282
        %v1315 = vadd.f32 %v1215, %v1283
        %v1316 = vadd.f32 %v1216, %v1284
        %v1317 = vadd.f32 %v1217, %v1285
        %v1318 = vadd.f32 %v1218, %v1286
        %v1319 = vadd.f32 %v1219, %v1287
        %v1320 = vadd.f32 %v1220, %v1288
        %v1321 = vadd.f32 %v1221, %v1289
        %v1322 = vadd.f32 %v1222, %v1290
        %v1323 = vadd.f32 %v1223, %v1291
        %v1324 = vadd.f32 %v1224, %v1292
        %v1325 = vadd.f32 %v1225, %v1293
        %v1326 = vadd.f32 %v1226, %v1294
        %v1327 = vadd.f32 %v1227, %v1295
        %v1328 = vadd.f32 %v1228, %v1296
        %v1329 = vadd.f32 %v1229, %v1297
        %v1330 = vadd.f32 %v1230, %v1298
        %v1331 = vadd.f32 %v1231, %v1299
        %v1332 = vadd.f32 %v1232, %v1300
        %v1333 = vadd.f32 %v1233, %v1301
        %v1334 = vadd.f32 %v1234, %v1302
        %v1335 = vadd.f32 %v1235, %v1303
        %v1336 = vld [vmem:[%s2] sm:$0x1]
        %v1338 = vlaneseq
        %v1339 = vshrl.u32 %v1338, 7
        %v1340 = vsub.s32 0, %v1339
        %v1341 = vrot.slane %v1336, %v1340
        %v1343 = vmul.f32 %v1304, %v1341
        %v1344 = vmul.f32 %v1305, %v1341
        %v1345 = vmul.f32 %v1306, %v1341
        %v1346 = vmul.f32 %v1307, %v1341
        %v1347 = vmul.f32 %v1308, %v1341
        %v1348 = vmul.f32 %v1309, %v1341
        %v1349 = vmul.f32 %v1310, %v1341
        %v1350 = vmul.f32 %v1311, %v1341
        %v1351 = vmul.f32 %v1312, %v1341
        %v1352 = vmul.f32 %v1313, %v1341
        %v1353 = vmul.f32 %v1314, %v1341
        %v1354 = vmul.f32 %v1315, %v1341
        %v1355 = vmul.f32 %v1316, %v1341
        %v1356 = vmul.f32 %v1317, %v1341
        %v1357 = vmul.f32 %v1318, %v1341
        %v1358 = vmul.f32 %v1319, %v1341
        %v1359 = vmul.f32 %v1320, %v1341
        %v1360 = vmul.f32 %v1321, %v1341
        %v1361 = vmul.f32 %v1322, %v1341
        %v1362 = vmul.f32 %v1323, %v1341
        %v1363 = vmul.f32 %v1324, %v1341
        %v1364 = vmul.f32 %v1325, %v1341
        %v1365 = vmul.f32 %v1326, %v1341
        %v1366 = vmul.f32 %v1327, %v1341
        %v1367 = vmul.f32 %v1328, %v1341
        %v1368 = vmul.f32 %v1329, %v1341
        %v1369 = vmul.f32 %v1330, %v1341
        %v1370 = vmul.f32 %v1331, %v1341
        %v1371 = vmul.f32 %v1332, %v1341
        %v1372 = vmul.f32 %v1333, %v1341
        %v1373 = vmul.f32 %v1334, %v1341
        %v1374 = vmul.f32 %v1335, %v1341
        %v1375 = vld [vmem:[%s3] sm:$0x1]
        %v1377 = vlaneseq
        %v1378 = vshrl.u32 %v1377, 7
        %v1379 = vsub.s32 0, %v1378
        %v1380 = vrot.slane %v1375, %v1379
        %v1382 = vadd.f32 %v1343, %v1380
        %v1383 = vadd.f32 %v1344, %v1380
        %v1384 = vadd.f32 %v1345, %v1380
        %v1385 = vadd.f32 %v1346, %v1380
        %v1386 = vadd.f32 %v1347, %v1380
        %v1387 = vadd.f32 %v1348, %v1380
        %v1388 = vadd.f32 %v1349, %v1380
        %v1389 = vadd.f32 %v1350, %v1380
        %v1390 = vadd.f32 %v1351, %v1380
        %v1391 = vadd.f32 %v1352, %v1380
        %v1392 = vadd.f32 %v1353, %v1380
        %v1393 = vadd.f32 %v1354, %v1380
        %v1394 = vadd.f32 %v1355, %v1380
        %v1395 = vadd.f32 %v1356, %v1380
        %v1396 = vadd.f32 %v1357, %v1380
        %v1397 = vadd.f32 %v1358, %v1380
        %v1398 = vadd.f32 %v1359, %v1380
        %v1399 = vadd.f32 %v1360, %v1380
        %v1400 = vadd.f32 %v1361, %v1380
        %v1401 = vadd.f32 %v1362, %v1380
        %v1402 = vadd.f32 %v1363, %v1380
        %v1403 = vadd.f32 %v1364, %v1380
        %v1404 = vadd.f32 %v1365, %v1380
        %v1405 = vadd.f32 %v1366, %v1380
        %v1406 = vadd.f32 %v1367, %v1380
        %v1407 = vadd.f32 %v1368, %v1380
        %v1408 = vadd.f32 %v1369, %v1380
        %v1409 = vadd.f32 %v1370, %v1380
        %v1410 = vadd.f32 %v1371, %v1380
        %v1411 = vadd.f32 %v1372, %v1380
        %v1412 = vadd.f32 %v1373, %v1380
        %v1413 = vadd.f32 %v1374, %v1380
        %v1414 = vmax.f32 %v1382, 0.0
        %v1415 = vmax.f32 %v1383, 0.0
        %v1416 = vmax.f32 %v1384, 0.0
        %v1417 = vmax.f32 %v1385, 0.0
        %v1418 = vmax.f32 %v1386, 0.0
        %v1419 = vmax.f32 %v1387, 0.0
        %v1420 = vmax.f32 %v1388, 0.0
        %v1421 = vmax.f32 %v1389, 0.0
        %v1422 = vmax.f32 %v1390, 0.0
        %v1423 = vmax.f32 %v1391, 0.0
        %v1424 = vmax.f32 %v1392, 0.0
        %v1425 = vmax.f32 %v1393, 0.0
        %v1426 = vmax.f32 %v1394, 0.0
        %v1427 = vmax.f32 %v1395, 0.0
        %v1428 = vmax.f32 %v1396, 0.0
        %v1429 = vmax.f32 %v1397, 0.0
        %v1430 = vmax.f32 %v1398, 0.0
        %v1431 = vmax.f32 %v1399, 0.0
        %v1432 = vmax.f32 %v1400, 0.0
        %v1433 = vmax.f32 %v1401, 0.0
        %v1434 = vmax.f32 %v1402, 0.0
        %v1435 = vmax.f32 %v1403, 0.0
        %v1436 = vmax.f32 %v1404, 0.0
        %v1437 = vmax.f32 %v1405, 0.0
        %v1438 = vmax.f32 %v1406, 0.0
        %v1439 = vmax.f32 %v1407, 0.0
        %v1440 = vmax.f32 %v1408, 0.0
        %v1441 = vmax.f32 %v1409, 0.0
        %v1442 = vmax.f32 %v1410, 0.0
        %v1443 = vmax.f32 %v1411, 0.0
        %v1444 = vmax.f32 %v1412, 0.0
        %v1445 = vmax.f32 %v1413, 0.0
        %v1446 = vpack.c.bf16 %v1415, %v1414
        %v1447 = vpack.c.bf16 %v1417, %v1416
        %v1448 = vpack.c.bf16 %v1419, %v1418
        %v1449 = vpack.c.bf16 %v1421, %v1420
        %v1450 = vpack.c.bf16 %v1423, %v1422
        %v1451 = vpack.c.bf16 %v1425, %v1424
        %v1452 = vpack.c.bf16 %v1427, %v1426
        %v1453 = vpack.c.bf16 %v1429, %v1428
        %v1454 = vpack.c.bf16 %v1431, %v1430
        %v1455 = vpack.c.bf16 %v1433, %v1432
        %v1456 = vpack.c.bf16 %v1435, %v1434
        %v1457 = vpack.c.bf16 %v1437, %v1436
        %v1458 = vpack.c.bf16 %v1439, %v1438
        %v1459 = vpack.c.bf16 %v1441, %v1440
        %v1460 = vpack.c.bf16 %v1443, %v1442
        %v1461 = vpack.c.bf16 %v1445, %v1444
        %v1462 = vld [vmem:[%s4] sm:$0xf]
        %v1463 = vld [vmem:[%s4 + $0x4] sm:$0xf]
        %v1464 = vld [vmem:[%s4 + $0x8] sm:$0xf]
        %v1465 = vld [vmem:[%s4 + $0xc] sm:$0xf]
        %v1470 = vunpack.c.l.b16 %v1462
        %v1471 = vunpack.c.l.b16 %v1463
        %v1472 = vunpack.c.l.b16 %v1464
        %v1473 = vunpack.c.l.b16 %v1465
        %v1474 = vpack.c.b16 %v1471, %v1470
        %v1475 = vpack.c.b16 %v1473, %v1472
        %v1479 = vsel %vm313, %v1446, 0
        %v1482 = vsel %vm313, %v1447, 0
        %v1485 = vsel %vm313, %v1448, 0
        %v1488 = vsel %vm313, %v1449, 0
        %v1491 = vsel %vm313, %v1450, 0
        %v1494 = vsel %vm313, %v1451, 0
        %v1497 = vsel %vm313, %v1452, 0
        %v1500 = vsel %vm313, %v1453, 0
        %v1503 = vsel %vm313, %v1454, 0
        %v1506 = vsel %vm313, %v1455, 0
        %v1509 = vsel %vm313, %v1456, 0
        %v1512 = vsel %vm313, %v1457, 0
        %v1515 = vsel %vm313, %v1458, 0
        %v1518 = vsel %vm313, %v1459, 0
        %v1521 = vsel %vm313, %v1460, 0
        %v1524 = vsel %vm313, %v1461, 0
        %1526 = vmatprep.subr.bf16.mxu0 0
        %1527 = vmatpush1.bf16.msra.mxu0 %v1474
        %1528 = vmatprep.subr.bf16.mxu0 0
        %1529 = vmatpush1.bf16.msra.mxu0 %v1475
        %1530 = vmatprep.subr.bf16.mxu0 0
        %1531 = vmatpush1.bf16.msra.mxu0 0
        %1532 = vmatprep.subr.bf16.mxu0 0
        %1533 = vmatpush1.bf16.msra.mxu0 0
        %1534 = vmatprep.subr.bf16.mxu0 0
        %1535 = vmatpush1.bf16.msra.mxu0 0
        %1536 = vmatprep.subr.bf16.mxu0 0
        %1537 = vmatpush1.bf16.msra.mxu0 0
        %1538 = vmatprep.subr.bf16.mxu0 0
        %1539 = vmatpush1.bf16.msra.mxu0 0
        %1540 = vmatprep.subr.bf16.mxu0 0
        %1541 = vmatpush1.bf16.msra.mxu0 0
        %1542 = vmatprep.subr.bf16.mxu0 0
        %1543 = vmatpush1.bf16.msra.mxu0 0
        %1544 = vmatprep.subr.bf16.mxu0 0
        %1545 = vmatpush1.bf16.msra.mxu0 0
        %1546 = vmatprep.subr.bf16.mxu0 0
        %1547 = vmatpush1.bf16.msra.mxu0 0
        %1548 = vmatprep.subr.bf16.mxu0 0
        %1549 = vmatpush1.bf16.msra.mxu0 0
        %1550 = vmatprep.subr.bf16.mxu0 0
        %1551 = vmatpush1.bf16.msra.mxu0 0
        %1552 = vmatprep.subr.bf16.mxu0 0
        %1553 = vmatpush1.bf16.msra.mxu0 0
        %1554 = vmatprep.subr.bf16.mxu0 0
        %1555 = vmatpush1.bf16.msra.mxu0 0
        %1556 = vmatprep.subr.bf16.mxu0 0
        %1557 = vmatpush1.bf16.msra.mxu0 0
        %1558 = vmatprep.mubr.bf16.mxu0 0
        %1559 = vmatmul.mubr.bf16.gmra.mrb[0].mxu0 %v1479
        %v1560 = vpop.f32.mrb[0].mxu0
        %v1561 = vadd.f32 0.0, %v1560
        %v1562 = vpop.f32.mrb[0].mxu0
        %v1563 = vpop.f32.mrb[0].mxu0
        %v1564 = vadd.f32 0.0, %v1563
        %v1565 = vpop.f32.mrb[0].mxu0
        %1566 = vmatprep.mubr.bf16.mxu0 0
        %1567 = vmatmul.mubr.bf16.gmra.mrb[0].mxu0 %v1482
        %v1568 = vpop.f32.mrb[0].mxu0
        %v1569 = vadd.f32 0.0, %v1568
        %v1570 = vpop.f32.mrb[0].mxu0
        %v1571 = vpop.f32.mrb[0].mxu0
        %v1572 = vadd.f32 0.0, %v1571
        %v1573 = vpop.f32.mrb[0].mxu0
        %1574 = vmatprep.mubr.bf16.mxu0 0
        %1575 = vmatmul.mubr.bf16.gmra.mrb[0].mxu0 %v1485
        %v1576 = vpop.f32.mrb[0].mxu0
        %v1577 = vadd.f32 0.0, %v1576
        %v1578 = vpop.f32.mrb[0].mxu0
        %v1579 = vpop.f32.mrb[0].mxu0
        %v1580 = vadd.f32 0.0, %v1579
        %v1581 = vpop.f32.mrb[0].mxu0
        %1582 = vmatprep.mubr.bf16.mxu0 0
        %1583 = vmatmul.mubr.bf16.gmra.mrb[0].mxu0 %v1488
        %v1584 = vpop.f32.mrb[0].mxu0
        %v1585 = vadd.f32 0.0, %v1584
        %v1586 = vpop.f32.mrb[0].mxu0
        %v1587 = vpop.f32.mrb[0].mxu0
        %v1588 = vadd.f32 0.0, %v1587
        %v1589 = vpop.f32.mrb[0].mxu0
        %1590 = vmatprep.mubr.bf16.mxu0 0
        %1591 = vmatmul.mubr.bf16.gmra.mrb[0].mxu0 %v1491
        %v1592 = vpop.f32.mrb[0].mxu0
        %v1593 = vadd.f32 0.0, %v1592
        %v1594 = vpop.f32.mrb[0].mxu0
        %v1595 = vpop.f32.mrb[0].mxu0
        %v1596 = vadd.f32 0.0, %v1595
        %v1597 = vpop.f32.mrb[0].mxu0
        %1598 = vmatprep.mubr.bf16.mxu0 0
        %1599 = vmatmul.mubr.bf16.gmra.mrb[0].mxu0 %v1494
        %v1600 = vpop.f32.mrb[0].mxu0
        %v1601 = vadd.f32 0.0, %v1600
        %v1602 = vpop.f32.mrb[0].mxu0
        %v1603 = vpop.f32.mrb[0].mxu0
        %v1604 = vadd.f32 0.0, %v1603
        %v1605 = vpop.f32.mrb[0].mxu0
        %1606 = vmatprep.mubr.bf16.mxu0 0
        %1607 = vmatmul.mubr.bf16.gmra.mrb[0].mxu0 %v1497
        %v1608 = vpop.f32.mrb[0].mxu0
        %v1609 = vadd.f32 0.0, %v1608
        %v1610 = vpop.f32.mrb[0].mxu0
        %v1611 = vpop.f32.mrb[0].mxu0
        %v1612 = vadd.f32 0.0, %v1611
        %v1613 = vpop.f32.mrb[0].mxu0
        %1614 = vmatprep.mubr.bf16.mxu0 0
        %1615 = vmatmul.mubr.bf16.gmra.mrb[0].mxu0 %v1500
        %v1616 = vpop.f32.mrb[0].mxu0
        %v1617 = vadd.f32 0.0, %v1616
        %v1618 = vpop.f32.mrb[0].mxu0
        %v1619 = vpop.f32.mrb[0].mxu0
        %v1620 = vadd.f32 0.0, %v1619
        %v1621 = vpop.f32.mrb[0].mxu0
        %1622 = vmatprep.mubr.bf16.mxu0 0
        %1623 = vmatmul.mubr.bf16.gmra.mrb[0].mxu0 %v1503
        %v1624 = vpop.f32.mrb[0].mxu0
        %v1625 = vadd.f32 0.0, %v1624
        %v1626 = vpop.f32.mrb[0].mxu0
        %v1627 = vpop.f32.mrb[0].mxu0
        %v1628 = vadd.f32 0.0, %v1627
        %v1629 = vpop.f32.mrb[0].mxu0
        %1630 = vmatprep.mubr.bf16.mxu0 0
        %1631 = vmatmul.mubr.bf16.gmra.mrb[0].mxu0 %v1506
        %v1632 = vpop.f32.mrb[0].mxu0
        %v1633 = vadd.f32 0.0, %v1632
        %v1634 = vpop.f32.mrb[0].mxu0
        %v1635 = vpop.f32.mrb[0].mxu0
        %v1636 = vadd.f32 0.0, %v1635
        %v1637 = vpop.f32.mrb[0].mxu0
        %1638 = vmatprep.mubr.bf16.mxu0 0
        %1639 = vmatmul.mubr.bf16.gmra.mrb[0].mxu0 %v1509
        %v1640 = vpop.f32.mrb[0].mxu0
        %v1641 = vadd.f32 0.0, %v1640
        %v1642 = vpop.f32.mrb[0].mxu0
        %v1643 = vpop.f32.mrb[0].mxu0
        %v1644 = vadd.f32 0.0, %v1643
        %v1645 = vpop.f32.mrb[0].mxu0
        %1646 = vmatprep.mubr.bf16.mxu0 0
        %1647 = vmatmul.mubr.bf16.gmra.mrb[0].mxu0 %v1512
        %v1648 = vpop.f32.mrb[0].mxu0
        %v1649 = vadd.f32 0.0, %v1648
        %v1650 = vpop.f32.mrb[0].mxu0
        %v1651 = vpop.f32.mrb[0].mxu0
        %v1652 = vadd.f32 0.0, %v1651
        %v1653 = vpop.f32.mrb[0].mxu0
        %1654 = vmatprep.mubr.bf16.mxu0 0
        %1655 = vmatmul.mubr.bf16.gmra.mrb[0].mxu0 %v1515
        %v1656 = vpop.f32.mrb[0].mxu0
        %v1657 = vadd.f32 0.0, %v1656
        %v1658 = vpop.f32.mrb[0].mxu0
        %v1659 = vpop.f32.mrb[0].mxu0
        %v1660 = vadd.f32 0.0, %v1659
        %v1661 = vpop.f32.mrb[0].mxu0
        %1662 = vmatprep.mubr.bf16.mxu0 0
        %1663 = vmatmul.mubr.bf16.gmra.mrb[0].mxu0 %v1518
        %v1664 = vpop.f32.mrb[0].mxu0
        %v1665 = vadd.f32 0.0, %v1664
        %v1666 = vpop.f32.mrb[0].mxu0
        %v1667 = vpop.f32.mrb[0].mxu0
        %v1668 = vadd.f32 0.0, %v1667
        %v1669 = vpop.f32.mrb[0].mxu0
        %1670 = vmatprep.mubr.bf16.mxu0 0
        %1671 = vmatmul.mubr.bf16.gmra.mrb[0].mxu0 %v1521
        %v1672 = vpop.f32.mrb[0].mxu0
        %v1673 = vadd.f32 0.0, %v1672
        %v1674 = vpop.f32.mrb[0].mxu0
        %v1675 = vpop.f32.mrb[0].mxu0
        %v1676 = vadd.f32 0.0, %v1675
        %v1677 = vpop.f32.mrb[0].mxu0
        %1678 = vmatprep.mubr.bf16.mxu0 0
        %1679 = vmatmul.mubr.bf16.gmra.mrb[0].mxu0 %v1524
        %v1680 = vpop.f32.mrb[0].mxu0
        %v1681 = vadd.f32 0.0, %v1680
        %v1682 = vpop.f32.mrb[0].mxu0
        %v1683 = vpop.f32.mrb[0].mxu0
        %v1684 = vadd.f32 0.0, %v1683
        %v1685 = vpop.f32.mrb[0].mxu0
        %1686 = vdwg.mxu0
        %v1687 = vld [vmem:[%s5] sm:$0x1]
        %v1689 = vlaneseq
        %v1690 = vshrl.u32 %v1689, 7
        %v1691 = vsub.s32 0, %v1690
        %v1692 = vrot.slane %v1687, %v1691
        %v1694 = vmul.f32 %v1561, %v1692
        %v1695 = vmul.f32 %v1564, %v1692
        %v1696 = vmul.f32 %v1569, %v1692
        %v1697 = vmul.f32 %v1572, %v1692
        %v1698 = vmul.f32 %v1577, %v1692
        %v1699 = vmul.f32 %v1580, %v1692
        %v1700 = vmul.f32 %v1585, %v1692
        %v1701 = vmul.f32 %v1588, %v1692
        %v1702 = vmul.f32 %v1593, %v1692
        %v1703 = vmul.f32 %v1596, %v1692
        %v1704 = vmul.f32 %v1601, %v1692
        %v1705 = vmul.f32 %v1604, %v1692
        %v1706 = vmul.f32 %v1609, %v1692
        %v1707 = vmul.f32 %v1612, %v1692
        %v1708 = vmul.f32 %v1617, %v1692
        %v1709 = vmul.f32 %v1620, %v1692
        %v1710 = vmul.f32 %v1625, %v1692
        %v1711 = vmul.f32 %v1628, %v1692
        %v1712 = vmul.f32 %v1633, %v1692
        %v1713 = vmul.f32 %v1636, %v1692
        %v1714 = vmul.f32 %v1641, %v1692
        %v1715 = vmul.f32 %v1644, %v1692
        %v1716 = vmul.f32 %v1649, %v1692
        %v1717 = vmul.f32 %v1652, %v1692
        %v1718 = vmul.f32 %v1657, %v1692
        %v1719 = vmul.f32 %v1660, %v1692
        %v1720 = vmul.f32 %v1665, %v1692
        %v1721 = vmul.f32 %v1668, %v1692
        %v1722 = vmul.f32 %v1673, %v1692
        %v1723 = vmul.f32 %v1676, %v1692
        %v1724 = vmul.f32 %v1681, %v1692
        %v1725 = vmul.f32 %v1684, %v1692
        %v1726 = vld [vmem:[#allocation5] sm:$0x1]
        %v1728 = vlaneseq
        %v1729 = vshrl.u32 %v1728, 7
        %v1730 = vsub.s32 0, %v1729
        %v1731 = vrot.slane %v1726, %v1730
        %v1733 = vadd.f32 %v1694, %v1731
        %v1734 = vadd.f32 %v1695, %v1731
        %v1735 = vadd.f32 %v1696, %v1731
        %v1736 = vadd.f32 %v1697, %v1731
        %v1737 = vadd.f32 %v1698, %v1731
        %v1738 = vadd.f32 %v1699, %v1731
        %v1739 = vadd.f32 %v1700, %v1731
        %v1740 = vadd.f32 %v1701, %v1731
        %v1741 = vadd.f32 %v1702, %v1731
        %v1742 = vadd.f32 %v1703, %v1731
        %v1743 = vadd.f32 %v1704, %v1731
        %v1744 = vadd.f32 %v1705, %v1731
        %v1745 = vadd.f32 %v1706, %v1731
        %v1746 = vadd.f32 %v1707, %v1731
        %v1747 = vadd.f32 %v1708, %v1731
        %v1748 = vadd.f32 %v1709, %v1731
        %v1749 = vadd.f32 %v1710, %v1731
        %v1750 = vadd.f32 %v1711, %v1731
        %v1751 = vadd.f32 %v1712, %v1731
        %v1752 = vadd.f32 %v1713, %v1731
        %v1753 = vadd.f32 %v1714, %v1731
        %v1754 = vadd.f32 %v1715, %v1731
        %v1755 = vadd.f32 %v1716, %v1731
        %v1756 = vadd.f32 %v1717, %v1731
        %v1757 = vadd.f32 %v1718, %v1731
        %v1758 = vadd.f32 %v1719, %v1731
        %v1759 = vadd.f32 %v1720, %v1731
        %v1760 = vadd.f32 %v1721, %v1731
        %v1761 = vadd.f32 %v1722, %v1731
        %v1762 = vadd.f32 %v1723, %v1731
        %v1763 = vadd.f32 %v1724, %v1731
        %v1764 = vadd.f32 %v1725, %v1731
        %v1765 = vmax.f32 %v1733, 0.0
        %v1766 = vmax.f32 %v1734, 0.0
        %v1767 = vmax.f32 %v1735, 0.0
        %v1768 = vmax.f32 %v1736, 0.0
        %v1769 = vmax.f32 %v1737, 0.0
        %v1770 = vmax.f32 %v1738, 0.0
        %v1771 = vmax.f32 %v1739, 0.0
        %v1772 = vmax.f32 %v1740, 0.0
        %v1773 = vmax.f32 %v1741, 0.0
        %v1774 = vmax.f32 %v1742, 0.0
        %v1775 = vmax.f32 %v1743, 0.0
        %v1776 = vmax.f32 %v1744, 0.0
        %v1777 = vmax.f32 %v1745, 0.0
        %v1778 = vmax.f32 %v1746, 0.0
        %v1779 = vmax.f32 %v1747, 0.0
        %v1780 = vmax.f32 %v1748, 0.0
        %v1781 = vmax.f32 %v1749, 0.0
        %v1782 = vmax.f32 %v1750, 0.0
        %v1783 = vmax.f32 %v1751, 0.0
        %v1784 = vmax.f32 %v1752, 0.0
        %v1785 = vmax.f32 %v1753, 0.0
        %v1786 = vmax.f32 %v1754, 0.0
        %v1787 = vmax.f32 %v1755, 0.0
        %v1788 = vmax.f32 %v1756, 0.0
        %v1789 = vmax.f32 %v1757, 0.0
        %v1790 = vmax.f32 %v1758, 0.0
        %v1791 = vmax.f32 %v1759, 0.0
        %v1792 = vmax.f32 %v1760, 0.0
        %v1793 = vmax.f32 %v1761, 0.0
        %v1794 = vmax.f32 %v1762, 0.0
        %v1795 = vmax.f32 %v1763, 0.0
        %v1796 = vmax.f32 %v1764, 0.0
        %vm1797 = vcmask 523264
        %1798 = vst.msk [vmem:[%s311] sm:$0xff] %vm1797, %v1765
        %1799 = vst.msk [vmem:[%s311 + $0x8] sm:$0xff] %vm1797, %v1766
        %1800 = vst.msk [vmem:[%s311 + $0x10] sm:$0xff] %vm1797, %v1767
        %1801 = vst.msk [vmem:[%s311 + $0x18] sm:$0xff] %vm1797, %v1768
        %1802 = vst.msk [vmem:[%s311 + $0x20] sm:$0xff] %vm1797, %v1769
        %1803 = vst.msk [vmem:[%s311 + $0x28] sm:$0xff] %vm1797, %v1770
        %1804 = vst.msk [vmem:[%s311 + $0x30] sm:$0xff] %vm1797, %v1771
        %1805 = vst.msk [vmem:[%s311 + $0x38] sm:$0xff] %vm1797, %v1772
        %1806 = vst.msk [vmem:[%s311 + $0x40] sm:$0xff] %vm1797, %v1773
        %1807 = vst.msk [vmem:[%s311 + $0x48] sm:$0xff] %vm1797, %v1774
        %1808 = vst.msk [vmem:[%s311 + $0x50] sm:$0xff] %vm1797, %v1775
        %1809 = vst.msk [vmem:[%s311 + $0x58] sm:$0xff] %vm1797, %v1776
        %1810 = vst.msk [vmem:[%s311 + $0x60] sm:$0xff] %vm1797, %v1777
        %1811 = vst.msk [vmem:[%s311 + $0x68] sm:$0xff] %vm1797, %v1778
        %1812 = vst.msk [vmem:[%s311 + $0x70] sm:$0xff] %vm1797, %v1779
        %1813 = vst.msk [vmem:[%s311 + $0x78] sm:$0xff] %vm1797, %v1780
        %1814 = vst.msk [vmem:[%s311 + $0x80] sm:$0xff] %vm1797, %v1781
        %1815 = vst.msk [vmem:[%s311 + $0x88] sm:$0xff] %vm1797, %v1782
        %1816 = vst.msk [vmem:[%s311 + $0x90] sm:$0xff] %vm1797, %v1783
        %1817 = vst.msk [vmem:[%s311 + $0x98] sm:$0xff] %vm1797, %v1784
        %1818 = vst.msk [vmem:[%s311 + $0xa0] sm:$0xff] %vm1797, %v1785
        %1819 = vst.msk [vmem:[%s311 + $0xa8] sm:$0xff] %vm1797, %v1786
        %1820 = vst.msk [vmem:[%s311 + $0xb0] sm:$0xff] %vm1797, %v1787
        %1821 = vst.msk [vmem:[%s311 + $0xb8] sm:$0xff] %vm1797, %v1788
        %1822 = vst.msk [vmem:[%s311 + $0xc0] sm:$0xff] %vm1797, %v1789
        %1823 = vst.msk [vmem:[%s311 + $0xc8] sm:$0xff] %vm1797, %v1790
        %1824 = vst.msk [vmem:[%s311 + $0xd0] sm:$0xff] %vm1797, %v1791
        %1825 = vst.msk [vmem:[%s311 + $0xd8] sm:$0xff] %vm1797, %v1792
        %1826 = vst.msk [vmem:[%s311 + $0xe0] sm:$0xff] %vm1797, %v1793
        %1827 = vst.msk [vmem:[%s311 + $0xe8] sm:$0xff] %vm1797, %v1794
        %1828 = vst.msk [vmem:[%s311 + $0xf0] sm:$0xff] %vm1797, %v1795
        %1829 = vst.msk [vmem:[%s311 + $0xf8] sm:$0xff] %vm1797, %v1796
        %p1830 = scmp.lt.s32.totalorder %s22, 1
        %s1831 = scalar_select %p1830, %s22, 1
        %s1832 = smul.addr %s1831, 32
        %s1833 = smul.addr %s1832, 8
        %s1834 = scalar_lea.vmem %s7, %s1833
        // Predicated region
        $region57: #{forward.2} parent=47 // pred_check
          %p1835 = pneg %p192
        $region58: #{forward.2} parent=47 // pred_check_branch
          %1837 = sbr.rel (%p1835) target = $region60
        $region59: #{forward.2} parent=47 // pred_region
          _
        $region60: #{forward.2} parent=47 // pred_fallthru
          _
      $region48: #{forward.2} parent=5 // pred_fallthru
        _
      %p1838 = scmp.le.s32.totalorder 2, %s17
      // Predicated region
      $region61: #{forward.2} parent=5 // pred_check
        %p1839 = pneg %p1838
      $region62: #{forward.2} parent=5 // pred_check_branch
        %1841 = sbr.rel (%p1839) target = $region64
      $region63: #{forward.2} parent=5 // pred_region
        %s1842 = ssub.s32 %s17, 2
        // Predicated region
        $region65: #{forward.2} parent=63 // pred_check
          %p1843 = pneg %p198
        $region66: #{forward.2} parent=63 // pred_check_branch
          %1845 = sbr.rel (%p1843) target = $region68
        $region67: #{forward.2} parent=63 // pred_region
          %p1846 = scmp.lt.s32.totalorder %s23, 1
          %s1847 = scalar_select %p1846, %s23, 1
          %s1848 = smul.addr %s1847, 32
          %s1849 = smul.addr %s1848, 8
          %s1850 = scalar_lea.vmem %s7, %s1849
        $region68: #{forward.2} parent=63 // pred_fallthru
          _
      $region64: #{forward.2} parent=5 // pred_fallthru
        _
    $region6: #{forward.2} parent=1 // loop_footer
      %s21 = sadd.s32 1, %s17
    $region7: #{forward.2} parent=1 // loop_footer_branch
      %16 = sbr.rel target = $region3
    $region8: #{forward.2} parent=1 // loop_exit
      _
    %1851 = vsyncpa [#allocation4], 1
    %s1852 = scalar_lea.sflag [#allocation4], 1
    %1853 = vsyncpa %s1852, 1
    %1854 = vsyncpa [#allocation6], 1

</llo_original>
